<compile_context>
chip_gen: v7x
topology: tpu7x:2x2x1
jax: 0.10.0
libtpu: 0.0.40
codegen_flags: <defaults>
</compile_context>

<pallas_src>
import functools

import numpy as np
import jax
import jax.numpy as jnp
from jax.experimental import pallas as pl
from jax.experimental.pallas import tpu as pltpu


# ------------------------- configuration ("args") ---------------------------
ENCODER_DIMS = [8, 16, 32]           # args.encoder_dims
DECODER_DIMS = ENCODER_DIMS[::-1]    # [32, 16, 8]
NUM_LAYERS = 3                       # args.num_layers
ACTIVATION = "relu"                  # args.activation  ('relu' | 'silu' | 'sine')
SINE_W0 = 1.0                        # args.sine_w0
BN_EPS = 1e-5


def _apply_activation(y):
    if ACTIVATION == "silu":
        return y * jax.nn.sigmoid(y)
    if ACTIVATION == "sine":
        return jnp.sin(SINE_W0 * y)
    return jnp.maximum(y, 0.0)       # ReLU (default)


# ------------------------------- fused kernel -------------------------------
def _shifted_cat(x):
    """(N, L, C) -> (N, L, 3C) = [x[l-1] | x[l] | x[l+1]] with zero ends."""
    N, L, C = x.shape
    zrow = jnp.zeros((N, 1, C), dtype=x.dtype)
    xp = jnp.concatenate([zrow, x, zrow], axis=1)              # (N, L+2, C)
    return jnp.concatenate(
        [xp[:, 0:L, :], xp[:, 1:L + 1, :], xp[:, 2:L + 2, :]], axis=-1)


def _layer_convt_bn_act(x, wblk, g, b):
    """ConvTranspose1d(k=4,s=2,p=1,bias=False) + BatchNorm1d(train) + act.

    x    : (N, L, Cin)       channels-last input
    wblk : (3*Cin, 2*Cout)   block weight; columns [0:Cout] -> even phase,
                             columns [Cout:2Cout] -> odd phase:
                                 [[W3,  0 ],
                                  [W1,  W2],
                                  [ 0,  W0]]   with Wk = weight[:, :, k]
    g, b : (1, 1, Cout)      BN gamma / beta
    returns (N, 2L, Cout)
    """
    N, L, Cin = x.shape
    Cout = wblk.shape[-1] // 2
    xcat = _shifted_cat(x)                                     # (N, L, 3Cin)
    # One MXU matmul for all four taps of both output phases:
    #   y_even[l] = x[l]   @ W1 + x[l-1] @ W3
    #   y_odd [l] = x[l+1] @ W0 + x[l]   @ W2
    y2 = jax.lax.dot_general(
        xcat.reshape(N * L, 3 * Cin), wblk,
        dimension_numbers=(((1,), (0,)), ((), ())),
        preferred_element_type=jnp.float32)                    # (N*L, 2Cout)
    ye = y2[:, :Cout].reshape(N, L, Cout)
    yo = y2[:, Cout:].reshape(N, L, Cout)
    # Interleave the two stride-2 phases along length: y[:, 2l+p, :].
    y = jnp.concatenate([ye[:, :, None, :], yo[:, :, None, :]], axis=2)
    y = y.reshape(N, 2 * L, Cout)
    # BatchNorm1d, training-mode (biased) statistics per channel over (N, 2L).
    mean = jnp.mean(y, axis=(0, 1), keepdims=True)
    var = jnp.mean(jnp.square(y - mean), axis=(0, 1), keepdims=True)
    y = (y - mean) * jax.lax.rsqrt(var + BN_EPS) * g + b
    return _apply_activation(y)


def _decoder_kernel(*refs):
    """Whole CNNDecoder forward in one kernel; intermediates stay on-chip.

    refs = (x, [wblk_i, gamma_i, beta_i] * NUM_LAYERS, wf_cat, bf, out)
    """
    x_ref = refs[0]
    layer_refs = refs[1:1 + 3 * NUM_LAYERS]
    wf_ref = refs[1 + 3 * NUM_LAYERS]      # (1, 1, 3*C_last) = [Wf2 | Wf1 | Wf0]
    bf_ref = refs[2 + 3 * NUM_LAYERS]      # (1, 1) scalar bias in SMEM
    o_ref = refs[3 + 3 * NUM_LAYERS]       # (N, L_out) lane-dense output

    x = x_ref[...]
    for i in range(NUM_LAYERS):            # unrolled at trace time
        x = _layer_convt_bn_act(x,
                                layer_refs[3 * i][...],
                                layer_refs[3 * i + 1][...],
                                layer_refs[3 * i + 2][...])

    # Final ConvTranspose1d(k=3, s=1, p=1, out_channels=1, bias=True):
    #   y[t] = <x[t-1], Wf2> + <x[t], Wf1> + <x[t+1], Wf0> + bias
    # -> one multiply + a single lane reduction against the tap-concat vector.
    xcat = _shifted_cat(x)                                     # (N, Lf, 3C)
    o_ref[...] = jnp.sum(xcat * wf_ref[...], axis=-1) + bf_ref[0, 0]


# ------------------------------- wrapper -------------------------------------
def cnn_decoder_forward(params, x_ncl):
    """x_ncl: (N, C, L) exactly as the PyTorch module expects."""
    x = jnp.transpose(x_ncl.astype(jnp.float32), (0, 2, 1))    # NCL -> NLC
    N, L0, _ = x.shape
    L_out = L0 * (2 ** NUM_LAYERS)

    inputs = [x]
    for (w, gamma, beta) in params["layers"]:                  # w: (Cin, Cout, 4)
        cin, cout, _ = w.shape
        z = jnp.zeros((cin, cout), jnp.float32)
        wblk = jnp.concatenate([
            jnp.concatenate([w[:, :, 3], z], axis=1),              # x[l-1] rows
            jnp.concatenate([w[:, :, 1], w[:, :, 2]], axis=1),     # x[l]   rows
            jnp.concatenate([z, w[:, :, 0]], axis=1),              # x[l+1] rows
        ], axis=0)                                             # (3Cin, 2Cout)
        inputs += [wblk, gamma.reshape(1, 1, -1), beta.reshape(1, 1, -1)]

    wf, bf = params["final"]                                   # (C, 1, 3), (1,)
    wf_cat = jnp.concatenate(
        [wf[:, 0, 2], wf[:, 0, 1], wf[:, 0, 0]]).reshape(1, 1, -1)
    inputs += [wf_cat, bf.reshape(1, 1)]

    in_specs = ([pl.BlockSpec(memory_space=pltpu.MemorySpace.VMEM)]
                * (len(inputs) - 1)
                + [pl.BlockSpec(memory_space=pltpu.MemorySpace.SMEM)])

    out = pl.pallas_call(
        _decoder_kernel,
        out_shape=jax.ShapeDtypeStruct((N, L_out), jnp.float32),
        in_specs=in_specs,
        out_specs=pl.BlockSpec(memory_space=pltpu.MemorySpace.VMEM),
    )(*inputs)
    # torch .squeeze(): also drops the batch dim when N == 1 (intentional).
    return jnp.squeeze(out)


# ---------------------------- parameter init --------------------------------
def init_params(key):
    params = {"layers": []}
    dims = DECODER_DIMS
    for i in range(NUM_LAYERS):
        if i < len(dims) - 1:
            cin, cout = dims[i], dims[i + 1]
        else:
            cin, cout = dims[-1], dims[-1]
        key, kw, kg, kb = jax.random.split(key, 4)
        w = 0.2 * jax.random.normal(kw, (cin, cout, 4), jnp.float32)   # ConvTranspose1d weight
        gamma = 1.0 + 0.1 * jax.random.normal(kg, (cout,), jnp.float32)
        beta = 0.1 * jax.random.normal(kb, (cout,), jnp.float32)
        params["layers"].append((w, gamma, beta))
    key, kw, kb = jax.random.split(key, 3)
    wf = 0.2 * jax.random.normal(kw, (dims[-1], 1, 3), jnp.float32)
    bf = 0.1 * jax.random.normal(kb, (1,), jnp.float32)
    params["final"] = (wf, bf)
    return params


# ------------------------- pure-numpy reference ------------------------------
def _np_conv_transpose1d(x, w, stride, padding, bias=None):
    N, Cin, L = x.shape
    _, Cout, K = w.shape
    Lout = (L - 1) * stride - 2 * padding + K
    y_full = np.zeros((N, Cout, (L - 1) * stride + K), dtype=np.float64)
    for s in range(L):
        for k in range(K):
            y_full[:, :, s * stride + k] += x[:, :, s] @ w[:, :, k]
    y = y_full[:, :, padding: padding + Lout]
    if bias is not None:
        y = y + bias[None, :, None]
    return y


def np_reference_forward(params, x_ncl):
    x = np.asarray(x_ncl, dtype=np.float64)
    for (w, gamma, beta) in params["layers"]:
        y = _np_conv_transpose1d(x, np.asarray(w, np.float64), stride=2, padding=1)
        mean = y.mean(axis=(0, 2), keepdims=True)
        var = y.var(axis=(0, 2), keepdims=True)
        y = (y - mean) / np.sqrt(var + BN_EPS)
        y = y * np.asarray(gamma, np.float64)[None, :, None] \
              + np.asarray(beta, np.float64)[None, :, None]
        if ACTIVATION == "silu":
            y = y * (1.0 / (1.0 + np.exp(-y)))
        elif ACTIVATION == "sine":
            y = np.sin(SINE_W0 * y)
        else:
            y = np.maximum(y, 0.0)
        x = y
    wf, bf = params["final"]
    y = _np_conv_transpose1d(x, np.asarray(wf, np.float64), stride=1, padding=1,
                             bias=np.asarray(bf, np.float64))
    return np.squeeze(y)


# --------------------------------- main --------------------------------------
if __name__ == "__main__":
    key = jax.random.PRNGKey(0)
    key, pkey, xkey = jax.random.split(key, 3)
    params = init_params(pkey)

    N, C0, L0 = 2, DECODER_DIMS[0], 8
    x = jax.random.normal(xkey, (N, C0, L0), jnp.float32)          # PyTorch NCL input

    fwd = jax.jit(functools.partial(cnn_decoder_forward, params))
    out = jax.block_until_ready(fwd(x))                            # (2, 64)

    ref = np_reference_forward(jax.tree_util.tree_map(np.asarray, params),
                               np.asarray(x))
    np.testing.assert_allclose(np.asarray(out), ref, rtol=2e-2, atol=2e-2)
    print("KERNEL_OK")
</pallas_src>

<mosaic_0001>
module attributes {stable_mosaic.version = 11 : i64} {
  func.func @_decoder_kernel(%arg0: memref<2x8x32xf32, #tpu.memory_space<vmem>>, %arg1: memref<96x32xf32, #tpu.memory_space<vmem>>, %arg2: memref<1x1x16xf32, #tpu.memory_space<vmem>>, %arg3: memref<1x1x16xf32, #tpu.memory_space<vmem>>, %arg4: memref<48x16xf32, #tpu.memory_space<vmem>>, %arg5: memref<1x1x8xf32, #tpu.memory_space<vmem>>, %arg6: memref<1x1x8xf32, #tpu.memory_space<vmem>>, %arg7: memref<24x16xf32, #tpu.memory_space<vmem>>, %arg8: memref<1x1x8xf32, #tpu.memory_space<vmem>>, %arg9: memref<1x1x8xf32, #tpu.memory_space<vmem>>, %arg10: memref<1x1x24xf32, #tpu.memory_space<vmem>>, %arg11: memref<1x1xf32, #tpu.memory_space<smem>>, %arg12: memref<2x64xf32, #tpu.memory_space<vmem>>) attributes {dimension_semantics = [], scalar_prefetch = 0 : i64, scratch_operands = 0 : i64, tpu.core_type = #tpu.core_type<tc>} {
    %c0 = arith.constant 0 : index
    %c0_0 = arith.constant 0 : index
    %c0_1 = arith.constant 0 : index
    %0 = vector.load %arg0[%c0, %c0_0, %c0_1] : memref<2x8x32xf32, #tpu.memory_space<vmem>>, vector<2x8x32xf32>
    %c0_2 = arith.constant 0 : index
    %c0_3 = arith.constant 0 : index
    %1 = vector.load %arg1[%c0_2, %c0_3] : memref<96x32xf32, #tpu.memory_space<vmem>>, vector<96x32xf32>
    %c0_4 = arith.constant 0 : index
    %c0_5 = arith.constant 0 : index
    %c0_6 = arith.constant 0 : index
    %2 = vector.load %arg2[%c0_4, %c0_5, %c0_6] : memref<1x1x16xf32, #tpu.memory_space<vmem>>, vector<1x1x16xf32>
    %c0_7 = arith.constant 0 : index
    %c0_8 = arith.constant 0 : index
    %c0_9 = arith.constant 0 : index
    %3 = vector.load %arg3[%c0_7, %c0_8, %c0_9] : memref<1x1x16xf32, #tpu.memory_space<vmem>>, vector<1x1x16xf32>
    %cst = arith.constant 0.000000e+00 : f32
    %4 = vector.broadcast %cst : f32 to vector<2x1x32xf32>
    %5 = tpu.concatenate %4, %0, %4 in 1 : vector<2x1x32xf32>, vector<2x8x32xf32>, vector<2x1x32xf32> -> vector<2x10x32xf32>
    %6 = vector.extract_strided_slice %5 {offsets = [0, 0, 0], sizes = [2, 8, 32], strides = [1, 1, 1]} : vector<2x10x32xf32> to vector<2x8x32xf32>
    %7 = vector.extract_strided_slice %5 {offsets = [0, 1, 0], sizes = [2, 8, 32], strides = [1, 1, 1]} : vector<2x10x32xf32> to vector<2x8x32xf32>
    %8 = vector.extract_strided_slice %5 {offsets = [0, 2, 0], sizes = [2, 8, 32], strides = [1, 1, 1]} : vector<2x10x32xf32> to vector<2x8x32xf32>
    %9 = tpu.concatenate %6, %7, %8 in 2 : vector<2x8x32xf32>, vector<2x8x32xf32>, vector<2x8x32xf32> -> vector<2x8x96xf32>
    %10 = vector.shape_cast %9 : vector<2x8x96xf32> to vector<16x96xf32>
    %cst_10 = arith.constant dense<0.000000e+00> : vector<16x32xf32>
    %11 = tpu.matmul %10, %1, %cst_10 {dimension_numbers = #tpu.dot_dimension_numbers<[1], [0], [0], [1], [0, 0, 1, 1], [], []>} : vector<16x96xf32>, vector<96x32xf32>, vector<16x32xf32> -> vector<16x32xf32>
    %12 = vector.extract_strided_slice %11 {offsets = [0, 0], sizes = [16, 16], strides = [1, 1]} : vector<16x32xf32> to vector<16x16xf32>
    %13 = vector.shape_cast %12 : vector<16x16xf32> to vector<2x8x16xf32>
    %14 = vector.extract_strided_slice %11 {offsets = [0, 16], sizes = [16, 16], strides = [1, 1]} : vector<16x32xf32> to vector<16x16xf32>
    %15 = vector.shape_cast %14 : vector<16x16xf32> to vector<2x8x16xf32>
    %16 = vector.shape_cast %13 : vector<2x8x16xf32> to vector<2x8x1x16xf32>
    %17 = vector.shape_cast %15 : vector<2x8x16xf32> to vector<2x8x1x16xf32>
    %18 = tpu.concatenate %16, %17 in 2 : vector<2x8x1x16xf32>, vector<2x8x1x16xf32> -> vector<2x8x2x16xf32>
    %19 = vector.shape_cast %18 : vector<2x8x2x16xf32> to vector<2x16x16xf32>
    %cst_11 = arith.constant dense<0.000000e+00> : vector<16xf32>
    %20 = vector.multi_reduction <add>, %19, %cst_11 [0, 1] : vector<2x16x16xf32> to vector<16xf32>
    %21 = vector.shape_cast %20 : vector<16xf32> to vector<1x1x16xf32>
    %cst_12 = arith.constant 3.200000e+01 : f32
    %22 = vector.broadcast %cst_12 : f32 to vector<1x1x16xf32>
    %23 = arith.divf %21, %22 : vector<1x1x16xf32>
    %24 = vector.broadcast %23 : vector<1x1x16xf32> to vector<2x16x16xf32>
    %25 = arith.subf %19, %24 : vector<2x16x16xf32>
    %26 = arith.mulf %25, %25 : vector<2x16x16xf32>
    %cst_13 = arith.constant dense<0.000000e+00> : vector<16xf32>
    %27 = vector.multi_reduction <add>, %26, %cst_13 [0, 1] : vector<2x16x16xf32> to vector<16xf32>
    %28 = vector.shape_cast %27 : vector<16xf32> to vector<1x1x16xf32>
    %cst_14 = arith.constant 3.200000e+01 : f32
    %29 = vector.broadcast %cst_14 : f32 to vector<1x1x16xf32>
    %30 = arith.divf %28, %29 : vector<1x1x16xf32>
    %31 = vector.broadcast %23 : vector<1x1x16xf32> to vector<2x16x16xf32>
    %32 = arith.subf %19, %31 : vector<2x16x16xf32>
    %cst_15 = arith.constant 9.99999974E-6 : f32
    %33 = vector.broadcast %cst_15 : f32 to vector<1x1x16xf32>
    %34 = arith.addf %30, %33 : vector<1x1x16xf32>
    %35 = math.rsqrt %34 : vector<1x1x16xf32>
    %36 = vector.broadcast %35 : vector<1x1x16xf32> to vector<2x16x16xf32>
    %37 = arith.mulf %32, %36 : vector<2x16x16xf32>
    %38 = vector.broadcast %2 : vector<1x1x16xf32> to vector<2x16x16xf32>
    %39 = arith.mulf %37, %38 : vector<2x16x16xf32>
    %40 = vector.broadcast %3 : vector<1x1x16xf32> to vector<2x16x16xf32>
    %41 = arith.addf %39, %40 : vector<2x16x16xf32>
    %cst_16 = arith.constant 0.000000e+00 : f32
    %42 = vector.broadcast %cst_16 : f32 to vector<2x16x16xf32>
    %43 = arith.maximumf %41, %42 : vector<2x16x16xf32>
    %c0_17 = arith.constant 0 : index
    %c0_18 = arith.constant 0 : index
    %44 = vector.load %arg4[%c0_17, %c0_18] : memref<48x16xf32, #tpu.memory_space<vmem>>, vector<48x16xf32>
    %c0_19 = arith.constant 0 : index
    %c0_20 = arith.constant 0 : index
    %c0_21 = arith.constant 0 : index
    %45 = vector.load %arg5[%c0_19, %c0_20, %c0_21] : memref<1x1x8xf32, #tpu.memory_space<vmem>>, vector<1x1x8xf32>
    %c0_22 = arith.constant 0 : index
    %c0_23 = arith.constant 0 : index
    %c0_24 = arith.constant 0 : index
    %46 = vector.load %arg6[%c0_22, %c0_23, %c0_24] : memref<1x1x8xf32, #tpu.memory_space<vmem>>, vector<1x1x8xf32>
    %cst_25 = arith.constant 0.000000e+00 : f32
    %47 = vector.broadcast %cst_25 : f32 to vector<2x1x16xf32>
    %48 = tpu.concatenate %47, %43, %47 in 1 : vector<2x1x16xf32>, vector<2x16x16xf32>, vector<2x1x16xf32> -> vector<2x18x16xf32>
    %49 = vector.extract_strided_slice %48 {offsets = [0, 0, 0], sizes = [2, 16, 16], strides = [1, 1, 1]} : vector<2x18x16xf32> to vector<2x16x16xf32>
    %50 = vector.extract_strided_slice %48 {offsets = [0, 1, 0], sizes = [2, 16, 16], strides = [1, 1, 1]} : vector<2x18x16xf32> to vector<2x16x16xf32>
    %51 = vector.extract_strided_slice %48 {offsets = [0, 2, 0], sizes = [2, 16, 16], strides = [1, 1, 1]} : vector<2x18x16xf32> to vector<2x16x16xf32>
    %52 = tpu.concatenate %49, %50, %51 in 2 : vector<2x16x16xf32>, vector<2x16x16xf32>, vector<2x16x16xf32> -> vector<2x16x48xf32>
    %53 = vector.shape_cast %52 : vector<2x16x48xf32> to vector<32x48xf32>
    %cst_26 = arith.constant dense<0.000000e+00> : vector<32x16xf32>
    %54 = tpu.matmul %53, %44, %cst_26 {dimension_numbers = #tpu.dot_dimension_numbers<[1], [0], [0], [1], [0, 0, 1, 1], [], []>} : vector<32x48xf32>, vector<48x16xf32>, vector<32x16xf32> -> vector<32x16xf32>
    %55 = vector.extract_strided_slice %54 {offsets = [0, 0], sizes = [32, 8], strides = [1, 1]} : vector<32x16xf32> to vector<32x8xf32>
    %56 = vector.shape_cast %55 : vector<32x8xf32> to vector<2x16x8xf32>
    %57 = vector.extract_strided_slice %54 {offsets = [0, 8], sizes = [32, 8], strides = [1, 1]} : vector<32x16xf32> to vector<32x8xf32>
    %58 = vector.shape_cast %57 : vector<32x8xf32> to vector<2x16x8xf32>
    %59 = vector.shape_cast %56 : vector<2x16x8xf32> to vector<2x16x1x8xf32>
    %60 = vector.shape_cast %58 : vector<2x16x8xf32> to vector<2x16x1x8xf32>
    %61 = tpu.concatenate %59, %60 in 2 : vector<2x16x1x8xf32>, vector<2x16x1x8xf32> -> vector<2x16x2x8xf32>
    %62 = vector.shape_cast %61 : vector<2x16x2x8xf32> to vector<2x32x8xf32>
    %cst_27 = arith.constant dense<0.000000e+00> : vector<8xf32>
    %63 = vector.multi_reduction <add>, %62, %cst_27 [0, 1] : vector<2x32x8xf32> to vector<8xf32>
    %64 = vector.shape_cast %63 : vector<8xf32> to vector<1x1x8xf32>
    %cst_28 = arith.constant 6.400000e+01 : f32
    %65 = vector.broadcast %cst_28 : f32 to vector<1x1x8xf32>
    %66 = arith.divf %64, %65 : vector<1x1x8xf32>
    %67 = vector.broadcast %66 : vector<1x1x8xf32> to vector<2x32x8xf32>
    %68 = arith.subf %62, %67 : vector<2x32x8xf32>
    %69 = arith.mulf %68, %68 : vector<2x32x8xf32>
    %cst_29 = arith.constant dense<0.000000e+00> : vector<8xf32>
    %70 = vector.multi_reduction <add>, %69, %cst_29 [0, 1] : vector<2x32x8xf32> to vector<8xf32>
    %71 = vector.shape_cast %70 : vector<8xf32> to vector<1x1x8xf32>
    %cst_30 = arith.constant 6.400000e+01 : f32
    %72 = vector.broadcast %cst_30 : f32 to vector<1x1x8xf32>
    %73 = arith.divf %71, %72 : vector<1x1x8xf32>
    %74 = vector.broadcast %66 : vector<1x1x8xf32> to vector<2x32x8xf32>
    %75 = arith.subf %62, %74 : vector<2x32x8xf32>
    %cst_31 = arith.constant 9.99999974E-6 : f32
    %76 = vector.broadcast %cst_31 : f32 to vector<1x1x8xf32>
    %77 = arith.addf %73, %76 : vector<1x1x8xf32>
    %78 = math.rsqrt %77 : vector<1x1x8xf32>
    %79 = vector.broadcast %78 : vector<1x1x8xf32> to vector<2x32x8xf32>
    %80 = arith.mulf %75, %79 : vector<2x32x8xf32>
    %81 = vector.broadcast %45 : vector<1x1x8xf32> to vector<2x32x8xf32>
    %82 = arith.mulf %80, %81 : vector<2x32x8xf32>
    %83 = vector.broadcast %46 : vector<1x1x8xf32> to vector<2x32x8xf32>
    %84 = arith.addf %82, %83 : vector<2x32x8xf32>
    %cst_32 = arith.constant 0.000000e+00 : f32
    %85 = vector.broadcast %cst_32 : f32 to vector<2x32x8xf32>
    %86 = arith.maximumf %84, %85 : vector<2x32x8xf32>
    %c0_33 = arith.constant 0 : index
    %c0_34 = arith.constant 0 : index
    %87 = vector.load %arg7[%c0_33, %c0_34] : memref<24x16xf32, #tpu.memory_space<vmem>>, vector<24x16xf32>
    %c0_35 = arith.constant 0 : index
    %c0_36 = arith.constant 0 : index
    %c0_37 = arith.constant 0 : index
    %88 = vector.load %arg8[%c0_35, %c0_36, %c0_37] : memref<1x1x8xf32, #tpu.memory_space<vmem>>, vector<1x1x8xf32>
    %c0_38 = arith.constant 0 : index
    %c0_39 = arith.constant 0 : index
    %c0_40 = arith.constant 0 : index
    %89 = vector.load %arg9[%c0_38, %c0_39, %c0_40] : memref<1x1x8xf32, #tpu.memory_space<vmem>>, vector<1x1x8xf32>
    %cst_41 = arith.constant 0.000000e+00 : f32
    %90 = vector.broadcast %cst_41 : f32 to vector<2x1x8xf32>
    %91 = tpu.concatenate %90, %86, %90 in 1 : vector<2x1x8xf32>, vector<2x32x8xf32>, vector<2x1x8xf32> -> vector<2x34x8xf32>
    %92 = vector.extract_strided_slice %91 {offsets = [0, 0, 0], sizes = [2, 32, 8], strides = [1, 1, 1]} : vector<2x34x8xf32> to vector<2x32x8xf32>
    %93 = vector.extract_strided_slice %91 {offsets = [0, 1, 0], sizes = [2, 32, 8], strides = [1, 1, 1]} : vector<2x34x8xf32> to vector<2x32x8xf32>
    %94 = vector.extract_strided_slice %91 {offsets = [0, 2, 0], sizes = [2, 32, 8], strides = [1, 1, 1]} : vector<2x34x8xf32> to vector<2x32x8xf32>
    %95 = tpu.concatenate %92, %93, %94 in 2 : vector<2x32x8xf32>, vector<2x32x8xf32>, vector<2x32x8xf32> -> vector<2x32x24xf32>
    %96 = vector.shape_cast %95 : vector<2x32x24xf32> to vector<64x24xf32>
    %cst_42 = arith.constant dense<0.000000e+00> : vector<64x16xf32>
    %97 = tpu.matmul %96, %87, %cst_42 {dimension_numbers = #tpu.dot_dimension_numbers<[1], [0], [0], [1], [0, 0, 1, 1], [], []>} : vector<64x24xf32>, vector<24x16xf32>, vector<64x16xf32> -> vector<64x16xf32>
    %98 = vector.extract_strided_slice %97 {offsets = [0, 0], sizes = [64, 8], strides = [1, 1]} : vector<64x16xf32> to vector<64x8xf32>
    %99 = vector.shape_cast %98 : vector<64x8xf32> to vector<2x32x8xf32>
    %100 = vector.extract_strided_slice %97 {offsets = [0, 8], sizes = [64, 8], strides = [1, 1]} : vector<64x16xf32> to vector<64x8xf32>
    %101 = vector.shape_cast %100 : vector<64x8xf32> to vector<2x32x8xf32>
    %102 = vector.shape_cast %99 : vector<2x32x8xf32> to vector<2x32x1x8xf32>
    %103 = vector.shape_cast %101 : vector<2x32x8xf32> to vector<2x32x1x8xf32>
    %104 = tpu.concatenate %102, %103 in 2 : vector<2x32x1x8xf32>, vector<2x32x1x8xf32> -> vector<2x32x2x8xf32>
    %105 = vector.shape_cast %104 : vector<2x32x2x8xf32> to vector<2x64x8xf32>
    %cst_43 = arith.constant dense<0.000000e+00> : vector<8xf32>
    %106 = vector.multi_reduction <add>, %105, %cst_43 [0, 1] : vector<2x64x8xf32> to vector<8xf32>
    %107 = vector.shape_cast %106 : vector<8xf32> to vector<1x1x8xf32>
    %cst_44 = arith.constant 1.280000e+02 : f32
    %108 = vector.broadcast %cst_44 : f32 to vector<1x1x8xf32>
    %109 = arith.divf %107, %108 : vector<1x1x8xf32>
    %110 = vector.broadcast %109 : vector<1x1x8xf32> to vector<2x64x8xf32>
    %111 = arith.subf %105, %110 : vector<2x64x8xf32>
    %112 = arith.mulf %111, %111 : vector<2x64x8xf32>
    %cst_45 = arith.constant dense<0.000000e+00> : vector<8xf32>
    %113 = vector.multi_reduction <add>, %112, %cst_45 [0, 1] : vector<2x64x8xf32> to vector<8xf32>
    %114 = vector.shape_cast %113 : vector<8xf32> to vector<1x1x8xf32>
    %cst_46 = arith.constant 1.280000e+02 : f32
    %115 = vector.broadcast %cst_46 : f32 to vector<1x1x8xf32>
    %116 = arith.divf %114, %115 : vector<1x1x8xf32>
    %117 = vector.broadcast %109 : vector<1x1x8xf32> to vector<2x64x8xf32>
    %118 = arith.subf %105, %117 : vector<2x64x8xf32>
    %cst_47 = arith.constant 9.99999974E-6 : f32
    %119 = vector.broadcast %cst_47 : f32 to vector<1x1x8xf32>
    %120 = arith.addf %116, %119 : vector<1x1x8xf32>
    %121 = math.rsqrt %120 : vector<1x1x8xf32>
    %122 = vector.broadcast %121 : vector<1x1x8xf32> to vector<2x64x8xf32>
    %123 = arith.mulf %118, %122 : vector<2x64x8xf32>
    %124 = vector.broadcast %88 : vector<1x1x8xf32> to vector<2x64x8xf32>
    %125 = arith.mulf %123, %124 : vector<2x64x8xf32>
    %126 = vector.broadcast %89 : vector<1x1x8xf32> to vector<2x64x8xf32>
    %127 = arith.addf %125, %126 : vector<2x64x8xf32>
    %cst_48 = arith.constant 0.000000e+00 : f32
    %128 = vector.broadcast %cst_48 : f32 to vector<2x64x8xf32>
    %129 = arith.maximumf %127, %128 : vector<2x64x8xf32>
    %cst_49 = arith.constant 0.000000e+00 : f32
    %130 = vector.broadcast %cst_49 : f32 to vector<2x1x8xf32>
    %131 = tpu.concatenate %130, %129, %130 in 1 : vector<2x1x8xf32>, vector<2x64x8xf32>, vector<2x1x8xf32> -> vector<2x66x8xf32>
    %132 = vector.extract_strided_slice %131 {offsets = [0, 0, 0], sizes = [2, 64, 8], strides = [1, 1, 1]} : vector<2x66x8xf32> to vector<2x64x8xf32>
    %133 = vector.extract_strided_slice %131 {offsets = [0, 1, 0], sizes = [2, 64, 8], strides = [1, 1, 1]} : vector<2x66x8xf32> to vector<2x64x8xf32>
    %134 = vector.extract_strided_slice %131 {offsets = [0, 2, 0], sizes = [2, 64, 8], strides = [1, 1, 1]} : vector<2x66x8xf32> to vector<2x64x8xf32>
    %135 = tpu.concatenate %132, %133, %134 in 2 : vector<2x64x8xf32>, vector<2x64x8xf32>, vector<2x64x8xf32> -> vector<2x64x24xf32>
    %c0_50 = arith.constant 0 : index
    %c0_51 = arith.constant 0 : index
    %c0_52 = arith.constant 0 : index
    %136 = vector.load %arg10[%c0_50, %c0_51, %c0_52] : memref<1x1x24xf32, #tpu.memory_space<vmem>>, vector<1x1x24xf32>
    %137 = vector.broadcast %136 : vector<1x1x24xf32> to vector<2x64x24xf32>
    %138 = arith.mulf %135, %137 : vector<2x64x24xf32>
    %cst_53 = arith.constant dense<0.000000e+00> : vector<2x64xf32>
    %139 = vector.multi_reduction <add>, %138, %cst_53 [2] : vector<2x64x24xf32> to vector<2x64xf32>
    %c0_54 = arith.constant 0 : index
    %c0_55 = arith.constant 0 : index
    %140 = memref.load %arg11[%c0_54, %c0_55] : memref<1x1xf32, #tpu.memory_space<smem>>
    %141 = vector.broadcast %140 : f32 to vector<2x64xf32>
    %142 = arith.addf %139, %141 : vector<2x64xf32>
    %c0_56 = arith.constant 0 : index
    %c0_57 = arith.constant 0 : index
    %143 = vector.load %arg12[%c0_56, %c0_57] : memref<2x64xf32, #tpu.memory_space<vmem>>, vector<2x64xf32>
    tpu.vector_store %arg12[%c0_56, %c0_57], %142 {strides = array<i32>} : memref<2x64xf32, #tpu.memory_space<vmem>>, vector<2x64xf32>,
    return
  }
}

</mosaic_0001>

<llo_original>
// kernel: cnn_decoder_forward.1
$region0: #{cnn_decoder_forward.1}
  #allocation0 [shape = 'u32[]', space=smem, size = 0x4, offset = 0x4, fixed_abs, tag = 'smem constant byte address 0x4 - core index']
  #allocation1 [shape = 'u32[144,128]{1,0:T(1,128)}', space=vmem, size = 0x12000, scoped, tag = 'internal scratch']
  #allocation2 [shape = 'f32[1,1]{1,0:T(1,128)S(6)}', space=smem, size = 0x200, scoped, tag = 'scoped memory for cnn_decoder_forward.1']
  %s0 = inlined_call_operand.hbm [shape: f32[2,8,32], index: 0, kind: input, shape index: {}]
  %s1 = inlined_call_operand.hbm [shape: f32[96,32], index: 1, kind: input, shape index: {}]
  %s2 = inlined_call_operand.vmem [shape: f32[1,1,16], index: 2, kind: input, shape index: {}]
  %s3 = inlined_call_operand.vmem [shape: f32[1,1,16], index: 3, kind: input, shape index: {}]
  %s4 = inlined_call_operand.hbm [shape: f32[48,16], index: 4, kind: input, shape index: {}]
  %s5 = inlined_call_operand.vmem [shape: f32[1,1,8], index: 5, kind: input, shape index: {}]
  %s6 = inlined_call_operand.vmem [shape: f32[1,1,8], index: 6, kind: input, shape index: {}]
  %s7 = inlined_call_operand.hbm [shape: f32[24,16], index: 7, kind: input, shape index: {}]
  %s8 = inlined_call_operand.vmem [shape: f32[1,1,8], index: 8, kind: input, shape index: {}]
  %s9 = inlined_call_operand.vmem [shape: f32[1,1,8], index: 9, kind: input, shape index: {}]
  %s10 = inlined_call_operand.vmem [shape: f32[1,1,24], index: 10, kind: input, shape index: {}]
  %s11 = inlined_call_operand.<no memory space> [shape: f32[1,1], index: 11, kind: input, shape index: {}]
  %s12 = inlined_call_operand.hbm [shape: f32[2,64], index: 12, kind: output, shape index: {}]
  %s13 = sld [smem:[#allocation0]]
  $region74: #{cnn_decoder_forward.1} parent=0
    _
  %s15 = ssub.s32 1, %s13
  %s16 = scalar_select 0, %s15, %s13
  %17 = sst [smem:[#allocation2]] %s11
  $region1: #{cnn_decoder_forward.1} parent=0
    #allocation3 [shape = 'u8[8192]{0}', space=vmem, size = 0x2000, scoped, tag = 'input window, operand 0, single buffered']
    #allocation4 [shape = 's32[1]{0}', space=sflag, size = 0x4, scoped, tag = 'scoped memory for cnn_decoder_forward.1']
    #allocation5 [shape = 's32[1]{0}', space=sflag, size = 0x4, scoped, tag = 'scoped memory for cnn_decoder_forward.1']
    #allocation6 [shape = 'u8[49152]{0}', space=vmem, size = 0xc000, scoped, tag = 'input window, operand 1, single buffered']
    #allocation7 [shape = 's32[1]{0}', space=sflag, size = 0x4, scoped, tag = 'scoped memory for cnn_decoder_forward.1']
    #allocation8 [shape = 'u8[24576]{0}', space=vmem, size = 0x6000, scoped, tag = 'input window, operand 4, single buffered']
    #allocation9 [shape = 'u8[12288]{0}', space=vmem, size = 0x3000, scoped, tag = 'input window, operand 7, single buffered']
    #allocation10 [shape = 's32[1]{0}', space=sflag, size = 0x4, scoped, tag = 'scoped memory for cnn_decoder_forward.1']
    #allocation11 [shape = 'u8[1024]{0}', space=vmem, size = 0x400, scoped, tag = 'output window, operand 0, single buffered']
    %18 = vsyncpa [#allocation4], 0
    %19 = vsyncpa [#allocation7], 0
    %20 = vsyncpa [#allocation10], 0
    %21 = vsyncpa [#allocation5], 0
    // Predicated region
    $region2: #{cnn_decoder_forward.1} parent=1 // pred_check
      _
    $region3: #{cnn_decoder_forward.1} parent=1 // pred_check_branch
      %23 = sbr.rel (0) target = $region5
    $region4: #{cnn_decoder_forward.1} parent=1 // pred_region
      %s25 = ssub.s32 256, 256
      %26 = vsyncadd [#allocation4], %s25
      %s27 = sshll.u32 [#allocation3], 4
      %s28 = int_to_ptr.vmem [resolvable:$true] %s27
      %33 = dma.hbm_to_vmem [thread:$0]  %s0, 256, %s28, [#allocation4], 128, 128, 8
    $region5: #{cnn_decoder_forward.1} parent=1 // pred_fallthru
      _
    // Predicated region
    $region6: #{cnn_decoder_forward.1} parent=1 // pred_check
      _
    $region7: #{cnn_decoder_forward.1} parent=1 // pred_check_branch
      %35 = sbr.rel (0) target = $region9
    $region8: #{cnn_decoder_forward.1} parent=1 // pred_region
      %s37 = ssub.s32 1536, 1536
      %38 = vsyncadd [#allocation7], %s37
      %s39 = sshll.u32 [#allocation6], 4
      %s40 = int_to_ptr.vmem [resolvable:$true] %s39
      %45 = dma.hbm_to_vmem [thread:$0]  %s1, 1536, %s40, [#allocation7], 128, 128, 8
    $region9: #{cnn_decoder_forward.1} parent=1 // pred_fallthru
      _
    // Predicated region
    $region10: #{cnn_decoder_forward.1} parent=1 // pred_check
      _
    $region11: #{cnn_decoder_forward.1} parent=1 // pred_check_branch
      %47 = sbr.rel (0) target = $region13
    $region12: #{cnn_decoder_forward.1} parent=1 // pred_region
      _
    $region13: #{cnn_decoder_forward.1} parent=1 // pred_fallthru
      _
    // Predicated region
    $region14: #{cnn_decoder_forward.1} parent=1 // pred_check
      _
    $region15: #{cnn_decoder_forward.1} parent=1 // pred_check_branch
      %49 = sbr.rel (0) target = $region17
    $region16: #{cnn_decoder_forward.1} parent=1 // pred_region
      _
    $region17: #{cnn_decoder_forward.1} parent=1 // pred_fallthru
      _
    // Predicated region
    $region18: #{cnn_decoder_forward.1} parent=1 // pred_check
      _
    $region19: #{cnn_decoder_forward.1} parent=1 // pred_check_branch
      %51 = sbr.rel (0) target = $region21
    $region20: #{cnn_decoder_forward.1} parent=1 // pred_region
      %s53 = ssub.s32 768, 768
      %54 = vsyncadd [#allocation7], %s53
      %s55 = sshll.u32 [#allocation8], 4
      %s56 = int_to_ptr.vmem [resolvable:$true] %s55
      %61 = dma.hbm_to_vmem [thread:$0]  %s4, 768, %s56, [#allocation7], 128, 128, 8
    $region21: #{cnn_decoder_forward.1} parent=1 // pred_fallthru
      _
    // Predicated region
    $region22: #{cnn_decoder_forward.1} parent=1 // pred_check
      _
    $region23: #{cnn_decoder_forward.1} parent=1 // pred_check_branch
      %63 = sbr.rel (0) target = $region25
    $region24: #{cnn_decoder_forward.1} parent=1 // pred_region
      _
    $region25: #{cnn_decoder_forward.1} parent=1 // pred_fallthru
      _
    // Predicated region
    $region26: #{cnn_decoder_forward.1} parent=1 // pred_check
      _
    $region27: #{cnn_decoder_forward.1} parent=1 // pred_check_branch
      %65 = sbr.rel (0) target = $region29
    $region28: #{cnn_decoder_forward.1} parent=1 // pred_region
      _
    $region29: #{cnn_decoder_forward.1} parent=1 // pred_fallthru
      _
    // Predicated region
    $region30: #{cnn_decoder_forward.1} parent=1 // pred_check
      _
    $region31: #{cnn_decoder_forward.1} parent=1 // pred_check_branch
      %67 = sbr.rel (0) target = $region33
    $region32: #{cnn_decoder_forward.1} parent=1 // pred_region
      %s69 = ssub.s32 384, 384
      %70 = vsyncadd [#allocation10], %s69
      %s71 = sshll.u32 [#allocation9], 4
      %s72 = int_to_ptr.vmem [resolvable:$true] %s71
      %77 = dma.hbm_to_vmem [thread:$0]  %s7, 384, %s72, [#allocation10], 128, 128, 8
    $region33: #{cnn_decoder_forward.1} parent=1 // pred_fallthru
      _
    // Predicated region
    $region34: #{cnn_decoder_forward.1} parent=1 // pred_check
      _
    $region35: #{cnn_decoder_forward.1} parent=1 // pred_check_branch
      %79 = sbr.rel (0) target = $region37
    $region36: #{cnn_decoder_forward.1} parent=1 // pred_region
      _
    $region37: #{cnn_decoder_forward.1} parent=1 // pred_fallthru
      _
    // Predicated region
    $region38: #{cnn_decoder_forward.1} parent=1 // pred_check
      _
    $region39: #{cnn_decoder_forward.1} parent=1 // pred_check_branch
      %81 = sbr.rel (0) target = $region41
    $region40: #{cnn_decoder_forward.1} parent=1 // pred_region
      _
    $region41: #{cnn_decoder_forward.1} parent=1 // pred_fallthru
      _
    // Predicated region
    $region42: #{cnn_decoder_forward.1} parent=1 // pred_check
      _
    $region43: #{cnn_decoder_forward.1} parent=1 // pred_check_branch
      %83 = sbr.rel (0) target = $region45
    $region44: #{cnn_decoder_forward.1} parent=1 // pred_region
      _
    $region45: #{cnn_decoder_forward.1} parent=1 // pred_fallthru
      _
    // Predicated region
    $region46: #{cnn_decoder_forward.1} parent=1 // pred_check
      _
    $region47: #{cnn_decoder_forward.1} parent=1 // pred_check_branch
      %85 = sbr.rel (0) target = $region49
    $region48: #{cnn_decoder_forward.1} parent=1 // pred_region
      _
    $region49: #{cnn_decoder_forward.1} parent=1 // pred_fallthru
      _
    // Predicated region
    $region50: #{cnn_decoder_forward.1} parent=1 // pred_check
      _
    $region51: #{cnn_decoder_forward.1} parent=1 // pred_check_branch
      %87 = sbr.rel (0) target = $region53
    $region52: #{cnn_decoder_forward.1} parent=1 // pred_region
      %88 = dma.done [#allocation4], 256
    $region53: #{cnn_decoder_forward.1} parent=1 // pred_fallthru
      _
    // Predicated region
    $region54: #{cnn_decoder_forward.1} parent=1 // pred_check
      _
    $region55: #{cnn_decoder_forward.1} parent=1 // pred_check_branch
      %90 = sbr.rel (0) target = $region57
    $region56: #{cnn_decoder_forward.1} parent=1 // pred_region
      %91 = dma.done [#allocation7], 1536
    $region57: #{cnn_decoder_forward.1} parent=1 // pred_fallthru
      _
    // Predicated region
    $region58: #{cnn_decoder_forward.1} parent=1 // pred_check
      _
    $region59: #{cnn_decoder_forward.1} parent=1 // pred_check_branch
      %93 = sbr.rel (0) target = $region61
    $region60: #{cnn_decoder_forward.1} parent=1 // pred_region
      %94 = dma.done [#allocation7], 768
    $region61: #{cnn_decoder_forward.1} parent=1 // pred_fallthru
      _
    // Predicated region
    $region62: #{cnn_decoder_forward.1} parent=1 // pred_check
      _
    $region63: #{cnn_decoder_forward.1} parent=1 // pred_check_branch
      %96 = sbr.rel (0) target = $region65
    $region64: #{cnn_decoder_forward.1} parent=1 // pred_region
      %97 = dma.done [#allocation10], 384
    $region65: #{cnn_decoder_forward.1} parent=1 // pred_fallthru
      _
    %v98 = vld [vmem:[#allocation3] sm:$0xff]
    %v99 = vld [vmem:[#allocation3 + $0x8] sm:$0xff]
    %v100 = vld [vmem:[#allocation6] sm:$0xff]
    %v101 = vld [vmem:[#allocation6 + $0x8] sm:$0xff]
    %v102 = vld [vmem:[#allocation6 + $0x10] sm:$0xff]
    %v103 = vld [vmem:[#allocation6 + $0x18] sm:$0xff]
    %v104 = vld [vmem:[#allocation6 + $0x20] sm:$0xff]
    %v105 = vld [vmem:[#allocation6 + $0x28] sm:$0xff]
    %v106 = vld [vmem:[#allocation6 + $0x30] sm:$0xff]
    %v107 = vld [vmem:[#allocation6 + $0x38] sm:$0xff]
    %v108 = vld [vmem:[#allocation6 + $0x40] sm:$0xff]
    %v109 = vld [vmem:[#allocation6 + $0x48] sm:$0xff]
    %v110 = vld [vmem:[#allocation6 + $0x50] sm:$0xff]
    %v111 = vld [vmem:[#allocation6 + $0x58] sm:$0xff]
    %v112 = vld [vmem:[%s2] sm:$0x1]
    %v113 = vld [vmem:[%s3] sm:$0x1]
    %v116 = vrot.slane %v98, 7
    %v117 = vrot.slane %v99, 7
    %vm120 = vcmask 1040384
    %v121 = vsel %vm120, 0.0, %v116
    %v122 = vsel %vm120, 0.0, %v117
    %v123 = vsel %vm120, %v116, 0.0
    %v124 = vsel %vm120, %v117, 0.0
    %vm129 = vcmask 1046528
    %v130 = vrot.slane %v121, 1
    %v131 = vrot.slane %v123, 1
    %v132 = vsel %vm129, %v130, %v131
    %v133 = vrot.slane %v122, 1
    %v134 = vrot.slane %v124, 1
    %v135 = vsel %vm129, %v133, %v134
    %136 = vrot.lane.b32.xlu0 %v132, 32
    %v137 = vpop.permute.xlu0 %136
    %138 = vrot.lane.b32.xlu0 %v135, 32
    %v139 = vpop.permute.xlu0 %138
    %vm142 = vcmask 1045504
    %v143 = vrot.slane %v121, 2
    %v144 = vrot.slane %v123, 2
    %v145 = vsel %vm142, %v143, %v144
    %v146 = vrot.slane %v122, 2
    %v147 = vrot.slane %v124, 2
    %v148 = vsel %vm142, %v146, %v147
    %149 = vrot.lane.b32.xlu0 %v145, 64
    %v150 = vpop.permute.xlu0 %149
    %151 = vrot.lane.b32.xlu0 %v148, 64
    %v152 = vpop.permute.xlu0 %151
    %vm155 = vcmask 261120
    %v156 = vsel %vm155, %v121, %v137
    %v157 = vsel %vm155, %v122, %v139
    %vm158 = vcmask 523264
    %v159 = vsel %vm158, %v156, %v150
    %v160 = vsel %vm158, %v157, %v152
    %vm161 = vcmask 785408
    %v163 = vsel %vm161, %v159, 0
    %v166 = vsel %vm161, %v160, 0
    %168 = vmatprep.subr.mxu0 0.0
    %169 = vmatpush1.msra.mxu0 %v100
    %170 = vmatprep.subr.mxu0 0.0
    %171 = vmatpush1.msra.mxu0 %v101
    %172 = vmatprep.subr.mxu0 0.0
    %173 = vmatpush1.msra.mxu0 %v102
    %174 = vmatprep.subr.mxu0 0.0
    %175 = vmatpush1.msra.mxu0 %v103
    %176 = vmatprep.subr.mxu0 0.0
    %177 = vmatpush1.msra.mxu0 %v104
    %178 = vmatprep.subr.mxu0 0.0
    %179 = vmatpush1.msra.mxu0 %v105
    %180 = vmatprep.subr.mxu0 0.0
    %181 = vmatpush1.msra.mxu0 %v106
    %182 = vmatprep.subr.mxu0 0.0
    %183 = vmatpush1.msra.mxu0 %v107
    %184 = vmatprep.subr.mxu0 0.0
    %185 = vmatpush1.msra.mxu0 %v108
    %186 = vmatprep.subr.mxu0 0.0
    %187 = vmatpush1.msra.mxu0 %v109
    %188 = vmatprep.subr.mxu0 0.0
    %189 = vmatpush1.msra.mxu0 %v110
    %190 = vmatprep.subr.mxu0 0.0
    %191 = vmatpush1.msra.mxu0 %v111
    %192 = vmatprep.subr.mxu0 0.0
    %193 = vmatpush1.msra.mxu0 0.0
    %194 = vmatprep.subr.mxu0 0.0
    %195 = vmatpush1.msra.mxu0 0.0
    %196 = vmatprep.subr.mxu0 0.0
    %197 = vmatpush1.msra.mxu0 0.0
    %198 = vmatprep.subr.mxu0 0.0
    %199 = vmatpush1.msra.mxu0 0.0
    %200 = vmatprep.subr.mxu0 0.0
    %201 = vmatpush1.msra.mxu0 0.0
    %202 = vmatprep.subr.mxu0 0.0
    %203 = vmatpush1.msra.mxu0 0.0
    %204 = vmatprep.subr.mxu0 0.0
    %205 = vmatpush1.msra.mxu0 0.0
    %206 = vmatprep.subr.mxu0 0.0
    %207 = vmatpush1.msra.mxu0 0.0
    %208 = vmatprep.subr.mxu0 0.0
    %209 = vmatpush1.msra.mxu0 0.0
    %210 = vmatprep.subr.mxu0 0.0
    %211 = vmatpush1.msra.mxu0 0.0
    %212 = vmatprep.subr.mxu0 0.0
    %213 = vmatpush1.msra.mxu0 0.0
    %214 = vmatprep.subr.mxu0 0.0
    %215 = vmatpush1.msra.mxu0 0.0
    %216 = vmatprep.subr.mxu0 0.0
    %217 = vmatpush1.msra.mxu0 0.0
    %218 = vmatprep.subr.mxu0 0.0
    %219 = vmatpush1.msra.mxu0 0.0
    %220 = vmatprep.subr.mxu0 0.0
    %221 = vmatpush1.msra.mxu0 0.0
    %222 = vmatprep.subr.mxu0 0.0
    %223 = vmatpush1.msra.mxu0 0.0
    %224 = vmatprep.subr.mxu0 0.0
    %225 = vmatpush1.msra.mxu0 0.0
    %226 = vmatprep.subr.mxu0 0.0
    %227 = vmatpush1.msra.mxu0 0.0
    %228 = vmatprep.subr.mxu0 0.0
    %229 = vmatpush1.msra.mxu0 0.0
    %230 = vmatprep.subr.mxu0 0.0
    %231 = vmatpush1.msra.mxu0 0.0
    %232 = vmatprep.mubr.f32.mxu0 0.0
    %233 = vmatmul.mubr.f32.gmra.mrb[0].mxu0 %v163
    %v234 = vpop.f32.mrb[0].mxu0
    %v235 = vadd.f32 0.0, %v234
    %v236 = vpop.f32.mrb[0].mxu0
    %237 = vmatprep.mubr.f32.mxu0 0.0
    %238 = vmatmul.mubr.f32.gmra.mrb[0].mxu0 %v166
    %v239 = vpop.f32.mrb[0].mxu0
    %v240 = vadd.f32 0.0, %v239
    %v241 = vpop.f32.mrb[0].mxu0
    %242 = vdwg.mxu0
    %v245 = vcombine.high %v235, %v235
    %v247 = vunpack.c.l.s4 1966171168
    %v248 = vunpack.c.0.s8 %v247
    %v249 = vlaneseq
    %v250 = vshrl.u32 %v249, 7
    %v251 = vsub.s32 %v248, %v250
    %v252 = vrot.slane %v235, %v251
    %v254 = vunpack.c.l.s4 1966171168
    %v255 = vunpack.c.0.s8 %v254
    %v256 = vlaneseq
    %v257 = vshrl.u32 %v256, 7
    %v258 = vsub.s32 %v255, %v257
    %v259 = vrot.slane %v245, %v258
    %v260 = vcombine.high %v252, %v252
    %v261 = vcombine.high %v259, %v259
    %v263 = vunpack.c.l.s4 1966171168
    %v264 = vunpack.c.0.s8 %v263
    %v265 = vlaneseq
    %v266 = vshrl.u32 %v265, 7
    %v267 = vsub.s32 %v264, %v266
    %v268 = vrot.slane %v252, %v267
    %v270 = vunpack.c.l.s4 1966171168
    %v271 = vunpack.c.0.s8 %v270
    %v272 = vlaneseq
    %v273 = vshrl.u32 %v272, 7
    %v274 = vsub.s32 %v271, %v273
    %v275 = vrot.slane %v259, %v274
    %v277 = vunpack.c.l.s4 1966171168
    %v278 = vunpack.c.0.s8 %v277
    %v279 = vlaneseq
    %v280 = vshrl.u32 %v279, 7
    %v281 = vsub.s32 %v278, %v280
    %v282 = vrot.slane %v260, %v281
    %v284 = vunpack.c.l.s4 1966171168
    %v285 = vunpack.c.0.s8 %v284
    %v286 = vlaneseq
    %v287 = vshrl.u32 %v286, 7
    %v288 = vsub.s32 %v285, %v287
    %v289 = vrot.slane %v261, %v288
    %v290 = vcombine.high %v268, %v268
    %v291 = vcombine.high %v275, %v275
    %v292 = vcombine.high %v282, %v282
    %v293 = vcombine.high %v289, %v289
    %v294 = vcombine.high %v240, %v240
    %v296 = vunpack.c.l.s4 1966171168
    %v297 = vunpack.c.0.s8 %v296
    %v298 = vlaneseq
    %v299 = vshrl.u32 %v298, 7
    %v300 = vsub.s32 %v297, %v299
    %v301 = vrot.slane %v240, %v300
    %v303 = vunpack.c.l.s4 1966171168
    %v304 = vunpack.c.0.s8 %v303
    %v305 = vlaneseq
    %v306 = vshrl.u32 %v305, 7
    %v307 = vsub.s32 %v304, %v306
    %v308 = vrot.slane %v294, %v307
    %v309 = vcombine.high %v301, %v301
    %v310 = vcombine.high %v308, %v308
    %v312 = vunpack.c.l.s4 1966171168
    %v313 = vunpack.c.0.s8 %v312
    %v314 = vlaneseq
    %v315 = vshrl.u32 %v314, 7
    %v316 = vsub.s32 %v313, %v315
    %v317 = vrot.slane %v301, %v316
    %v319 = vunpack.c.l.s4 1966171168
    %v320 = vunpack.c.0.s8 %v319
    %v321 = vlaneseq
    %v322 = vshrl.u32 %v321, 7
    %v323 = vsub.s32 %v320, %v322
    %v324 = vrot.slane %v308, %v323
    %v326 = vunpack.c.l.s4 1966171168
    %v327 = vunpack.c.0.s8 %v326
    %v328 = vlaneseq
    %v329 = vshrl.u32 %v328, 7
    %v330 = vsub.s32 %v327, %v329
    %v331 = vrot.slane %v309, %v330
    %v333 = vunpack.c.l.s4 1966171168
    %v334 = vunpack.c.0.s8 %v333
    %v335 = vlaneseq
    %v336 = vshrl.u32 %v335, 7
    %v337 = vsub.s32 %v334, %v336
    %v338 = vrot.slane %v310, %v337
    %v339 = vcombine.high %v317, %v317
    %v340 = vcombine.high %v324, %v324
    %v341 = vcombine.high %v331, %v331
    %v342 = vcombine.high %v338, %v338
    %v359 = vlaneseq
    %v360 = vshrl.u32 %v359, 7
    %v361 = vsub.s32 0, %v360
    %v362 = vrot.slane %v268, %v361
    %v363 = vlaneseq
    %v364 = vshrl.u32 %v363, 7
    %v365 = vsub.s32 0, %v364
    %v366 = vrot.slane %v282, %v365
    %v367 = vlaneseq
    %v368 = vshrl.u32 %v367, 7
    %v369 = vsub.s32 0, %v368
    %v370 = vrot.slane %v290, %v369
    %v371 = vlaneseq
    %v372 = vshrl.u32 %v371, 7
    %v373 = vsub.s32 0, %v372
    %v374 = vrot.slane %v292, %v373
    %v375 = vlaneseq
    %v376 = vshrl.u32 %v375, 7
    %v377 = vsub.s32 0, %v376
    %v378 = vrot.slane %v275, %v377
    %v379 = vlaneseq
    %v380 = vshrl.u32 %v379, 7
    %v381 = vsub.s32 0, %v380
    %v382 = vrot.slane %v289, %v381
    %v383 = vlaneseq
    %v384 = vshrl.u32 %v383, 7
    %v385 = vsub.s32 0, %v384
    %v386 = vrot.slane %v291, %v385
    %v387 = vlaneseq
    %v388 = vshrl.u32 %v387, 7
    %v389 = vsub.s32 0, %v388
    %v390 = vrot.slane %v293, %v389
    %v391 = vlaneseq
    %v392 = vshrl.u32 %v391, 7
    %v393 = vsub.s32 0, %v392
    %v394 = vrot.slane %v317, %v393
    %v395 = vlaneseq
    %v396 = vshrl.u32 %v395, 7
    %v397 = vsub.s32 0, %v396
    %v398 = vrot.slane %v331, %v397
    %v399 = vlaneseq
    %v400 = vshrl.u32 %v399, 7
    %v401 = vsub.s32 0, %v400
    %v402 = vrot.slane %v339, %v401
    %v403 = vlaneseq
    %v404 = vshrl.u32 %v403, 7
    %v405 = vsub.s32 0, %v404
    %v406 = vrot.slane %v341, %v405
    %v407 = vlaneseq
    %v408 = vshrl.u32 %v407, 7
    %v409 = vsub.s32 0, %v408
    %v410 = vrot.slane %v324, %v409
    %v411 = vlaneseq
    %v412 = vshrl.u32 %v411, 7
    %v413 = vsub.s32 0, %v412
    %v414 = vrot.slane %v338, %v413
    %v415 = vlaneseq
    %v416 = vshrl.u32 %v415, 7
    %v417 = vsub.s32 0, %v416
    %v418 = vrot.slane %v340, %v417
    %v419 = vlaneseq
    %v420 = vshrl.u32 %v419, 7
    %v421 = vsub.s32 0, %v420
    %v422 = vrot.slane %v342, %v421
    %423 = vrot.lane.b32.xlu0 %v362, 112
    %v424 = vpop.permute.xlu0 %423
    %425 = vrot.lane.b32.xlu0 %v366, 112
    %v426 = vpop.permute.xlu0 %425
    %427 = vrot.lane.b32.xlu0 %v370, 112
    %v428 = vpop.permute.xlu0 %427
    %429 = vrot.lane.b32.xlu0 %v374, 112
    %v430 = vpop.permute.xlu0 %429
    %431 = vrot.lane.b32.xlu0 %v378, 112
    %v432 = vpop.permute.xlu0 %431
    %433 = vrot.lane.b32.xlu0 %v382, 112
    %v434 = vpop.permute.xlu0 %433
    %435 = vrot.lane.b32.xlu0 %v386, 112
    %v436 = vpop.permute.xlu0 %435
    %437 = vrot.lane.b32.xlu0 %v390, 112
    %v438 = vpop.permute.xlu0 %437
    %439 = vrot.lane.b32.xlu0 %v394, 112
    %v440 = vpop.permute.xlu0 %439
    %441 = vrot.lane.b32.xlu0 %v398, 112
    %v442 = vpop.permute.xlu0 %441
    %443 = vrot.lane.b32.xlu0 %v402, 112
    %v444 = vpop.permute.xlu0 %443
    %445 = vrot.lane.b32.xlu0 %v406, 112
    %v446 = vpop.permute.xlu0 %445
    %447 = vrot.lane.b32.xlu0 %v410, 112
    %v448 = vpop.permute.xlu0 %447
    %449 = vrot.lane.b32.xlu0 %v414, 112
    %v450 = vpop.permute.xlu0 %449
    %451 = vrot.lane.b32.xlu0 %v418, 112
    %v452 = vpop.permute.xlu0 %451
    %453 = vrot.lane.b32.xlu0 %v422, 112
    %v454 = vpop.permute.xlu0 %453
    %v471 = vsel %vm120, %v268, %v424
    %v472 = vsel %vm120, %v282, %v426
    %v473 = vsel %vm120, %v290, %v428
    %v474 = vsel %vm120, %v292, %v430
    %v475 = vsel %vm120, %v275, %v432
    %v476 = vsel %vm120, %v289, %v434
    %v477 = vsel %vm120, %v291, %v436
    %v478 = vsel %vm120, %v293, %v438
    %v479 = vsel %vm120, %v317, %v440
    %v480 = vsel %vm120, %v331, %v442
    %v481 = vsel %vm120, %v339, %v444
    %v482 = vsel %vm120, %v341, %v446
    %v483 = vsel %vm120, %v324, %v448
    %v484 = vsel %vm120, %v338, %v450
    %v485 = vsel %vm120, %v340, %v452
    %v486 = vsel %vm120, %v342, %v454
    %v503 = vcombine.low %v471, %v472
    %v504 = vcombine.low %v473, %v474
    %v506 = vunpack.c.l.s4 1983009808
    %v507 = vunpack.c.0.s8 %v506
    %v508 = vlaneseq
    %v509 = vshrl.u32 %v508, 7
    %v510 = vsub.s32 %v507, %v509
    %v511 = vrot.slane %v503, %v510
    %v513 = vunpack.c.l.s4 1983009808
    %v514 = vunpack.c.0.s8 %v513
    %v515 = vlaneseq
    %v516 = vshrl.u32 %v515, 7
    %v517 = vsub.s32 %v514, %v516
    %v518 = vrot.slane %v504, %v517
    %v519 = vcombine.low %v511, %v518
    %v520 = vcombine.low %v475, %v476
    %v521 = vcombine.low %v477, %v478
    %v523 = vunpack.c.l.s4 1983009808
    %v524 = vunpack.c.0.s8 %v523
    %v525 = vlaneseq
    %v526 = vshrl.u32 %v525, 7
    %v527 = vsub.s32 %v524, %v526
    %v528 = vrot.slane %v520, %v527
    %v530 = vunpack.c.l.s4 1983009808
    %v531 = vunpack.c.0.s8 %v530
    %v532 = vlaneseq
    %v533 = vshrl.u32 %v532, 7
    %v534 = vsub.s32 %v531, %v533
    %v535 = vrot.slane %v521, %v534
    %v536 = vcombine.low %v528, %v535
    %v537 = vcombine.low %v479, %v480
    %v538 = vcombine.low %v481, %v482
    %v540 = vunpack.c.l.s4 1983009808
    %v541 = vunpack.c.0.s8 %v540
    %v542 = vlaneseq
    %v543 = vshrl.u32 %v542, 7
    %v544 = vsub.s32 %v541, %v543
    %v545 = vrot.slane %v537, %v544
    %v547 = vunpack.c.l.s4 1983009808
    %v548 = vunpack.c.0.s8 %v547
    %v549 = vlaneseq
    %v550 = vshrl.u32 %v549, 7
    %v551 = vsub.s32 %v548, %v550
    %v552 = vrot.slane %v538, %v551
    %v553 = vcombine.low %v545, %v552
    %v554 = vcombine.low %v483, %v484
    %v555 = vcombine.low %v485, %v486
    %v557 = vunpack.c.l.s4 1983009808
    %v558 = vunpack.c.0.s8 %v557
    %v559 = vlaneseq
    %v560 = vshrl.u32 %v559, 7
    %v561 = vsub.s32 %v558, %v560
    %v562 = vrot.slane %v554, %v561
    %v564 = vunpack.c.l.s4 1983009808
    %v565 = vunpack.c.0.s8 %v564
    %v566 = vlaneseq
    %v567 = vshrl.u32 %v566, 7
    %v568 = vsub.s32 %v565, %v567
    %v569 = vrot.slane %v555, %v568
    %v570 = vcombine.low %v562, %v569
    %vm575 = vcmask 130048
    %v576 = vsel %vm575, %v519, 0.0
    %v577 = vsel %vm575, %v536, 0.0
    %v578 = vadd.f32 %v576, %v577
    %v579 = vsel %vm575, %v553, 0.0
    %v580 = vadd.f32 %v578, %v579
    %v581 = vsel %vm575, %v570, 0.0
    %v582 = vadd.f32 %v580, %v581
    %v583 = vrot.slane %v582, 4
    %v584 = vadd.f32 %v582, %v583
    %v585 = vrot.slane %v584, 2
    %v586 = vadd.f32 %v584, %v585
    %v587 = vrot.slane %v586, 1
    %v588 = vadd.f32 %v586, %v587
    %v589 = vrcp.pop 32.0
    %v590 = vmul.f32 %v588, %v589
    %v592 = vcombine.high %v590, %v590
    %v594 = vunpack.c.l.s4 1983009808
    %v595 = vunpack.c.0.s8 %v594
    %v596 = vlaneseq
    %v597 = vshrl.u32 %v596, 7
    %v598 = vsub.s32 %v595, %v597
    %v599 = vrot.slane %v590, %v598
    %v601 = vunpack.c.l.s4 1983009808
    %v602 = vunpack.c.0.s8 %v601
    %v603 = vlaneseq
    %v604 = vshrl.u32 %v603, 7
    %v605 = vsub.s32 %v602, %v604
    %v606 = vrot.slane %v592, %v605
    %v607 = vcombine.high %v599, %v599
    %v608 = vcombine.high %v606, %v606
    %v613 = vsub.f32 %v471, %v599
    %v614 = vsub.f32 %v472, %v607
    %v615 = vsub.f32 %v473, %v606
    %v616 = vsub.f32 %v474, %v608
    %v617 = vsub.f32 %v475, %v599
    %v618 = vsub.f32 %v476, %v607
    %v619 = vsub.f32 %v477, %v606
    %v620 = vsub.f32 %v478, %v608
    %v621 = vsub.f32 %v479, %v599
    %v622 = vsub.f32 %v480, %v607
    %v623 = vsub.f32 %v481, %v606
    %v624 = vsub.f32 %v482, %v608
    %v625 = vsub.f32 %v483, %v599
    %v626 = vsub.f32 %v484, %v607
    %v627 = vsub.f32 %v485, %v606
    %v628 = vsub.f32 %v486, %v608
    %v629 = vmul.f32 %v613, %v613
    %v630 = vmul.f32 %v614, %v614
    %v631 = vmul.f32 %v615, %v615
    %v632 = vmul.f32 %v616, %v616
    %v633 = vmul.f32 %v617, %v617
    %v634 = vmul.f32 %v618, %v618
    %v635 = vmul.f32 %v619, %v619
    %v636 = vmul.f32 %v620, %v620
    %v637 = vmul.f32 %v621, %v621
    %v638 = vmul.f32 %v622, %v622
    %v639 = vmul.f32 %v623, %v623
    %v640 = vmul.f32 %v624, %v624
    %v641 = vmul.f32 %v625, %v625
    %v642 = vmul.f32 %v626, %v626
    %v643 = vmul.f32 %v627, %v627
    %v644 = vmul.f32 %v628, %v628
    %v661 = vcombine.low %v629, %v630
    %v662 = vcombine.low %v631, %v632
    %v664 = vunpack.c.l.s4 1983009808
    %v665 = vunpack.c.0.s8 %v664
    %v666 = vlaneseq
    %v667 = vshrl.u32 %v666, 7
    %v668 = vsub.s32 %v665, %v667
    %v669 = vrot.slane %v661, %v668
    %v671 = vunpack.c.l.s4 1983009808
    %v672 = vunpack.c.0.s8 %v671
    %v673 = vlaneseq
    %v674 = vshrl.u32 %v673, 7
    %v675 = vsub.s32 %v672, %v674
    %v676 = vrot.slane %v662, %v675
    %v677 = vcombine.low %v669, %v676
    %v678 = vcombine.low %v633, %v634
    %v679 = vcombine.low %v635, %v636
    %v681 = vunpack.c.l.s4 1983009808
    %v682 = vunpack.c.0.s8 %v681
    %v683 = vlaneseq
    %v684 = vshrl.u32 %v683, 7
    %v685 = vsub.s32 %v682, %v684
    %v686 = vrot.slane %v678, %v685
    %v688 = vunpack.c.l.s4 1983009808
    %v689 = vunpack.c.0.s8 %v688
    %v690 = vlaneseq
    %v691 = vshrl.u32 %v690, 7
    %v692 = vsub.s32 %v689, %v691
    %v693 = vrot.slane %v679, %v692
    %v694 = vcombine.low %v686, %v693
    %v695 = vcombine.low %v637, %v638
    %v696 = vcombine.low %v639, %v640
    %v698 = vunpack.c.l.s4 1983009808
    %v699 = vunpack.c.0.s8 %v698
    %v700 = vlaneseq
    %v701 = vshrl.u32 %v700, 7
    %v702 = vsub.s32 %v699, %v701
    %v703 = vrot.slane %v695, %v702
    %v705 = vunpack.c.l.s4 1983009808
    %v706 = vunpack.c.0.s8 %v705
    %v707 = vlaneseq
    %v708 = vshrl.u32 %v707, 7
    %v709 = vsub.s32 %v706, %v708
    %v710 = vrot.slane %v696, %v709
    %v711 = vcombine.low %v703, %v710
    %v712 = vcombine.low %v641, %v642
    %v713 = vcombine.low %v643, %v644
    %v715 = vunpack.c.l.s4 1983009808
    %v716 = vunpack.c.0.s8 %v715
    %v717 = vlaneseq
    %v718 = vshrl.u32 %v717, 7
    %v719 = vsub.s32 %v716, %v718
    %v720 = vrot.slane %v712, %v719
    %v722 = vunpack.c.l.s4 1983009808
    %v723 = vunpack.c.0.s8 %v722
    %v724 = vlaneseq
    %v725 = vshrl.u32 %v724, 7
    %v726 = vsub.s32 %v723, %v725
    %v727 = vrot.slane %v713, %v726
    %v728 = vcombine.low %v720, %v727
    %v733 = vsel %vm575, %v677, 0.0
    %v734 = vsel %vm575, %v694, 0.0
    %v735 = vadd.f32 %v733, %v734
    %v736 = vsel %vm575, %v711, 0.0
    %v737 = vadd.f32 %v735, %v736
    %v738 = vsel %vm575, %v728, 0.0
    %v739 = vadd.f32 %v737, %v738
    %v740 = vrot.slane %v739, 4
    %v741 = vadd.f32 %v739, %v740
    %v742 = vrot.slane %v741, 2
    %v743 = vadd.f32 %v741, %v742
    %v744 = vrot.slane %v743, 1
    %v745 = vadd.f32 %v743, %v744
    %v746 = vmul.f32 %v745, %v589
    %v747 = vadd.f32 %v746, 1e-05
    %v748 = vrsqrt.pop %v747
    %v750 = vcombine.high %v748, %v748
    %v752 = vunpack.c.l.s4 1983009808
    %v753 = vunpack.c.0.s8 %v752
    %v754 = vlaneseq
    %v755 = vshrl.u32 %v754, 7
    %v756 = vsub.s32 %v753, %v755
    %v757 = vrot.slane %v748, %v756
    %v759 = vunpack.c.l.s4 1983009808
    %v760 = vunpack.c.0.s8 %v759
    %v761 = vlaneseq
    %v762 = vshrl.u32 %v761, 7
    %v763 = vsub.s32 %v760, %v762
    %v764 = vrot.slane %v750, %v763
    %v765 = vcombine.high %v757, %v757
    %v766 = vcombine.high %v764, %v764
    %v771 = vmul.f32 %v613, %v757
    %v772 = vmul.f32 %v614, %v765
    %v773 = vmul.f32 %v615, %v764
    %v774 = vmul.f32 %v616, %v766
    %v775 = vmul.f32 %v617, %v757
    %v776 = vmul.f32 %v618, %v765
    %v777 = vmul.f32 %v619, %v764
    %v778 = vmul.f32 %v620, %v766
    %v779 = vmul.f32 %v621, %v757
    %v780 = vmul.f32 %v622, %v765
    %v781 = vmul.f32 %v623, %v764
    %v782 = vmul.f32 %v624, %v766
    %v783 = vmul.f32 %v625, %v757
    %v784 = vmul.f32 %v626, %v765
    %v785 = vmul.f32 %v627, %v764
    %v786 = vmul.f32 %v628, %v766
    %v788 = vlaneseq
    %v789 = vshrl.u32 %v788, 7
    %v790 = vsub.s32 0, %v789
    %v791 = vrot.slane %v112, %v790
    %v792 = vcombine.high %v791, %v791
    %v794 = vunpack.c.l.s4 1983009808
    %v795 = vunpack.c.0.s8 %v794
    %v796 = vlaneseq
    %v797 = vshrl.u32 %v796, 7
    %v798 = vsub.s32 %v795, %v797
    %v799 = vrot.slane %v791, %v798
    %v801 = vunpack.c.l.s4 1983009808
    %v802 = vunpack.c.0.s8 %v801
    %v803 = vlaneseq
    %v804 = vshrl.u32 %v803, 7
    %v805 = vsub.s32 %v802, %v804
    %v806 = vrot.slane %v792, %v805
    %v807 = vcombine.high %v799, %v799
    %v808 = vcombine.high %v806, %v806
    %v813 = vmul.f32 %v771, %v799
    %v814 = vmul.f32 %v772, %v807
    %v815 = vmul.f32 %v773, %v806
    %v816 = vmul.f32 %v774, %v808
    %v817 = vmul.f32 %v775, %v799
    %v818 = vmul.f32 %v776, %v807
    %v819 = vmul.f32 %v777, %v806
    %v820 = vmul.f32 %v778, %v808
    %v821 = vmul.f32 %v779, %v799
    %v822 = vmul.f32 %v780, %v807
    %v823 = vmul.f32 %v781, %v806
    %v824 = vmul.f32 %v782, %v808
    %v825 = vmul.f32 %v783, %v799
    %v826 = vmul.f32 %v784, %v807
    %v827 = vmul.f32 %v785, %v806
    %v828 = vmul.f32 %v786, %v808
    %v830 = vlaneseq
    %v831 = vshrl.u32 %v830, 7
    %v832 = vsub.s32 0, %v831
    %v833 = vrot.slane %v113, %v832
    %v834 = vcombine.high %v833, %v833
    %v836 = vunpack.c.l.s4 1983009808
    %v837 = vunpack.c.0.s8 %v836
    %v838 = vlaneseq
    %v839 = vshrl.u32 %v838, 7
    %v840 = vsub.s32 %v837, %v839
    %v841 = vrot.slane %v833, %v840
    %v843 = vunpack.c.l.s4 1983009808
    %v844 = vunpack.c.0.s8 %v843
    %v845 = vlaneseq
    %v846 = vshrl.u32 %v845, 7
    %v847 = vsub.s32 %v844, %v846
    %v848 = vrot.slane %v834, %v847
    %v849 = vcombine.high %v841, %v841
    %v850 = vcombine.high %v848, %v848
    %v855 = vadd.f32 %v813, %v841
    %v856 = vadd.f32 %v814, %v849
    %v857 = vadd.f32 %v815, %v848
    %v858 = vadd.f32 %v816, %v850
    %v859 = vadd.f32 %v817, %v841
    %v860 = vadd.f32 %v818, %v849
    %v861 = vadd.f32 %v819, %v848
    %v862 = vadd.f32 %v820, %v850
    %v863 = vadd.f32 %v821, %v841
    %v864 = vadd.f32 %v822, %v849
    %v865 = vadd.f32 %v823, %v848
    %v866 = vadd.f32 %v824, %v850
    %v867 = vadd.f32 %v825, %v841
    %v868 = vadd.f32 %v826, %v849
    %v869 = vadd.f32 %v827, %v848
    %v870 = vadd.f32 %v828, %v850
    %v871 = vmax.f32 %v855, 0.0
    %v872 = vmax.f32 %v856, 0.0
    %v873 = vmax.f32 %v857, 0.0
    %v874 = vmax.f32 %v858, 0.0
    %v875 = vmax.f32 %v859, 0.0
    %v876 = vmax.f32 %v860, 0.0
    %v877 = vmax.f32 %v861, 0.0
    %v878 = vmax.f32 %v862, 0.0
    %v879 = vmax.f32 %v863, 0.0
    %v880 = vmax.f32 %v864, 0.0
    %v881 = vmax.f32 %v865, 0.0
    %v882 = vmax.f32 %v866, 0.0
    %v883 = vmax.f32 %v867, 0.0
    %v884 = vmax.f32 %v868, 0.0
    %v885 = vmax.f32 %v869, 0.0
    %v886 = vmax.f32 %v870, 0.0
    %v887 = vld [vmem:[#allocation8] sm:$0xff]
    %v888 = vld [vmem:[#allocation8 + $0x8] sm:$0xff]
    %v889 = vld [vmem:[#allocation8 + $0x10] sm:$0xff]
    %v890 = vld [vmem:[#allocation8 + $0x18] sm:$0xff]
    %v891 = vld [vmem:[#allocation8 + $0x20] sm:$0xff]
    %v892 = vld [vmem:[#allocation8 + $0x28] sm:$0xff]
    %v893 = vld [vmem:[%s5] sm:$0x1]
    %v894 = vld [vmem:[%s6] sm:$0x1]
    %v911 = vcombine.low %v871, %v872
    %v912 = vcombine.low %v873, %v874
    %v914 = vunpack.c.l.s4 1983009808
    %v915 = vunpack.c.0.s8 %v914
    %v916 = vlaneseq
    %v917 = vshrl.u32 %v916, 7
    %v918 = vsub.s32 %v915, %v917
    %v919 = vrot.slane %v911, %v918
    %v921 = vunpack.c.l.s4 1983009808
    %v922 = vunpack.c.0.s8 %v921
    %v923 = vlaneseq
    %v924 = vshrl.u32 %v923, 7
    %v925 = vsub.s32 %v922, %v924
    %v926 = vrot.slane %v912, %v925
    %v927 = vcombine.low %v919, %v926
    %v928 = vcombine.low %v875, %v876
    %v929 = vcombine.low %v877, %v878
    %v931 = vunpack.c.l.s4 1983009808
    %v932 = vunpack.c.0.s8 %v931
    %v933 = vlaneseq
    %v934 = vshrl.u32 %v933, 7
    %v935 = vsub.s32 %v932, %v934
    %v936 = vrot.slane %v928, %v935
    %v938 = vunpack.c.l.s4 1983009808
    %v939 = vunpack.c.0.s8 %v938
    %v940 = vlaneseq
    %v941 = vshrl.u32 %v940, 7
    %v942 = vsub.s32 %v939, %v941
    %v943 = vrot.slane %v929, %v942
    %v944 = vcombine.low %v936, %v943
    %v945 = vcombine.low %v879, %v880
    %v946 = vcombine.low %v881, %v882
    %v948 = vunpack.c.l.s4 1983009808
    %v949 = vunpack.c.0.s8 %v948
    %v950 = vlaneseq
    %v951 = vshrl.u32 %v950, 7
    %v952 = vsub.s32 %v949, %v951
    %v953 = vrot.slane %v945, %v952
    %v955 = vunpack.c.l.s4 1983009808
    %v956 = vunpack.c.0.s8 %v955
    %v957 = vlaneseq
    %v958 = vshrl.u32 %v957, 7
    %v959 = vsub.s32 %v956, %v958
    %v960 = vrot.slane %v946, %v959
    %v961 = vcombine.low %v953, %v960
    %v962 = vcombine.low %v883, %v884
    %v963 = vcombine.low %v885, %v886
    %v965 = vunpack.c.l.s4 1983009808
    %v966 = vunpack.c.0.s8 %v965
    %v967 = vlaneseq
    %v968 = vshrl.u32 %v967, 7
    %v969 = vsub.s32 %v966, %v968
    %v970 = vrot.slane %v962, %v969
    %v972 = vunpack.c.l.s4 1983009808
    %v973 = vunpack.c.0.s8 %v972
    %v974 = vlaneseq
    %v975 = vshrl.u32 %v974, 7
    %v976 = vsub.s32 %v973, %v975
    %v977 = vrot.slane %v963, %v976
    %v978 = vcombine.low %v970, %v977
    %v979 = vrot.slane %v927, 7
    %v980 = vrot.slane %v944, 7
    %v981 = vsel %vm120, %v979, %v980
    %v982 = vrot.slane %v961, 7
    %v983 = vrot.slane %v978, 7
    %v984 = vsel %vm120, %v982, %v983
    %v991 = vsel %vm120, 0.0, %v979
    %v992 = vsel %vm120, 0.0, %v982
    %v993 = vsel %vm120, %v980, 0.0
    %v994 = vsel %vm120, %v983, 0.0
    %v999 = vrot.slane %v991, 1
    %v1000 = vrot.slane %v981, 1
    %v1001 = vsel %vm129, %v999, %v1000
    %v1002 = vrot.slane %v993, 1
    %v1003 = vsel %vm129, %v1000, %v1002
    %v1004 = vrot.slane %v992, 1
    %v1005 = vrot.slane %v984, 1
    %v1006 = vsel %vm129, %v1004, %v1005
    %v1007 = vrot.slane %v994, 1
    %v1008 = vsel %vm129, %v1005, %v1007
    %1009 = vrot.lane.b32.xlu0 %v1001, 16
    %v1010 = vpop.permute.xlu0 %1009
    %1011 = vrot.lane.b32.xlu0 %v1003, 16
    %v1012 = vpop.permute.xlu0 %1011
    %1013 = vrot.lane.b32.xlu0 %v1006, 16
    %v1014 = vpop.permute.xlu0 %1013
    %1015 = vrot.lane.b32.xlu0 %v1008, 16
    %v1016 = vpop.permute.xlu0 %1015
    %v1021 = vrot.slane %v991, 2
    %v1022 = vrot.slane %v981, 2
    %v1023 = vsel %vm142, %v1021, %v1022
    %v1024 = vrot.slane %v993, 2
    %v1025 = vsel %vm142, %v1022, %v1024
    %v1026 = vrot.slane %v992, 2
    %v1027 = vrot.slane %v984, 2
    %v1028 = vsel %vm142, %v1026, %v1027
    %v1029 = vrot.slane %v994, 2
    %v1030 = vsel %vm142, %v1027, %v1029
    %1031 = vrot.lane.b32.xlu0 %v1023, 32
    %v1032 = vpop.permute.xlu0 %1031
    %1033 = vrot.lane.b32.xlu0 %v1025, 32
    %v1034 = vpop.permute.xlu0 %1033
    %1035 = vrot.lane.b32.xlu0 %v1028, 32
    %v1036 = vpop.permute.xlu0 %1035
    %1037 = vrot.lane.b32.xlu0 %v1030, 32
    %v1038 = vpop.permute.xlu0 %1037
    %v1043 = vsel %vm575, %v991, %v1010
    %v1044 = vsel %vm575, %v981, %v1012
    %v1045 = vsel %vm575, %v992, %v1014
    %v1046 = vsel %vm575, %v984, %v1016
    %v1047 = vsel %vm155, %v1043, %v1032
    %v1048 = vsel %vm155, %v1044, %v1034
    %v1049 = vsel %vm155, %v1045, %v1036
    %v1050 = vsel %vm155, %v1046, %v1038
    %vm1051 = vcmask 392192
    %v1053 = vsel %vm1051, %v1047, 0
    %v1056 = vsel %vm1051, %v1048, 0
    %v1059 = vsel %vm1051, %v1049, 0
    %v1062 = vsel %vm1051, %v1050, 0
    %1064 = vmatprep.subr.mxu0 0.0
    %1065 = vmatpush1.msra.mxu0 %v887
    %1066 = vmatprep.subr.mxu0 0.0
    %1067 = vmatpush1.msra.mxu0 %v888
    %1068 = vmatprep.subr.mxu0 0.0
    %1069 = vmatpush1.msra.mxu0 %v889
    %1070 = vmatprep.subr.mxu0 0.0
    %1071 = vmatpush1.msra.mxu0 %v890
    %1072 = vmatprep.subr.mxu0 0.0
    %1073 = vmatpush1.msra.mxu0 %v891
    %1074 = vmatprep.subr.mxu0 0.0
    %1075 = vmatpush1.msra.mxu0 %v892
    %1076 = vmatprep.subr.mxu0 0.0
    %1077 = vmatpush1.msra.mxu0 0.0
    %1078 = vmatprep.subr.mxu0 0.0
    %1079 = vmatpush1.msra.mxu0 0.0
    %1080 = vmatprep.subr.mxu0 0.0
    %1081 = vmatpush1.msra.mxu0 0.0
    %1082 = vmatprep.subr.mxu0 0.0
    %1083 = vmatpush1.msra.mxu0 0.0
    %1084 = vmatprep.subr.mxu0 0.0
    %1085 = vmatpush1.msra.mxu0 0.0
    %1086 = vmatprep.subr.mxu0 0.0
    %1087 = vmatpush1.msra.mxu0 0.0
    %1088 = vmatprep.subr.mxu0 0.0
    %1089 = vmatpush1.msra.mxu0 0.0
    %1090 = vmatprep.subr.mxu0 0.0
    %1091 = vmatpush1.msra.mxu0 0.0
    %1092 = vmatprep.subr.mxu0 0.0
    %1093 = vmatpush1.msra.mxu0 0.0
    %1094 = vmatprep.subr.mxu0 0.0
    %1095 = vmatpush1.msra.mxu0 0.0
    %1096 = vmatprep.subr.mxu0 0.0
    %1097 = vmatpush1.msra.mxu0 0.0
    %1098 = vmatprep.subr.mxu0 0.0
    %1099 = vmatpush1.msra.mxu0 0.0
    %1100 = vmatprep.subr.mxu0 0.0
    %1101 = vmatpush1.msra.mxu0 0.0
    %1102 = vmatprep.subr.mxu0 0.0
    %1103 = vmatpush1.msra.mxu0 0.0
    %1104 = vmatprep.subr.mxu0 0.0
    %1105 = vmatpush1.msra.mxu0 0.0
    %1106 = vmatprep.subr.mxu0 0.0
    %1107 = vmatpush1.msra.mxu0 0.0
    %1108 = vmatprep.subr.mxu0 0.0
    %1109 = vmatpush1.msra.mxu0 0.0
    %1110 = vmatprep.subr.mxu0 0.0
    %1111 = vmatpush1.msra.mxu0 0.0
    %1112 = vmatprep.subr.mxu0 0.0
    %1113 = vmatpush1.msra.mxu0 0.0
    %1114 = vmatprep.subr.mxu0 0.0
    %1115 = vmatpush1.msra.mxu0 0.0
    %1116 = vmatprep.subr.mxu0 0.0
    %1117 = vmatpush1.msra.mxu0 0.0
    %1118 = vmatprep.subr.mxu0 0.0
    %1119 = vmatpush1.msra.mxu0 0.0
    %1120 = vmatprep.subr.mxu0 0.0
    %1121 = vmatpush1.msra.mxu0 0.0
    %1122 = vmatprep.subr.mxu0 0.0
    %1123 = vmatpush1.msra.mxu0 0.0
    %1124 = vmatprep.subr.mxu0 0.0
    %1125 = vmatpush1.msra.mxu0 0.0
    %1126 = vmatprep.subr.mxu0 0.0
    %1127 = vmatpush1.msra.mxu0 0.0
    %1128 = vmatprep.mubr.f32.mxu0 0.0
    %1129 = vmatmul.mubr.f32.gmra.mrb[0].mxu0 %v1053
    %v1130 = vpop.f32.mrb[0].mxu0
    %v1131 = vadd.f32 0.0, %v1130
    %v1132 = vpop.f32.mrb[0].mxu0
    %1133 = vmatprep.mubr.f32.mxu0 0.0
    %1134 = vmatmul.mubr.f32.gmra.mrb[0].mxu0 %v1056
    %v1135 = vpop.f32.mrb[0].mxu0
    %v1136 = vadd.f32 0.0, %v1135
    %v1137 = vpop.f32.mrb[0].mxu0
    %1138 = vmatprep.mubr.f32.mxu0 0.0
    %1139 = vmatmul.mubr.f32.gmra.mrb[0].mxu0 %v1059
    %v1140 = vpop.f32.mrb[0].mxu0
    %v1141 = vadd.f32 0.0, %v1140
    %v1142 = vpop.f32.mrb[0].mxu0
    %1143 = vmatprep.mubr.f32.mxu0 0.0
    %1144 = vmatmul.mubr.f32.gmra.mrb[0].mxu0 %v1062
    %v1145 = vpop.f32.mrb[0].mxu0
    %v1146 = vadd.f32 0.0, %v1145
    %v1147 = vpop.f32.mrb[0].mxu0
    %1148 = vdwg.mxu0
    %v1153 = vcombine.high %v1131, %v1131
    %v1155 = vunpack.c.l.s4 1966171168
    %v1156 = vunpack.c.0.s8 %v1155
    %v1157 = vlaneseq
    %v1158 = vshrl.u32 %v1157, 7
    %v1159 = vsub.s32 %v1156, %v1158
    %v1160 = vrot.slane %v1131, %v1159
    %v1162 = vunpack.c.l.s4 1966171168
    %v1163 = vunpack.c.0.s8 %v1162
    %v1164 = vlaneseq
    %v1165 = vshrl.u32 %v1164, 7
    %v1166 = vsub.s32 %v1163, %v1165
    %v1167 = vrot.slane %v1153, %v1166
    %v1168 = vcombine.high %v1160, %v1160
    %v1169 = vcombine.high %v1167, %v1167
    %v1171 = vunpack.c.l.s4 1966171168
    %v1172 = vunpack.c.0.s8 %v1171
    %v1173 = vlaneseq
    %v1174 = vshrl.u32 %v1173, 7
    %v1175 = vsub.s32 %v1172, %v1174
    %v1176 = vrot.slane %v1160, %v1175
    %v1178 = vunpack.c.l.s4 1966171168
    %v1179 = vunpack.c.0.s8 %v1178
    %v1180 = vlaneseq
    %v1181 = vshrl.u32 %v1180, 7
    %v1182 = vsub.s32 %v1179, %v1181
    %v1183 = vrot.slane %v1167, %v1182
    %v1185 = vunpack.c.l.s4 1966171168
    %v1186 = vunpack.c.0.s8 %v1185
    %v1187 = vlaneseq
    %v1188 = vshrl.u32 %v1187, 7
    %v1189 = vsub.s32 %v1186, %v1188
    %v1190 = vrot.slane %v1168, %v1189
    %v1192 = vunpack.c.l.s4 1966171168
    %v1193 = vunpack.c.0.s8 %v1192
    %v1194 = vlaneseq
    %v1195 = vshrl.u32 %v1194, 7
    %v1196 = vsub.s32 %v1193, %v1195
    %v1197 = vrot.slane %v1169, %v1196
    %v1198 = vcombine.high %v1176, %v1176
    %v1199 = vcombine.high %v1183, %v1183
    %v1200 = vcombine.high %v1190, %v1190
    %v1201 = vcombine.high %v1197, %v1197
    %v1202 = vcombine.high %v1136, %v1136
    %v1204 = vunpack.c.l.s4 1966171168
    %v1205 = vunpack.c.0.s8 %v1204
    %v1206 = vlaneseq
    %v1207 = vshrl.u32 %v1206, 7
    %v1208 = vsub.s32 %v1205, %v1207
    %v1209 = vrot.slane %v1136, %v1208
    %v1211 = vunpack.c.l.s4 1966171168
    %v1212 = vunpack.c.0.s8 %v1211
    %v1213 = vlaneseq
    %v1214 = vshrl.u32 %v1213, 7
    %v1215 = vsub.s32 %v1212, %v1214
    %v1216 = vrot.slane %v1202, %v1215
    %v1217 = vcombine.high %v1209, %v1209
    %v1218 = vcombine.high %v1216, %v1216
    %v1220 = vunpack.c.l.s4 1966171168
    %v1221 = vunpack.c.0.s8 %v1220
    %v1222 = vlaneseq
    %v1223 = vshrl.u32 %v1222, 7
    %v1224 = vsub.s32 %v1221, %v1223
    %v1225 = vrot.slane %v1209, %v1224
    %v1227 = vunpack.c.l.s4 1966171168
    %v1228 = vunpack.c.0.s8 %v1227
    %v1229 = vlaneseq
    %v1230 = vshrl.u32 %v1229, 7
    %v1231 = vsub.s32 %v1228, %v1230
    %v1232 = vrot.slane %v1216, %v1231
    %v1234 = vunpack.c.l.s4 1966171168
    %v1235 = vunpack.c.0.s8 %v1234
    %v1236 = vlaneseq
    %v1237 = vshrl.u32 %v1236, 7
    %v1238 = vsub.s32 %v1235, %v1237
    %v1239 = vrot.slane %v1217, %v1238
    %v1241 = vunpack.c.l.s4 1966171168
    %v1242 = vunpack.c.0.s8 %v1241
    %v1243 = vlaneseq
    %v1244 = vshrl.u32 %v1243, 7
    %v1245 = vsub.s32 %v1242, %v1244
    %v1246 = vrot.slane %v1218, %v1245
    %v1247 = vcombine.high %v1225, %v1225
    %v1248 = vcombine.high %v1232, %v1232
    %v1249 = vcombine.high %v1239, %v1239
    %v1250 = vcombine.high %v1246, %v1246
    %v1251 = vcombine.high %v1141, %v1141
    %v1253 = vunpack.c.l.s4 1966171168
    %v1254 = vunpack.c.0.s8 %v1253
    %v1255 = vlaneseq
    %v1256 = vshrl.u32 %v1255, 7
    %v1257 = vsub.s32 %v1254, %v1256
    %v1258 = vrot.slane %v1141, %v1257
    %v1260 = vunpack.c.l.s4 1966171168
    %v1261 = vunpack.c.0.s8 %v1260
    %v1262 = vlaneseq
    %v1263 = vshrl.u32 %v1262, 7
    %v1264 = vsub.s32 %v1261, %v1263
    %v1265 = vrot.slane %v1251, %v1264
    %v1266 = vcombine.high %v1258, %v1258
    %v1267 = vcombine.high %v1265, %v1265
    %v1269 = vunpack.c.l.s4 1966171168
    %v1270 = vunpack.c.0.s8 %v1269
    %v1271 = vlaneseq
    %v1272 = vshrl.u32 %v1271, 7
    %v1273 = vsub.s32 %v1270, %v1272
    %v1274 = vrot.slane %v1258, %v1273
    %v1276 = vunpack.c.l.s4 1966171168
    %v1277 = vunpack.c.0.s8 %v1276
    %v1278 = vlaneseq
    %v1279 = vshrl.u32 %v1278, 7
    %v1280 = vsub.s32 %v1277, %v1279
    %v1281 = vrot.slane %v1265, %v1280
    %v1283 = vunpack.c.l.s4 1966171168
    %v1284 = vunpack.c.0.s8 %v1283
    %v1285 = vlaneseq
    %v1286 = vshrl.u32 %v1285, 7
    %v1287 = vsub.s32 %v1284, %v1286
    %v1288 = vrot.slane %v1266, %v1287
    %v1290 = vunpack.c.l.s4 1966171168
    %v1291 = vunpack.c.0.s8 %v1290
    %v1292 = vlaneseq
    %v1293 = vshrl.u32 %v1292, 7
    %v1294 = vsub.s32 %v1291, %v1293
    %v1295 = vrot.slane %v1267, %v1294
    %v1296 = vcombine.high %v1274, %v1274
    %v1297 = vcombine.high %v1281, %v1281
    %v1298 = vcombine.high %v1288, %v1288
    %v1299 = vcombine.high %v1295, %v1295
    %v1300 = vcombine.high %v1146, %v1146
    %v1302 = vunpack.c.l.s4 1966171168
    %v1303 = vunpack.c.0.s8 %v1302
    %v1304 = vlaneseq
    %v1305 = vshrl.u32 %v1304, 7
    %v1306 = vsub.s32 %v1303, %v1305
    %v1307 = vrot.slane %v1146, %v1306
    %v1309 = vunpack.c.l.s4 1966171168
    %v1310 = vunpack.c.0.s8 %v1309
    %v1311 = vlaneseq
    %v1312 = vshrl.u32 %v1311, 7
    %v1313 = vsub.s32 %v1310, %v1312
    %v1314 = vrot.slane %v1300, %v1313
    %v1315 = vcombine.high %v1307, %v1307
    %v1316 = vcombine.high %v1314, %v1314
    %v1318 = vunpack.c.l.s4 1966171168
    %v1319 = vunpack.c.0.s8 %v1318
    %v1320 = vlaneseq
    %v1321 = vshrl.u32 %v1320, 7
    %v1322 = vsub.s32 %v1319, %v1321
    %v1323 = vrot.slane %v1307, %v1322
    %v1325 = vunpack.c.l.s4 1966171168
    %v1326 = vunpack.c.0.s8 %v1325
    %v1327 = vlaneseq
    %v1328 = vshrl.u32 %v1327, 7
    %v1329 = vsub.s32 %v1326, %v1328
    %v1330 = vrot.slane %v1314, %v1329
    %v1332 = vunpack.c.l.s4 1966171168
    %v1333 = vunpack.c.0.s8 %v1332
    %v1334 = vlaneseq
    %v1335 = vshrl.u32 %v1334, 7
    %v1336 = vsub.s32 %v1333, %v1335
    %v1337 = vrot.slane %v1315, %v1336
    %v1339 = vunpack.c.l.s4 1966171168
    %v1340 = vunpack.c.0.s8 %v1339
    %v1341 = vlaneseq
    %v1342 = vshrl.u32 %v1341, 7
    %v1343 = vsub.s32 %v1340, %v1342
    %v1344 = vrot.slane %v1316, %v1343
    %v1345 = vcombine.high %v1323, %v1323
    %v1346 = vcombine.high %v1330, %v1330
    %v1347 = vcombine.high %v1337, %v1337
    %v1348 = vcombine.high %v1344, %v1344
    %v1381 = vlaneseq
    %v1382 = vshrl.u32 %v1381, 7
    %v1383 = vsub.s32 0, %v1382
    %v1384 = vrot.slane %v1176, %v1383
    %v1385 = vlaneseq
    %v1386 = vshrl.u32 %v1385, 7
    %v1387 = vsub.s32 0, %v1386
    %v1388 = vrot.slane %v1190, %v1387
    %v1389 = vlaneseq
    %v1390 = vshrl.u32 %v1389, 7
    %v1391 = vsub.s32 0, %v1390
    %v1392 = vrot.slane %v1198, %v1391
    %v1393 = vlaneseq
    %v1394 = vshrl.u32 %v1393, 7
    %v1395 = vsub.s32 0, %v1394
    %v1396 = vrot.slane %v1200, %v1395
    %v1397 = vlaneseq
    %v1398 = vshrl.u32 %v1397, 7
    %v1399 = vsub.s32 0, %v1398
    %v1400 = vrot.slane %v1183, %v1399
    %v1401 = vlaneseq
    %v1402 = vshrl.u32 %v1401, 7
    %v1403 = vsub.s32 0, %v1402
    %v1404 = vrot.slane %v1197, %v1403
    %v1405 = vlaneseq
    %v1406 = vshrl.u32 %v1405, 7
    %v1407 = vsub.s32 0, %v1406
    %v1408 = vrot.slane %v1199, %v1407
    %v1409 = vlaneseq
    %v1410 = vshrl.u32 %v1409, 7
    %v1411 = vsub.s32 0, %v1410
    %v1412 = vrot.slane %v1201, %v1411
    %v1413 = vlaneseq
    %v1414 = vshrl.u32 %v1413, 7
    %v1415 = vsub.s32 0, %v1414
    %v1416 = vrot.slane %v1225, %v1415
    %v1417 = vlaneseq
    %v1418 = vshrl.u32 %v1417, 7
    %v1419 = vsub.s32 0, %v1418
    %v1420 = vrot.slane %v1239, %v1419
    %v1421 = vlaneseq
    %v1422 = vshrl.u32 %v1421, 7
    %v1423 = vsub.s32 0, %v1422
    %v1424 = vrot.slane %v1247, %v1423
    %v1425 = vlaneseq
    %v1426 = vshrl.u32 %v1425, 7
    %v1427 = vsub.s32 0, %v1426
    %v1428 = vrot.slane %v1249, %v1427
    %v1429 = vlaneseq
    %v1430 = vshrl.u32 %v1429, 7
    %v1431 = vsub.s32 0, %v1430
    %v1432 = vrot.slane %v1232, %v1431
    %v1433 = vlaneseq
    %v1434 = vshrl.u32 %v1433, 7
    %v1435 = vsub.s32 0, %v1434
    %v1436 = vrot.slane %v1246, %v1435
    %v1437 = vlaneseq
    %v1438 = vshrl.u32 %v1437, 7
    %v1439 = vsub.s32 0, %v1438
    %v1440 = vrot.slane %v1248, %v1439
    %v1441 = vlaneseq
    %v1442 = vshrl.u32 %v1441, 7
    %v1443 = vsub.s32 0, %v1442
    %v1444 = vrot.slane %v1250, %v1443
    %v1445 = vlaneseq
    %v1446 = vshrl.u32 %v1445, 7
    %v1447 = vsub.s32 0, %v1446
    %v1448 = vrot.slane %v1274, %v1447
    %v1449 = vlaneseq
    %v1450 = vshrl.u32 %v1449, 7
    %v1451 = vsub.s32 0, %v1450
    %v1452 = vrot.slane %v1288, %v1451
    %v1453 = vlaneseq
    %v1454 = vshrl.u32 %v1453, 7
    %v1455 = vsub.s32 0, %v1454
    %v1456 = vrot.slane %v1296, %v1455
    %v1457 = vlaneseq
    %v1458 = vshrl.u32 %v1457, 7
    %v1459 = vsub.s32 0, %v1458
    %v1460 = vrot.slane %v1298, %v1459
    %v1461 = vlaneseq
    %v1462 = vshrl.u32 %v1461, 7
    %v1463 = vsub.s32 0, %v1462
    %v1464 = vrot.slane %v1281, %v1463
    %v1465 = vlaneseq
    %v1466 = vshrl.u32 %v1465, 7
    %v1467 = vsub.s32 0, %v1466
    %v1468 = vrot.slane %v1295, %v1467
    %v1469 = vlaneseq
    %v1470 = vshrl.u32 %v1469, 7
    %v1471 = vsub.s32 0, %v1470
    %v1472 = vrot.slane %v1297, %v1471
    %v1473 = vlaneseq
    %v1474 = vshrl.u32 %v1473, 7
    %v1475 = vsub.s32 0, %v1474
    %v1476 = vrot.slane %v1299, %v1475
    %v1477 = vlaneseq
    %v1478 = vshrl.u32 %v1477, 7
    %v1479 = vsub.s32 0, %v1478
    %v1480 = vrot.slane %v1323, %v1479
    %v1481 = vlaneseq
    %v1482 = vshrl.u32 %v1481, 7
    %v1483 = vsub.s32 0, %v1482
    %v1484 = vrot.slane %v1337, %v1483
    %v1485 = vlaneseq
    %v1486 = vshrl.u32 %v1485, 7
    %v1487 = vsub.s32 0, %v1486
    %v1488 = vrot.slane %v1345, %v1487
    %v1489 = vlaneseq
    %v1490 = vshrl.u32 %v1489, 7
    %v1491 = vsub.s32 0, %v1490
    %v1492 = vrot.slane %v1347, %v1491
    %v1493 = vlaneseq
    %v1494 = vshrl.u32 %v1493, 7
    %v1495 = vsub.s32 0, %v1494
    %v1496 = vrot.slane %v1330, %v1495
    %v1497 = vlaneseq
    %v1498 = vshrl.u32 %v1497, 7
    %v1499 = vsub.s32 0, %v1498
    %v1500 = vrot.slane %v1344, %v1499
    %v1501 = vlaneseq
    %v1502 = vshrl.u32 %v1501, 7
    %v1503 = vsub.s32 0, %v1502
    %v1504 = vrot.slane %v1346, %v1503
    %v1505 = vlaneseq
    %v1506 = vshrl.u32 %v1505, 7
    %v1507 = vsub.s32 0, %v1506
    %v1508 = vrot.slane %v1348, %v1507
    %1509 = vrot.lane.b32.xlu0 %v1384, 120
    %v1510 = vpop.permute.xlu0 %1509
    %1511 = vrot.lane.b32.xlu0 %v1388, 120
    %v1512 = vpop.permute.xlu0 %1511
    %1513 = vrot.lane.b32.xlu0 %v1392, 120
    %v1514 = vpop.permute.xlu0 %1513
    %1515 = vrot.lane.b32.xlu0 %v1396, 120
    %v1516 = vpop.permute.xlu0 %1515
    %1517 = vrot.lane.b32.xlu0 %v1400, 120
    %v1518 = vpop.permute.xlu0 %1517
    %1519 = vrot.lane.b32.xlu0 %v1404, 120
    %v1520 = vpop.permute.xlu0 %1519
    %1521 = vrot.lane.b32.xlu0 %v1408, 120
    %v1522 = vpop.permute.xlu0 %1521
    %1523 = vrot.lane.b32.xlu0 %v1412, 120
    %v1524 = vpop.permute.xlu0 %1523
    %1525 = vrot.lane.b32.xlu0 %v1416, 120
    %v1526 = vpop.permute.xlu0 %1525
    %1527 = vrot.lane.b32.xlu0 %v1420, 120
    %v1528 = vpop.permute.xlu0 %1527
    %1529 = vrot.lane.b32.xlu0 %v1424, 120
    %v1530 = vpop.permute.xlu0 %1529
    %1531 = vrot.lane.b32.xlu0 %v1428, 120
    %v1532 = vpop.permute.xlu0 %1531
    %1533 = vrot.lane.b32.xlu0 %v1432, 120
    %v1534 = vpop.permute.xlu0 %1533
    %1535 = vrot.lane.b32.xlu0 %v1436, 120
    %v1536 = vpop.permute.xlu0 %1535
    %1537 = vrot.lane.b32.xlu0 %v1440, 120
    %v1538 = vpop.permute.xlu0 %1537
    %1539 = vrot.lane.b32.xlu0 %v1444, 120
    %v1540 = vpop.permute.xlu0 %1539
    %1541 = vrot.lane.b32.xlu0 %v1448, 120
    %v1542 = vpop.permute.xlu0 %1541
    %1543 = vrot.lane.b32.xlu0 %v1452, 120
    %v1544 = vpop.permute.xlu0 %1543
    %1545 = vrot.lane.b32.xlu0 %v1456, 120
    %v1546 = vpop.permute.xlu0 %1545
    %1547 = vrot.lane.b32.xlu0 %v1460, 120
    %v1548 = vpop.permute.xlu0 %1547
    %1549 = vrot.lane.b32.xlu0 %v1464, 120
    %v1550 = vpop.permute.xlu0 %1549
    %1551 = vrot.lane.b32.xlu0 %v1468, 120
    %v1552 = vpop.permute.xlu0 %1551
    %1553 = vrot.lane.b32.xlu0 %v1472, 120
    %v1554 = vpop.permute.xlu0 %1553
    %1555 = vrot.lane.b32.xlu0 %v1476, 120
    %v1556 = vpop.permute.xlu0 %1555
    %1557 = vrot.lane.b32.xlu0 %v1480, 120
    %v1558 = vpop.permute.xlu0 %1557
    %1559 = vrot.lane.b32.xlu0 %v1484, 120
    %v1560 = vpop.permute.xlu0 %1559
    %1561 = vrot.lane.b32.xlu0 %v1488, 120
    %v1562 = vpop.permute.xlu0 %1561
    %1563 = vrot.lane.b32.xlu0 %v1492, 120
    %v1564 = vpop.permute.xlu0 %1563
    %1565 = vrot.lane.b32.xlu0 %v1496, 120
    %v1566 = vpop.permute.xlu0 %1565
    %1567 = vrot.lane.b32.xlu0 %v1500, 120
    %v1568 = vpop.permute.xlu0 %1567
    %1569 = vrot.lane.b32.xlu0 %v1504, 120
    %v1570 = vpop.permute.xlu0 %1569
    %1571 = vrot.lane.b32.xlu0 %v1508, 120
    %v1572 = vpop.permute.xlu0 %1571
    %v1605 = vsel %vm120, %v1176, %v1510
    %v1606 = vsel %vm120, %v1190, %v1512
    %v1607 = vsel %vm120, %v1198, %v1514
    %v1608 = vsel %vm120, %v1200, %v1516
    %v1609 = vsel %vm120, %v1183, %v1518
    %v1610 = vsel %vm120, %v1197, %v1520
    %v1611 = vsel %vm120, %v1199, %v1522
    %v1612 = vsel %vm120, %v1201, %v1524
    %v1613 = vsel %vm120, %v1225, %v1526
    %v1614 = vsel %vm120, %v1239, %v1528
    %v1615 = vsel %vm120, %v1247, %v1530
    %v1616 = vsel %vm120, %v1249, %v1532
    %v1617 = vsel %vm120, %v1232, %v1534
    %v1618 = vsel %vm120, %v1246, %v1536
    %v1619 = vsel %vm120, %v1248, %v1538
    %v1620 = vsel %vm120, %v1250, %v1540
    %v1621 = vsel %vm120, %v1274, %v1542
    %v1622 = vsel %vm120, %v1288, %v1544
    %v1623 = vsel %vm120, %v1296, %v1546
    %v1624 = vsel %vm120, %v1298, %v1548
    %v1625 = vsel %vm120, %v1281, %v1550
    %v1626 = vsel %vm120, %v1295, %v1552
    %v1627 = vsel %vm120, %v1297, %v1554
    %v1628 = vsel %vm120, %v1299, %v1556
    %v1629 = vsel %vm120, %v1323, %v1558
    %v1630 = vsel %vm120, %v1337, %v1560
    %v1631 = vsel %vm120, %v1345, %v1562
    %v1632 = vsel %vm120, %v1347, %v1564
    %v1633 = vsel %vm120, %v1330, %v1566
    %v1634 = vsel %vm120, %v1344, %v1568
    %v1635 = vsel %vm120, %v1346, %v1570
    %v1636 = vsel %vm120, %v1348, %v1572
    %v1669 = vcombine.low %v1605, %v1606
    %v1670 = vcombine.low %v1607, %v1608
    %v1672 = vunpack.c.l.s4 1983009808
    %v1673 = vunpack.c.0.s8 %v1672
    %v1674 = vlaneseq
    %v1675 = vshrl.u32 %v1674, 7
    %v1676 = vsub.s32 %v1673, %v1675
    %v1677 = vrot.slane %v1669, %v1676
    %v1679 = vunpack.c.l.s4 1983009808
    %v1680 = vunpack.c.0.s8 %v1679
    %v1681 = vlaneseq
    %v1682 = vshrl.u32 %v1681, 7
    %v1683 = vsub.s32 %v1680, %v1682
    %v1684 = vrot.slane %v1670, %v1683
    %v1685 = vcombine.low %v1677, %v1684
    %v1686 = vcombine.low %v1609, %v1610
    %v1687 = vcombine.low %v1611, %v1612
    %v1689 = vunpack.c.l.s4 1983009808
    %v1690 = vunpack.c.0.s8 %v1689
    %v1691 = vlaneseq
    %v1692 = vshrl.u32 %v1691, 7
    %v1693 = vsub.s32 %v1690, %v1692
    %v1694 = vrot.slane %v1686, %v1693
    %v1696 = vunpack.c.l.s4 1983009808
    %v1697 = vunpack.c.0.s8 %v1696
    %v1698 = vlaneseq
    %v1699 = vshrl.u32 %v1698, 7
    %v1700 = vsub.s32 %v1697, %v1699
    %v1701 = vrot.slane %v1687, %v1700
    %v1702 = vcombine.low %v1694, %v1701
    %v1703 = vcombine.low %v1613, %v1614
    %v1704 = vcombine.low %v1615, %v1616
    %v1706 = vunpack.c.l.s4 1983009808
    %v1707 = vunpack.c.0.s8 %v1706
    %v1708 = vlaneseq
    %v1709 = vshrl.u32 %v1708, 7
    %v1710 = vsub.s32 %v1707, %v1709
    %v1711 = vrot.slane %v1703, %v1710
    %v1713 = vunpack.c.l.s4 1983009808
    %v1714 = vunpack.c.0.s8 %v1713
    %v1715 = vlaneseq
    %v1716 = vshrl.u32 %v1715, 7
    %v1717 = vsub.s32 %v1714, %v1716
    %v1718 = vrot.slane %v1704, %v1717
    %v1719 = vcombine.low %v1711, %v1718
    %v1720 = vcombine.low %v1617, %v1618
    %v1721 = vcombine.low %v1619, %v1620
    %v1723 = vunpack.c.l.s4 1983009808
    %v1724 = vunpack.c.0.s8 %v1723
    %v1725 = vlaneseq
    %v1726 = vshrl.u32 %v1725, 7
    %v1727 = vsub.s32 %v1724, %v1726
    %v1728 = vrot.slane %v1720, %v1727
    %v1730 = vunpack.c.l.s4 1983009808
    %v1731 = vunpack.c.0.s8 %v1730
    %v1732 = vlaneseq
    %v1733 = vshrl.u32 %v1732, 7
    %v1734 = vsub.s32 %v1731, %v1733
    %v1735 = vrot.slane %v1721, %v1734
    %v1736 = vcombine.low %v1728, %v1735
    %v1737 = vcombine.low %v1621, %v1622
    %v1738 = vcombine.low %v1623, %v1624
    %v1740 = vunpack.c.l.s4 1983009808
    %v1741 = vunpack.c.0.s8 %v1740
    %v1742 = vlaneseq
    %v1743 = vshrl.u32 %v1742, 7
    %v1744 = vsub.s32 %v1741, %v1743
    %v1745 = vrot.slane %v1737, %v1744
    %v1747 = vunpack.c.l.s4 1983009808
    %v1748 = vunpack.c.0.s8 %v1747
    %v1749 = vlaneseq
    %v1750 = vshrl.u32 %v1749, 7
    %v1751 = vsub.s32 %v1748, %v1750
    %v1752 = vrot.slane %v1738, %v1751
    %v1753 = vcombine.low %v1745, %v1752
    %v1754 = vcombine.low %v1625, %v1626
    %v1755 = vcombine.low %v1627, %v1628
    %v1757 = vunpack.c.l.s4 1983009808
    %v1758 = vunpack.c.0.s8 %v1757
    %v1759 = vlaneseq
    %v1760 = vshrl.u32 %v1759, 7
    %v1761 = vsub.s32 %v1758, %v1760
    %v1762 = vrot.slane %v1754, %v1761
    %v1764 = vunpack.c.l.s4 1983009808
    %v1765 = vunpack.c.0.s8 %v1764
    %v1766 = vlaneseq
    %v1767 = vshrl.u32 %v1766, 7
    %v1768 = vsub.s32 %v1765, %v1767
    %v1769 = vrot.slane %v1755, %v1768
    %v1770 = vcombine.low %v1762, %v1769
    %v1771 = vcombine.low %v1629, %v1630
    %v1772 = vcombine.low %v1631, %v1632
    %v1774 = vunpack.c.l.s4 1983009808
    %v1775 = vunpack.c.0.s8 %v1774
    %v1776 = vlaneseq
    %v1777 = vshrl.u32 %v1776, 7
    %v1778 = vsub.s32 %v1775, %v1777
    %v1779 = vrot.slane %v1771, %v1778
    %v1781 = vunpack.c.l.s4 1983009808
    %v1782 = vunpack.c.0.s8 %v1781
    %v1783 = vlaneseq
    %v1784 = vshrl.u32 %v1783, 7
    %v1785 = vsub.s32 %v1782, %v1784
    %v1786 = vrot.slane %v1772, %v1785
    %v1787 = vcombine.low %v1779, %v1786
    %v1788 = vcombine.low %v1633, %v1634
    %v1789 = vcombine.low %v1635, %v1636
    %v1791 = vunpack.c.l.s4 1983009808
    %v1792 = vunpack.c.0.s8 %v1791
    %v1793 = vlaneseq
    %v1794 = vshrl.u32 %v1793, 7
    %v1795 = vsub.s32 %v1792, %v1794
    %v1796 = vrot.slane %v1788, %v1795
    %v1798 = vunpack.c.l.s4 1983009808
    %v1799 = vunpack.c.0.s8 %v1798
    %v1800 = vlaneseq
    %v1801 = vshrl.u32 %v1800, 7
    %v1802 = vsub.s32 %v1799, %v1801
    %v1803 = vrot.slane %v1789, %v1802
    %v1804 = vcombine.low %v1796, %v1803
    %vm1813 = vcmask 64512
    %v1814 = vsel %vm1813, %v1685, 0.0
    %v1815 = vsel %vm1813, %v1702, 0.0
    %v1816 = vadd.f32 %v1814, %v1815
    %v1817 = vsel %vm1813, %v1719, 0.0
    %v1818 = vadd.f32 %v1816, %v1817
    %v1819 = vsel %vm1813, %v1736, 0.0
    %v1820 = vadd.f32 %v1818, %v1819
    %v1821 = vsel %vm1813, %v1753, 0.0
    %v1822 = vadd.f32 %v1820, %v1821
    %v1823 = vsel %vm1813, %v1770, 0.0
    %v1824 = vadd.f32 %v1822, %v1823
    %v1825 = vsel %vm1813, %v1787, 0.0
    %v1826 = vadd.f32 %v1824, %v1825
    %v1827 = vsel %vm1813, %v1804, 0.0
    %v1828 = vadd.f32 %v1826, %v1827
    %v1829 = vrot.slane %v1828, 4
    %v1830 = vadd.f32 %v1828, %v1829
    %v1831 = vrot.slane %v1830, 2
    %v1832 = vadd.f32 %v1830, %v1831
    %v1833 = vrot.slane %v1832, 1
    %v1834 = vadd.f32 %v1832, %v1833
    %v1835 = vrcp.pop 64.0
    %v1836 = vmul.f32 %v1834, %v1835
    %v1838 = vcombine.high %v1836, %v1836
    %v1840 = vunpack.c.l.s4 1983009808
    %v1841 = vunpack.c.0.s8 %v1840
    %v1842 = vlaneseq
    %v1843 = vshrl.u32 %v1842, 7
    %v1844 = vsub.s32 %v1841, %v1843
    %v1845 = vrot.slane %v1836, %v1844
    %v1847 = vunpack.c.l.s4 1983009808
    %v1848 = vunpack.c.0.s8 %v1847
    %v1849 = vlaneseq
    %v1850 = vshrl.u32 %v1849, 7
    %v1851 = vsub.s32 %v1848, %v1850
    %v1852 = vrot.slane %v1838, %v1851
    %v1853 = vcombine.high %v1845, %v1845
    %v1854 = vcombine.high %v1852, %v1852
    %v1859 = vsub.f32 %v1605, %v1845
    %v1860 = vsub.f32 %v1606, %v1853
    %v1861 = vsub.f32 %v1607, %v1852
    %v1862 = vsub.f32 %v1608, %v1854
    %v1863 = vsub.f32 %v1609, %v1845
    %v1864 = vsub.f32 %v1610, %v1853
    %v1865 = vsub.f32 %v1611, %v1852
    %v1866 = vsub.f32 %v1612, %v1854
    %v1867 = vsub.f32 %v1613, %v1845
    %v1868 = vsub.f32 %v1614, %v1853
    %v1869 = vsub.f32 %v1615, %v1852
    %v1870 = vsub.f32 %v1616, %v1854
    %v1871 = vsub.f32 %v1617, %v1845
    %v1872 = vsub.f32 %v1618, %v1853
    %v1873 = vsub.f32 %v1619, %v1852
    %v1874 = vsub.f32 %v1620, %v1854
    %v1875 = vsub.f32 %v1621, %v1845
    %v1876 = vsub.f32 %v1622, %v1853
    %v1877 = vsub.f32 %v1623, %v1852
    %v1878 = vsub.f32 %v1624, %v1854
    %v1879 = vsub.f32 %v1625, %v1845
    %v1880 = vsub.f32 %v1626, %v1853
    %v1881 = vsub.f32 %v1627, %v1852
    %v1882 = vsub.f32 %v1628, %v1854
    %v1883 = vsub.f32 %v1629, %v1845
    %v1884 = vsub.f32 %v1630, %v1853
    %v1885 = vsub.f32 %v1631, %v1852
    %v1886 = vsub.f32 %v1632, %v1854
    %v1887 = vsub.f32 %v1633, %v1845
    %v1888 = vsub.f32 %v1634, %v1853
    %v1889 = vsub.f32 %v1635, %v1852
    %v1890 = vsub.f32 %v1636, %v1854
    %v1891 = vmul.f32 %v1859, %v1859
    %v1892 = vmul.f32 %v1860, %v1860
    %v1893 = vmul.f32 %v1861, %v1861
    %v1894 = vmul.f32 %v1862, %v1862
    %v1895 = vmul.f32 %v1863, %v1863
    %v1896 = vmul.f32 %v1864, %v1864
    %v1897 = vmul.f32 %v1865, %v1865
    %v1898 = vmul.f32 %v1866, %v1866
    %v1899 = vmul.f32 %v1867, %v1867
    %v1900 = vmul.f32 %v1868, %v1868
    %v1901 = vmul.f32 %v1869, %v1869
    %v1902 = vmul.f32 %v1870, %v1870
    %v1903 = vmul.f32 %v1871, %v1871
    %v1904 = vmul.f32 %v1872, %v1872
    %v1905 = vmul.f32 %v1873, %v1873
    %v1906 = vmul.f32 %v1874, %v1874
    %v1907 = vmul.f32 %v1875, %v1875
    %v1908 = vmul.f32 %v1876, %v1876
    %v1909 = vmul.f32 %v1877, %v1877
    %v1910 = vmul.f32 %v1878, %v1878
    %v1911 = vmul.f32 %v1879, %v1879
    %v1912 = vmul.f32 %v1880, %v1880
    %v1913 = vmul.f32 %v1881, %v1881
    %v1914 = vmul.f32 %v1882, %v1882
    %v1915 = vmul.f32 %v1883, %v1883
    %v1916 = vmul.f32 %v1884, %v1884
    %v1917 = vmul.f32 %v1885, %v1885
    %v1918 = vmul.f32 %v1886, %v1886
    %v1919 = vmul.f32 %v1887, %v1887
    %v1920 = vmul.f32 %v1888, %v1888
    %v1921 = vmul.f32 %v1889, %v1889
    %v1922 = vmul.f32 %v1890, %v1890
    %v1955 = vcombine.low %v1891, %v1892
    %v1956 = vcombine.low %v1893, %v1894
    %v1958 = vunpack.c.l.s4 1983009808
    %v1959 = vunpack.c.0.s8 %v1958
    %v1960 = vlaneseq
    %v1961 = vshrl.u32 %v1960, 7
    %v1962 = vsub.s32 %v1959, %v1961
    %v1963 = vrot.slane %v1955, %v1962
    %v1965 = vunpack.c.l.s4 1983009808
    %v1966 = vunpack.c.0.s8 %v1965
    %v1967 = vlaneseq
    %v1968 = vshrl.u32 %v1967, 7
    %v1969 = vsub.s32 %v1966, %v1968
    %v1970 = vrot.slane %v1956, %v1969
    %v1971 = vcombine.low %v1963, %v1970
    %v1972 = vcombine.low %v1895, %v1896
    %v1973 = vcombine.low %v1897, %v1898
    %v1975 = vunpack.c.l.s4 1983009808
    %v1976 = vunpack.c.0.s8 %v1975
    %v1977 = vlaneseq
    %v1978 = vshrl.u32 %v1977, 7
    %v1979 = vsub.s32 %v1976, %v1978
    %v1980 = vrot.slane %v1972, %v1979
    %v1982 = vunpack.c.l.s4 1983009808
    %v1983 = vunpack.c.0.s8 %v1982
    %v1984 = vlaneseq
    %v1985 = vshrl.u32 %v1984, 7
    %v1986 = vsub.s32 %v1983, %v1985
    %v1987 = vrot.slane %v1973, %v1986
    %v1988 = vcombine.low %v1980, %v1987
    %v1989 = vcombine.low %v1899, %v1900
    %v1990 = vcombine.low %v1901, %v1902
    %v1992 = vunpack.c.l.s4 1983009808
    %v1993 = vunpack.c.0.s8 %v1992
    %v1994 = vlaneseq
    %v1995 = vshrl.u32 %v1994, 7
    %v1996 = vsub.s32 %v1993, %v1995
    %v1997 = vrot.slane %v1989, %v1996
    %v1999 = vunpack.c.l.s4 1983009808
    %v2000 = vunpack.c.0.s8 %v1999
    %v2001 = vlaneseq
    %v2002 = vshrl.u32 %v2001, 7
    %v2003 = vsub.s32 %v2000, %v2002
    %v2004 = vrot.slane %v1990, %v2003
    %v2005 = vcombine.low %v1997, %v2004
    %v2006 = vcombine.low %v1903, %v1904
    %v2007 = vcombine.low %v1905, %v1906
    %v2009 = vunpack.c.l.s4 1983009808
    %v2010 = vunpack.c.0.s8 %v2009
    %v2011 = vlaneseq
    %v2012 = vshrl.u32 %v2011, 7
    %v2013 = vsub.s32 %v2010, %v2012
    %v2014 = vrot.slane %v2006, %v2013
    %v2016 = vunpack.c.l.s4 1983009808
    %v2017 = vunpack.c.0.s8 %v2016
    %v2018 = vlaneseq
    %v2019 = vshrl.u32 %v2018, 7
    %v2020 = vsub.s32 %v2017, %v2019
    %v2021 = vrot.slane %v2007, %v2020
    %v2022 = vcombine.low %v2014, %v2021
    %v2023 = vcombine.low %v1907, %v1908
    %v2024 = vcombine.low %v1909, %v1910
    %v2026 = vunpack.c.l.s4 1983009808
    %v2027 = vunpack.c.0.s8 %v2026
    %v2028 = vlaneseq
    %v2029 = vshrl.u32 %v2028, 7
    %v2030 = vsub.s32 %v2027, %v2029
    %v2031 = vrot.slane %v2023, %v2030
    %v2033 = vunpack.c.l.s4 1983009808
    %v2034 = vunpack.c.0.s8 %v2033
    %v2035 = vlaneseq
    %v2036 = vshrl.u32 %v2035, 7
    %v2037 = vsub.s32 %v2034, %v2036
    %v2038 = vrot.slane %v2024, %v2037
    %v2039 = vcombine.low %v2031, %v2038
    %v2040 = vcombine.low %v1911, %v1912
    %v2041 = vcombine.low %v1913, %v1914
    %v2043 = vunpack.c.l.s4 1983009808
    %v2044 = vunpack.c.0.s8 %v2043
    %v2045 = vlaneseq
    %v2046 = vshrl.u32 %v2045, 7
    %v2047 = vsub.s32 %v2044, %v2046
    %v2048 = vrot.slane %v2040, %v2047
    %v2050 = vunpack.c.l.s4 1983009808
    %v2051 = vunpack.c.0.s8 %v2050
    %v2052 = vlaneseq
    %v2053 = vshrl.u32 %v2052, 7
    %v2054 = vsub.s32 %v2051, %v2053
    %v2055 = vrot.slane %v2041, %v2054
    %v2056 = vcombine.low %v2048, %v2055
    %v2057 = vcombine.low %v1915, %v1916
    %v2058 = vcombine.low %v1917, %v1918
    %v2060 = vunpack.c.l.s4 1983009808
    %v2061 = vunpack.c.0.s8 %v2060
    %v2062 = vlaneseq
    %v2063 = vshrl.u32 %v2062, 7
    %v2064 = vsub.s32 %v2061, %v2063
    %v2065 = vrot.slane %v2057, %v2064
    %v2067 = vunpack.c.l.s4 1983009808
    %v2068 = vunpack.c.0.s8 %v2067
    %v2069 = vlaneseq
    %v2070 = vshrl.u32 %v2069, 7
    %v2071 = vsub.s32 %v2068, %v2070
    %v2072 = vrot.slane %v2058, %v2071
    %v2073 = vcombine.low %v2065, %v2072
    %v2074 = vcombine.low %v1919, %v1920
    %v2075 = vcombine.low %v1921, %v1922
    %v2077 = vunpack.c.l.s4 1983009808
    %v2078 = vunpack.c.0.s8 %v2077
    %v2079 = vlaneseq
    %v2080 = vshrl.u32 %v2079, 7
    %v2081 = vsub.s32 %v2078, %v2080
    %v2082 = vrot.slane %v2074, %v2081
    %v2084 = vunpack.c.l.s4 1983009808
    %v2085 = vunpack.c.0.s8 %v2084
    %v2086 = vlaneseq
    %v2087 = vshrl.u32 %v2086, 7
    %v2088 = vsub.s32 %v2085, %v2087
    %v2089 = vrot.slane %v2075, %v2088
    %v2090 = vcombine.low %v2082, %v2089
    %v2099 = vsel %vm1813, %v1971, 0.0
    %v2100 = vsel %vm1813, %v1988, 0.0
    %v2101 = vadd.f32 %v2099, %v2100
    %v2102 = vsel %vm1813, %v2005, 0.0
    %v2103 = vadd.f32 %v2101, %v2102
    %v2104 = vsel %vm1813, %v2022, 0.0
    %v2105 = vadd.f32 %v2103, %v2104
    %v2106 = vsel %vm1813, %v2039, 0.0
    %v2107 = vadd.f32 %v2105, %v2106
    %v2108 = vsel %vm1813, %v2056, 0.0
    %v2109 = vadd.f32 %v2107, %v2108
    %v2110 = vsel %vm1813, %v2073, 0.0
    %v2111 = vadd.f32 %v2109, %v2110
    %v2112 = vsel %vm1813, %v2090, 0.0
    %v2113 = vadd.f32 %v2111, %v2112
    %v2114 = vrot.slane %v2113, 4
    %v2115 = vadd.f32 %v2113, %v2114
    %v2116 = vrot.slane %v2115, 2
    %v2117 = vadd.f32 %v2115, %v2116
    %v2118 = vrot.slane %v2117, 1
    %v2119 = vadd.f32 %v2117, %v2118
    %v2120 = vmul.f32 %v2119, %v1835
    %v2121 = vadd.f32 %v2120, 1e-05
    %v2122 = vrsqrt.pop %v2121
    %v2124 = vcombine.high %v2122, %v2122
    %v2126 = vunpack.c.l.s4 1983009808
    %v2127 = vunpack.c.0.s8 %v2126
    %v2128 = vlaneseq
    %v2129 = vshrl.u32 %v2128, 7
    %v2130 = vsub.s32 %v2127, %v2129
    %v2131 = vrot.slane %v2122, %v2130
    %v2133 = vunpack.c.l.s4 1983009808
    %v2134 = vunpack.c.0.s8 %v2133
    %v2135 = vlaneseq
    %v2136 = vshrl.u32 %v2135, 7
    %v2137 = vsub.s32 %v2134, %v2136
    %v2138 = vrot.slane %v2124, %v2137
    %v2139 = vcombine.high %v2131, %v2131
    %v2140 = vcombine.high %v2138, %v2138
    %v2145 = vmul.f32 %v1859, %v2131
    %v2146 = vmul.f32 %v1860, %v2139
    %v2147 = vmul.f32 %v1861, %v2138
    %v2148 = vmul.f32 %v1862, %v2140
    %v2149 = vmul.f32 %v1863, %v2131
    %v2150 = vmul.f32 %v1864, %v2139
    %v2151 = vmul.f32 %v1865, %v2138
    %v2152 = vmul.f32 %v1866, %v2140
    %v2153 = vmul.f32 %v1867, %v2131
    %v2154 = vmul.f32 %v1868, %v2139
    %v2155 = vmul.f32 %v1869, %v2138
    %v2156 = vmul.f32 %v1870, %v2140
    %v2157 = vmul.f32 %v1871, %v2131
    %v2158 = vmul.f32 %v1872, %v2139
    %v2159 = vmul.f32 %v1873, %v2138
    %v2160 = vmul.f32 %v1874, %v2140
    %v2161 = vmul.f32 %v1875, %v2131
    %v2162 = vmul.f32 %v1876, %v2139
    %v2163 = vmul.f32 %v1877, %v2138
    %v2164 = vmul.f32 %v1878, %v2140
    %v2165 = vmul.f32 %v1879, %v2131
    %v2166 = vmul.f32 %v1880, %v2139
    %v2167 = vmul.f32 %v1881, %v2138
    %v2168 = vmul.f32 %v1882, %v2140
    %v2169 = vmul.f32 %v1883, %v2131
    %v2170 = vmul.f32 %v1884, %v2139
    %v2171 = vmul.f32 %v1885, %v2138
    %v2172 = vmul.f32 %v1886, %v2140
    %v2173 = vmul.f32 %v1887, %v2131
    %v2174 = vmul.f32 %v1888, %v2139
    %v2175 = vmul.f32 %v1889, %v2138
    %v2176 = vmul.f32 %v1890, %v2140
    %v2178 = vlaneseq
    %v2179 = vshrl.u32 %v2178, 7
    %v2180 = vsub.s32 0, %v2179
    %v2181 = vrot.slane %v893, %v2180
    %v2182 = vcombine.high %v2181, %v2181
    %v2184 = vunpack.c.l.s4 1983009808
    %v2185 = vunpack.c.0.s8 %v2184
    %v2186 = vlaneseq
    %v2187 = vshrl.u32 %v2186, 7
    %v2188 = vsub.s32 %v2185, %v2187
    %v2189 = vrot.slane %v2181, %v2188
    %v2191 = vunpack.c.l.s4 1983009808
    %v2192 = vunpack.c.0.s8 %v2191
    %v2193 = vlaneseq
    %v2194 = vshrl.u32 %v2193, 7
    %v2195 = vsub.s32 %v2192, %v2194
    %v2196 = vrot.slane %v2182, %v2195
    %v2197 = vcombine.high %v2189, %v2189
    %v2198 = vcombine.high %v2196, %v2196
    %v2203 = vmul.f32 %v2145, %v2189
    %v2204 = vmul.f32 %v2146, %v2197
    %v2205 = vmul.f32 %v2147, %v2196
    %v2206 = vmul.f32 %v2148, %v2198
    %v2207 = vmul.f32 %v2149, %v2189
    %v2208 = vmul.f32 %v2150, %v2197
    %v2209 = vmul.f32 %v2151, %v2196
    %v2210 = vmul.f32 %v2152, %v2198
    %v2211 = vmul.f32 %v2153, %v2189
    %v2212 = vmul.f32 %v2154, %v2197
    %v2213 = vmul.f32 %v2155, %v2196
    %v2214 = vmul.f32 %v2156, %v2198
    %v2215 = vmul.f32 %v2157, %v2189
    %v2216 = vmul.f32 %v2158, %v2197
    %v2217 = vmul.f32 %v2159, %v2196
    %v2218 = vmul.f32 %v2160, %v2198
    %v2219 = vmul.f32 %v2161, %v2189
    %v2220 = vmul.f32 %v2162, %v2197
    %v2221 = vmul.f32 %v2163, %v2196
    %v2222 = vmul.f32 %v2164, %v2198
    %v2223 = vmul.f32 %v2165, %v2189
    %v2224 = vmul.f32 %v2166, %v2197
    %v2225 = vmul.f32 %v2167, %v2196
    %v2226 = vmul.f32 %v2168, %v2198
    %v2227 = vmul.f32 %v2169, %v2189
    %v2228 = vmul.f32 %v2170, %v2197
    %v2229 = vmul.f32 %v2171, %v2196
    %v2230 = vmul.f32 %v2172, %v2198
    %v2231 = vmul.f32 %v2173, %v2189
    %v2232 = vmul.f32 %v2174, %v2197
    %v2233 = vmul.f32 %v2175, %v2196
    %v2234 = vmul.f32 %v2176, %v2198
    %v2236 = vlaneseq
    %v2237 = vshrl.u32 %v2236, 7
    %v2238 = vsub.s32 0, %v2237
    %v2239 = vrot.slane %v894, %v2238
    %v2240 = vcombine.high %v2239, %v2239
    %v2242 = vunpack.c.l.s4 1983009808
    %v2243 = vunpack.c.0.s8 %v2242
    %v2244 = vlaneseq
    %v2245 = vshrl.u32 %v2244, 7
    %v2246 = vsub.s32 %v2243, %v2245
    %v2247 = vrot.slane %v2239, %v2246
    %v2249 = vunpack.c.l.s4 1983009808
    %v2250 = vunpack.c.0.s8 %v2249
    %v2251 = vlaneseq
    %v2252 = vshrl.u32 %v2251, 7
    %v2253 = vsub.s32 %v2250, %v2252
    %v2254 = vrot.slane %v2240, %v2253
    %v2255 = vcombine.high %v2247, %v2247
    %v2256 = vcombine.high %v2254, %v2254
    %v2261 = vadd.f32 %v2203, %v2247
    %v2262 = vadd.f32 %v2204, %v2255
    %v2263 = vadd.f32 %v2205, %v2254
    %v2264 = vadd.f32 %v2206, %v2256
    %v2265 = vadd.f32 %v2207, %v2247
    %v2266 = vadd.f32 %v2208, %v2255
    %v2267 = vadd.f32 %v2209, %v2254
    %v2268 = vadd.f32 %v2210, %v2256
    %v2269 = vadd.f32 %v2211, %v2247
    %v2270 = vadd.f32 %v2212, %v2255
    %v2271 = vadd.f32 %v2213, %v2254
    %v2272 = vadd.f32 %v2214, %v2256
    %v2273 = vadd.f32 %v2215, %v2247
    %v2274 = vadd.f32 %v2216, %v2255
    %v2275 = vadd.f32 %v2217, %v2254
    %v2276 = vadd.f32 %v2218, %v2256
    %v2277 = vadd.f32 %v2219, %v2247
    %v2278 = vadd.f32 %v2220, %v2255
    %v2279 = vadd.f32 %v2221, %v2254
    %v2280 = vadd.f32 %v2222, %v2256
    %v2281 = vadd.f32 %v2223, %v2247
    %v2282 = vadd.f32 %v2224, %v2255
    %v2283 = vadd.f32 %v2225, %v2254
    %v2284 = vadd.f32 %v2226, %v2256
    %v2285 = vadd.f32 %v2227, %v2247
    %v2286 = vadd.f32 %v2228, %v2255
    %v2287 = vadd.f32 %v2229, %v2254
    %v2288 = vadd.f32 %v2230, %v2256
    %v2289 = vadd.f32 %v2231, %v2247
    %v2290 = vadd.f32 %v2232, %v2255
    %v2291 = vadd.f32 %v2233, %v2254
    %v2292 = vadd.f32 %v2234, %v2256
    %v2293 = vmax.f32 %v2261, 0.0
    %v2294 = vmax.f32 %v2262, 0.0
    %v2295 = vmax.f32 %v2263, 0.0
    %v2296 = vmax.f32 %v2264, 0.0
    %v2297 = vmax.f32 %v2265, 0.0
    %v2298 = vmax.f32 %v2266, 0.0
    %v2299 = vmax.f32 %v2267, 0.0
    %v2300 = vmax.f32 %v2268, 0.0
    %v2301 = vmax.f32 %v2269, 0.0
    %v2302 = vmax.f32 %v2270, 0.0
    %v2303 = vmax.f32 %v2271, 0.0
    %v2304 = vmax.f32 %v2272, 0.0
    %v2305 = vmax.f32 %v2273, 0.0
    %v2306 = vmax.f32 %v2274, 0.0
    %v2307 = vmax.f32 %v2275, 0.0
    %v2308 = vmax.f32 %v2276, 0.0
    %v2309 = vmax.f32 %v2277, 0.0
    %v2310 = vmax.f32 %v2278, 0.0
    %v2311 = vmax.f32 %v2279, 0.0
    %v2312 = vmax.f32 %v2280, 0.0
    %v2313 = vmax.f32 %v2281, 0.0
    %v2314 = vmax.f32 %v2282, 0.0
    %v2315 = vmax.f32 %v2283, 0.0
    %v2316 = vmax.f32 %v2284, 0.0
    %v2317 = vmax.f32 %v2285, 0.0
    %v2318 = vmax.f32 %v2286, 0.0
    %v2319 = vmax.f32 %v2287, 0.0
    %v2320 = vmax.f32 %v2288, 0.0
    %v2321 = vmax.f32 %v2289, 0.0
    %v2322 = vmax.f32 %v2290, 0.0
    %v2323 = vmax.f32 %v2291, 0.0
    %v2324 = vmax.f32 %v2292, 0.0
    %v2325 = vld [vmem:[#allocation9] sm:$0xff]
    %v2326 = vld [vmem:[#allocation9 + $0x8] sm:$0xff]
    %v2327 = vld [vmem:[#allocation9 + $0x10] sm:$0xff]
    %v2328 = vld [vmem:[%s8] sm:$0x1]
    %v2329 = vld [vmem:[%s9] sm:$0x1]
    %v2362 = vcombine.low %v2293, %v2294
    %v2363 = vcombine.low %v2295, %v2296
    %v2365 = vunpack.c.l.s4 1983009808
    %v2366 = vunpack.c.0.s8 %v2365
    %v2367 = vlaneseq
    %v2368 = vshrl.u32 %v2367, 7
    %v2369 = vsub.s32 %v2366, %v2368
    %v2370 = vrot.slane %v2362, %v2369
    %v2372 = vunpack.c.l.s4 1983009808
    %v2373 = vunpack.c.0.s8 %v2372
    %v2374 = vlaneseq
    %v2375 = vshrl.u32 %v2374, 7
    %v2376 = vsub.s32 %v2373, %v2375
    %v2377 = vrot.slane %v2363, %v2376
    %v2378 = vcombine.low %v2370, %v2377
    %v2379 = vcombine.low %v2297, %v2298
    %v2380 = vcombine.low %v2299, %v2300
    %v2382 = vunpack.c.l.s4 1983009808
    %v2383 = vunpack.c.0.s8 %v2382
    %v2384 = vlaneseq
    %v2385 = vshrl.u32 %v2384, 7
    %v2386 = vsub.s32 %v2383, %v2385
    %v2387 = vrot.slane %v2379, %v2386
    %v2389 = vunpack.c.l.s4 1983009808
    %v2390 = vunpack.c.0.s8 %v2389
    %v2391 = vlaneseq
    %v2392 = vshrl.u32 %v2391, 7
    %v2393 = vsub.s32 %v2390, %v2392
    %v2394 = vrot.slane %v2380, %v2393
    %v2395 = vcombine.low %v2387, %v2394
    %v2396 = vcombine.low %v2301, %v2302
    %v2397 = vcombine.low %v2303, %v2304
    %v2399 = vunpack.c.l.s4 1983009808
    %v2400 = vunpack.c.0.s8 %v2399
    %v2401 = vlaneseq
    %v2402 = vshrl.u32 %v2401, 7
    %v2403 = vsub.s32 %v2400, %v2402
    %v2404 = vrot.slane %v2396, %v2403
    %v2406 = vunpack.c.l.s4 1983009808
    %v2407 = vunpack.c.0.s8 %v2406
    %v2408 = vlaneseq
    %v2409 = vshrl.u32 %v2408, 7
    %v2410 = vsub.s32 %v2407, %v2409
    %v2411 = vrot.slane %v2397, %v2410
    %v2412 = vcombine.low %v2404, %v2411
    %v2413 = vcombine.low %v2305, %v2306
    %v2414 = vcombine.low %v2307, %v2308
    %v2416 = vunpack.c.l.s4 1983009808
    %v2417 = vunpack.c.0.s8 %v2416
    %v2418 = vlaneseq
    %v2419 = vshrl.u32 %v2418, 7
    %v2420 = vsub.s32 %v2417, %v2419
    %v2421 = vrot.slane %v2413, %v2420
    %v2423 = vunpack.c.l.s4 1983009808
    %v2424 = vunpack.c.0.s8 %v2423
    %v2425 = vlaneseq
    %v2426 = vshrl.u32 %v2425, 7
    %v2427 = vsub.s32 %v2424, %v2426
    %v2428 = vrot.slane %v2414, %v2427
    %v2429 = vcombine.low %v2421, %v2428
    %v2430 = vcombine.low %v2309, %v2310
    %v2431 = vcombine.low %v2311, %v2312
    %v2433 = vunpack.c.l.s4 1983009808
    %v2434 = vunpack.c.0.s8 %v2433
    %v2435 = vlaneseq
    %v2436 = vshrl.u32 %v2435, 7
    %v2437 = vsub.s32 %v2434, %v2436
    %v2438 = vrot.slane %v2430, %v2437
    %v2440 = vunpack.c.l.s4 1983009808
    %v2441 = vunpack.c.0.s8 %v2440
    %v2442 = vlaneseq
    %v2443 = vshrl.u32 %v2442, 7
    %v2444 = vsub.s32 %v2441, %v2443
    %v2445 = vrot.slane %v2431, %v2444
    %v2446 = vcombine.low %v2438, %v2445
    %v2447 = vcombine.low %v2313, %v2314
    %v2448 = vcombine.low %v2315, %v2316
    %v2450 = vunpack.c.l.s4 1983009808
    %v2451 = vunpack.c.0.s8 %v2450
    %v2452 = vlaneseq
    %v2453 = vshrl.u32 %v2452, 7
    %v2454 = vsub.s32 %v2451, %v2453
    %v2455 = vrot.slane %v2447, %v2454
    %v2457 = vunpack.c.l.s4 1983009808
    %v2458 = vunpack.c.0.s8 %v2457
    %v2459 = vlaneseq
    %v2460 = vshrl.u32 %v2459, 7
    %v2461 = vsub.s32 %v2458, %v2460
    %v2462 = vrot.slane %v2448, %v2461
    %v2463 = vcombine.low %v2455, %v2462
    %v2464 = vcombine.low %v2317, %v2318
    %v2465 = vcombine.low %v2319, %v2320
    %v2467 = vunpack.c.l.s4 1983009808
    %v2468 = vunpack.c.0.s8 %v2467
    %v2469 = vlaneseq
    %v2470 = vshrl.u32 %v2469, 7
    %v2471 = vsub.s32 %v2468, %v2470
    %v2472 = vrot.slane %v2464, %v2471
    %v2474 = vunpack.c.l.s4 1983009808
    %v2475 = vunpack.c.0.s8 %v2474
    %v2476 = vlaneseq
    %v2477 = vshrl.u32 %v2476, 7
    %v2478 = vsub.s32 %v2475, %v2477
    %v2479 = vrot.slane %v2465, %v2478
    %v2480 = vcombine.low %v2472, %v2479
    %v2481 = vcombine.low %v2321, %v2322
    %v2482 = vcombine.low %v2323, %v2324
    %v2484 = vunpack.c.l.s4 1983009808
    %v2485 = vunpack.c.0.s8 %v2484
    %v2486 = vlaneseq
    %v2487 = vshrl.u32 %v2486, 7
    %v2488 = vsub.s32 %v2485, %v2487
    %v2489 = vrot.slane %v2481, %v2488
    %v2491 = vunpack.c.l.s4 1983009808
    %v2492 = vunpack.c.0.s8 %v2491
    %v2493 = vlaneseq
    %v2494 = vshrl.u32 %v2493, 7
    %v2495 = vsub.s32 %v2492, %v2494
    %v2496 = vrot.slane %v2482, %v2495
    %v2497 = vcombine.low %v2489, %v2496
    %v2498 = vrot.slane %v2378, 7
    %v2499 = vrot.slane %v2395, 7
    %v2500 = vsel %vm120, %v2498, %v2499
    %v2501 = vrot.slane %v2412, 7
    %v2502 = vsel %vm120, %v2499, %v2501
    %v2503 = vrot.slane %v2429, 7
    %v2504 = vsel %vm120, %v2501, %v2503
    %v2505 = vrot.slane %v2446, 7
    %v2506 = vrot.slane %v2463, 7
    %v2507 = vsel %vm120, %v2505, %v2506
    %v2508 = vrot.slane %v2480, 7
    %v2509 = vsel %vm120, %v2506, %v2508
    %v2510 = vrot.slane %v2497, 7
    %v2511 = vsel %vm120, %v2508, %v2510
    %v2522 = vsel %vm120, 0.0, %v2498
    %v2523 = vsel %vm120, 0.0, %v2505
    %v2524 = vsel %vm120, %v2503, 0.0
    %v2525 = vsel %vm120, %v2510, 0.0
    %v2530 = vrot.slane %v2522, 1
    %v2531 = vrot.slane %v2500, 1
    %v2532 = vsel %vm129, %v2530, %v2531
    %v2533 = vrot.slane %v2502, 1
    %v2534 = vsel %vm129, %v2531, %v2533
    %v2535 = vrot.slane %v2504, 1
    %v2536 = vsel %vm129, %v2533, %v2535
    %v2537 = vrot.slane %v2524, 1
    %v2538 = vsel %vm129, %v2535, %v2537
    %v2539 = vrot.slane %v2523, 1
    %v2540 = vrot.slane %v2507, 1
    %v2541 = vsel %vm129, %v2539, %v2540
    %v2542 = vrot.slane %v2509, 1
    %v2543 = vsel %vm129, %v2540, %v2542
    %v2544 = vrot.slane %v2511, 1
    %v2545 = vsel %vm129, %v2542, %v2544
    %v2546 = vrot.slane %v2525, 1
    %v2547 = vsel %vm129, %v2544, %v2546
    %2548 = vrot.lane.b32.xlu0 %v2532, 8
    %v2549 = vpop.permute.xlu0 %2548
    %2550 = vrot.lane.b32.xlu0 %v2534, 8
    %v2551 = vpop.permute.xlu0 %2550
    %2552 = vrot.lane.b32.xlu0 %v2536, 8
    %v2553 = vpop.permute.xlu0 %2552
    %2554 = vrot.lane.b32.xlu0 %v2538, 8
    %v2555 = vpop.permute.xlu0 %2554
    %2556 = vrot.lane.b32.xlu0 %v2541, 8
    %v2557 = vpop.permute.xlu0 %2556
    %2558 = vrot.lane.b32.xlu0 %v2543, 8
    %v2559 = vpop.permute.xlu0 %2558
    %2560 = vrot.lane.b32.xlu0 %v2545, 8
    %v2561 = vpop.permute.xlu0 %2560
    %2562 = vrot.lane.b32.xlu0 %v2547, 8
    %v2563 = vpop.permute.xlu0 %2562
    %v2572 = vrot.slane %v2522, 2
    %v2573 = vrot.slane %v2500, 2
    %v2574 = vsel %vm142, %v2572, %v2573
    %v2575 = vrot.slane %v2502, 2
    %v2576 = vsel %vm142, %v2573, %v2575
    %v2577 = vrot.slane %v2504, 2
    %v2578 = vsel %vm142, %v2575, %v2577
    %v2579 = vrot.slane %v2524, 2
    %v2580 = vsel %vm142, %v2577, %v2579
    %v2581 = vrot.slane %v2523, 2
    %v2582 = vrot.slane %v2507, 2
    %v2583 = vsel %vm142, %v2581, %v2582
    %v2584 = vrot.slane %v2509, 2
    %v2585 = vsel %vm142, %v2582, %v2584
    %v2586 = vrot.slane %v2511, 2
    %v2587 = vsel %vm142, %v2584, %v2586
    %v2588 = vrot.slane %v2525, 2
    %v2589 = vsel %vm142, %v2586, %v2588
    %2590 = vrot.lane.b32.xlu0 %v2574, 16
    %v2591 = vpop.permute.xlu0 %2590
    %2592 = vrot.lane.b32.xlu0 %v2576, 16
    %v2593 = vpop.permute.xlu0 %2592
    %2594 = vrot.lane.b32.xlu0 %v2578, 16
    %v2595 = vpop.permute.xlu0 %2594
    %2596 = vrot.lane.b32.xlu0 %v2580, 16
    %v2597 = vpop.permute.xlu0 %2596
    %2598 = vrot.lane.b32.xlu0 %v2583, 16
    %v2599 = vpop.permute.xlu0 %2598
    %2600 = vrot.lane.b32.xlu0 %v2585, 16
    %v2601 = vpop.permute.xlu0 %2600
    %2602 = vrot.lane.b32.xlu0 %v2587, 16
    %v2603 = vpop.permute.xlu0 %2602
    %2604 = vrot.lane.b32.xlu0 %v2589, 16
    %v2605 = vpop.permute.xlu0 %2604
    %v2614 = vsel %vm1813, %v2522, %v2549
    %v2615 = vsel %vm1813, %v2500, %v2551
    %v2616 = vsel %vm1813, %v2502, %v2553
    %v2617 = vsel %vm1813, %v2504, %v2555
    %v2618 = vsel %vm1813, %v2523, %v2557
    %v2619 = vsel %vm1813, %v2507, %v2559
    %v2620 = vsel %vm1813, %v2509, %v2561
    %v2621 = vsel %vm1813, %v2511, %v2563
    %v2622 = vsel %vm575, %v2614, %v2591
    %v2623 = vsel %vm575, %v2615, %v2593
    %v2624 = vsel %vm575, %v2616, %v2595
    %v2625 = vsel %vm575, %v2617, %v2597
    %v2626 = vsel %vm575, %v2618, %v2599
    %v2627 = vsel %vm575, %v2619, %v2601
    %v2628 = vsel %vm575, %v2620, %v2603
    %v2629 = vsel %vm575, %v2621, %v2605
    %vm2630 = vcmask 195584
    %v2632 = vsel %vm2630, %v2622, 0
    %v2635 = vsel %vm2630, %v2623, 0
    %v2638 = vsel %vm2630, %v2624, 0
    %v2641 = vsel %vm2630, %v2625, 0
    %v2644 = vsel %vm2630, %v2626, 0
    %v2647 = vsel %vm2630, %v2627, 0
    %v2650 = vsel %vm2630, %v2628, 0
    %v2653 = vsel %vm2630, %v2629, 0
    %2655 = vmatprep.subr.mxu0 0.0
    %2656 = vmatpush1.msra.mxu0 %v2325
    %2657 = vmatprep.subr.mxu0 0.0
    %2658 = vmatpush1.msra.mxu0 %v2326
    %2659 = vmatprep.subr.mxu0 0.0
    %2660 = vmatpush1.msra.mxu0 %v2327
    %2661 = vmatprep.subr.mxu0 0.0
    %2662 = vmatpush1.msra.mxu0 0.0
    %2663 = vmatprep.subr.mxu0 0.0
    %2664 = vmatpush1.msra.mxu0 0.0
    %2665 = vmatprep.subr.mxu0 0.0
    %2666 = vmatpush1.msra.mxu0 0.0
    %2667 = vmatprep.subr.mxu0 0.0
    %2668 = vmatpush1.msra.mxu0 0.0
    %2669 = vmatprep.subr.mxu0 0.0
    %2670 = vmatpush1.msra.mxu0 0.0
    %2671 = vmatprep.subr.mxu0 0.0
    %2672 = vmatpush1.msra.mxu0 0.0
    %2673 = vmatprep.subr.mxu0 0.0
    %2674 = vmatpush1.msra.mxu0 0.0
    %2675 = vmatprep.subr.mxu0 0.0
    %2676 = vmatpush1.msra.mxu0 0.0
    %2677 = vmatprep.subr.mxu0 0.0
    %2678 = vmatpush1.msra.mxu0 0.0
    %2679 = vmatprep.subr.mxu0 0.0
    %2680 = vmatpush1.msra.mxu0 0.0
    %2681 = vmatprep.subr.mxu0 0.0
    %2682 = vmatpush1.msra.mxu0 0.0
    %2683 = vmatprep.subr.mxu0 0.0
    %2684 = vmatpush1.msra.mxu0 0.0
    %2685 = vmatprep.subr.mxu0 0.0
    %2686 = vmatpush1.msra.mxu0 0.0
    %2687 = vmatprep.subr.mxu0 0.0
    %2688 = vmatpush1.msra.mxu0 0.0
    %2689 = vmatprep.subr.mxu0 0.0
    %2690 = vmatpush1.msra.mxu0 0.0
    %2691 = vmatprep.subr.mxu0 0.0
    %2692 = vmatpush1.msra.mxu0 0.0
    %2693 = vmatprep.subr.mxu0 0.0
    %2694 = vmatpush1.msra.mxu0 0.0
    %2695 = vmatprep.subr.mxu0 0.0
    %2696 = vmatpush1.msra.mxu0 0.0
    %2697 = vmatprep.subr.mxu0 0.0
    %2698 = vmatpush1.msra.mxu0 0.0
    %2699 = vmatprep.subr.mxu0 0.0
    %2700 = vmatpush1.msra.mxu0 0.0
    %2701 = vmatprep.subr.mxu0 0.0
    %2702 = vmatpush1.msra.mxu0 0.0
    %2703 = vmatprep.subr.mxu0 0.0
    %2704 = vmatpush1.msra.mxu0 0.0
    %2705 = vmatprep.subr.mxu0 0.0
    %2706 = vmatpush1.msra.mxu0 0.0
    %2707 = vmatprep.subr.mxu0 0.0
    %2708 = vmatpush1.msra.mxu0 0.0
    %2709 = vmatprep.subr.mxu0 0.0
    %2710 = vmatpush1.msra.mxu0 0.0
    %2711 = vmatprep.subr.mxu0 0.0
    %2712 = vmatpush1.msra.mxu0 0.0
    %2713 = vmatprep.subr.mxu0 0.0
    %2714 = vmatpush1.msra.mxu0 0.0
    %2715 = vmatprep.subr.mxu0 0.0
    %2716 = vmatpush1.msra.mxu0 0.0
    %2717 = vmatprep.subr.mxu0 0.0
    %2718 = vmatpush1.msra.mxu0 0.0
    %2719 = vmatprep.mubr.f32.mxu0 0.0
    %2720 = vmatmul.mubr.f32.gmra.mrb[0].mxu0 %v2632
    %v2721 = vpop.f32.mrb[0].mxu0
    %v2722 = vadd.f32 0.0, %v2721
    %v2723 = vpop.f32.mrb[0].mxu0
    %2724 = vmatprep.mubr.f32.mxu0 0.0
    %2725 = vmatmul.mubr.f32.gmra.mrb[0].mxu0 %v2635
    %v2726 = vpop.f32.mrb[0].mxu0
    %v2727 = vadd.f32 0.0, %v2726
    %v2728 = vpop.f32.mrb[0].mxu0
    %2729 = vmatprep.mubr.f32.mxu0 0.0
    %2730 = vmatmul.mubr.f32.gmra.mrb[0].mxu0 %v2638
    %v2731 = vpop.f32.mrb[0].mxu0
    %v2732 = vadd.f32 0.0, %v2731
    %v2733 = vpop.f32.mrb[0].mxu0
    %2734 = vmatprep.mubr.f32.mxu0 0.0
    %2735 = vmatmul.mubr.f32.gmra.mrb[0].mxu0 %v2641
    %v2736 = vpop.f32.mrb[0].mxu0
    %v2737 = vadd.f32 0.0, %v2736
    %v2738 = vpop.f32.mrb[0].mxu0
    %2739 = vmatprep.mubr.f32.mxu0 0.0
    %2740 = vmatmul.mubr.f32.gmra.mrb[0].mxu0 %v2644
    %v2741 = vpop.f32.mrb[0].mxu0
    %v2742 = vadd.f32 0.0, %v2741
    %v2743 = vpop.f32.mrb[0].mxu0
    %2744 = vmatprep.mubr.f32.mxu0 0.0
    %2745 = vmatmul.mubr.f32.gmra.mrb[0].mxu0 %v2647
    %v2746 = vpop.f32.mrb[0].mxu0
    %v2747 = vadd.f32 0.0, %v2746
    %v2748 = vpop.f32.mrb[0].mxu0
    %2749 = vmatprep.mubr.f32.mxu0 0.0
    %2750 = vmatmul.mubr.f32.gmra.mrb[0].mxu0 %v2650
    %v2751 = vpop.f32.mrb[0].mxu0
    %v2752 = vadd.f32 0.0, %v2751
    %v2753 = vpop.f32.mrb[0].mxu0
    %2754 = vmatprep.mubr.f32.mxu0 0.0
    %2755 = vmatmul.mubr.f32.gmra.mrb[0].mxu0 %v2653
    %v2756 = vpop.f32.mrb[0].mxu0
    %v2757 = vadd.f32 0.0, %v2756
    %v2758 = vpop.f32.mrb[0].mxu0
    %2759 = vdwg.mxu0
    %v2768 = vcombine.high %v2722, %v2722
    %v2770 = vunpack.c.l.s4 1966171168
    %v2771 = vunpack.c.0.s8 %v2770
    %v2772 = vlaneseq
    %v2773 = vshrl.u32 %v2772, 7
    %v2774 = vsub.s32 %v2771, %v2773
    %v2775 = vrot.slane %v2722, %v2774
    %v2777 = vunpack.c.l.s4 1966171168
    %v2778 = vunpack.c.0.s8 %v2777
    %v2779 = vlaneseq
    %v2780 = vshrl.u32 %v2779, 7
    %v2781 = vsub.s32 %v2778, %v2780
    %v2782 = vrot.slane %v2768, %v2781
    %v2783 = vcombine.high %v2775, %v2775
    %v2784 = vcombine.high %v2782, %v2782
    %v2786 = vunpack.c.l.s4 1966171168
    %v2787 = vunpack.c.0.s8 %v2786
    %v2788 = vlaneseq
    %v2789 = vshrl.u32 %v2788, 7
    %v2790 = vsub.s32 %v2787, %v2789
    %v2791 = vrot.slane %v2775, %v2790
    %v2793 = vunpack.c.l.s4 1966171168
    %v2794 = vunpack.c.0.s8 %v2793
    %v2795 = vlaneseq
    %v2796 = vshrl.u32 %v2795, 7
    %v2797 = vsub.s32 %v2794, %v2796
    %v2798 = vrot.slane %v2782, %v2797
    %v2800 = vunpack.c.l.s4 1966171168
    %v2801 = vunpack.c.0.s8 %v2800
    %v2802 = vlaneseq
    %v2803 = vshrl.u32 %v2802, 7
    %v2804 = vsub.s32 %v2801, %v2803
    %v2805 = vrot.slane %v2783, %v2804
    %v2807 = vunpack.c.l.s4 1966171168
    %v2808 = vunpack.c.0.s8 %v2807
    %v2809 = vlaneseq
    %v2810 = vshrl.u32 %v2809, 7
    %v2811 = vsub.s32 %v2808, %v2810
    %v2812 = vrot.slane %v2784, %v2811
    %v2813 = vcombine.high %v2791, %v2791
    %v2814 = vcombine.high %v2798, %v2798
    %v2815 = vcombine.high %v2805, %v2805
    %v2816 = vcombine.high %v2812, %v2812
    %v2817 = vcombine.high %v2727, %v2727
    %v2819 = vunpack.c.l.s4 1966171168
    %v2820 = vunpack.c.0.s8 %v2819
    %v2821 = vlaneseq
    %v2822 = vshrl.u32 %v2821, 7
    %v2823 = vsub.s32 %v2820, %v2822
    %v2824 = vrot.slane %v2727, %v2823
    %v2826 = vunpack.c.l.s4 1966171168
    %v2827 = vunpack.c.0.s8 %v2826
    %v2828 = vlaneseq
    %v2829 = vshrl.u32 %v2828, 7
    %v2830 = vsub.s32 %v2827, %v2829
    %v2831 = vrot.slane %v2817, %v2830
    %v2832 = vcombine.high %v2824, %v2824
    %v2833 = vcombine.high %v2831, %v2831
    %v2835 = vunpack.c.l.s4 1966171168
    %v2836 = vunpack.c.0.s8 %v2835
    %v2837 = vlaneseq
    %v2838 = vshrl.u32 %v2837, 7
    %v2839 = vsub.s32 %v2836, %v2838
    %v2840 = vrot.slane %v2824, %v2839
    %v2842 = vunpack.c.l.s4 1966171168
    %v2843 = vunpack.c.0.s8 %v2842
    %v2844 = vlaneseq
    %v2845 = vshrl.u32 %v2844, 7
    %v2846 = vsub.s32 %v2843, %v2845
    %v2847 = vrot.slane %v2831, %v2846
    %v2849 = vunpack.c.l.s4 1966171168
    %v2850 = vunpack.c.0.s8 %v2849
    %v2851 = vlaneseq
    %v2852 = vshrl.u32 %v2851, 7
    %v2853 = vsub.s32 %v2850, %v2852
    %v2854 = vrot.slane %v2832, %v2853
    %v2856 = vunpack.c.l.s4 1966171168
    %v2857 = vunpack.c.0.s8 %v2856
    %v2858 = vlaneseq
    %v2859 = vshrl.u32 %v2858, 7
    %v2860 = vsub.s32 %v2857, %v2859
    %v2861 = vrot.slane %v2833, %v2860
    %v2862 = vcombine.high %v2840, %v2840
    %v2863 = vcombine.high %v2847, %v2847
    %v2864 = vcombine.high %v2854, %v2854
    %v2865 = vcombine.high %v2861, %v2861
    %v2866 = vcombine.high %v2732, %v2732
    %v2868 = vunpack.c.l.s4 1966171168
    %v2869 = vunpack.c.0.s8 %v2868
    %v2870 = vlaneseq
    %v2871 = vshrl.u32 %v2870, 7
    %v2872 = vsub.s32 %v2869, %v2871
    %v2873 = vrot.slane %v2732, %v2872
    %v2875 = vunpack.c.l.s4 1966171168
    %v2876 = vunpack.c.0.s8 %v2875
    %v2877 = vlaneseq
    %v2878 = vshrl.u32 %v2877, 7
    %v2879 = vsub.s32 %v2876, %v2878
    %v2880 = vrot.slane %v2866, %v2879
    %v2881 = vcombine.high %v2873, %v2873
    %v2882 = vcombine.high %v2880, %v2880
    %v2884 = vunpack.c.l.s4 1966171168
    %v2885 = vunpack.c.0.s8 %v2884
    %v2886 = vlaneseq
    %v2887 = vshrl.u32 %v2886, 7
    %v2888 = vsub.s32 %v2885, %v2887
    %v2889 = vrot.slane %v2873, %v2888
    %v2891 = vunpack.c.l.s4 1966171168
    %v2892 = vunpack.c.0.s8 %v2891
    %v2893 = vlaneseq
    %v2894 = vshrl.u32 %v2893, 7
    %v2895 = vsub.s32 %v2892, %v2894
    %v2896 = vrot.slane %v2880, %v2895
    %v2898 = vunpack.c.l.s4 1966171168
    %v2899 = vunpack.c.0.s8 %v2898
    %v2900 = vlaneseq
    %v2901 = vshrl.u32 %v2900, 7
    %v2902 = vsub.s32 %v2899, %v2901
    %v2903 = vrot.slane %v2881, %v2902
    %v2905 = vunpack.c.l.s4 1966171168
    %v2906 = vunpack.c.0.s8 %v2905
    %v2907 = vlaneseq
    %v2908 = vshrl.u32 %v2907, 7
    %v2909 = vsub.s32 %v2906, %v2908
    %v2910 = vrot.slane %v2882, %v2909
    %v2911 = vcombine.high %v2889, %v2889
    %v2912 = vcombine.high %v2896, %v2896
    %v2913 = vcombine.high %v2903, %v2903
    %v2914 = vcombine.high %v2910, %v2910
    %v2915 = vcombine.high %v2737, %v2737
    %v2917 = vunpack.c.l.s4 1966171168
    %v2918 = vunpack.c.0.s8 %v2917
    %v2919 = vlaneseq
    %v2920 = vshrl.u32 %v2919, 7
    %v2921 = vsub.s32 %v2918, %v2920
    %v2922 = vrot.slane %v2737, %v2921
    %v2924 = vunpack.c.l.s4 1966171168
    %v2925 = vunpack.c.0.s8 %v2924
    %v2926 = vlaneseq
    %v2927 = vshrl.u32 %v2926, 7
    %v2928 = vsub.s32 %v2925, %v2927
    %v2929 = vrot.slane %v2915, %v2928
    %v2930 = vcombine.high %v2922, %v2922
    %v2931 = vcombine.high %v2929, %v2929
    %v2933 = vunpack.c.l.s4 1966171168
    %v2934 = vunpack.c.0.s8 %v2933
    %v2935 = vlaneseq
    %v2936 = vshrl.u32 %v2935, 7
    %v2937 = vsub.s32 %v2934, %v2936
    %v2938 = vrot.slane %v2922, %v2937
    %v2940 = vunpack.c.l.s4 1966171168
    %v2941 = vunpack.c.0.s8 %v2940
    %v2942 = vlaneseq
    %v2943 = vshrl.u32 %v2942, 7
    %v2944 = vsub.s32 %v2941, %v2943
    %v2945 = vrot.slane %v2929, %v2944
    %v2947 = vunpack.c.l.s4 1966171168
    %v2948 = vunpack.c.0.s8 %v2947
    %v2949 = vlaneseq
    %v2950 = vshrl.u32 %v2949, 7
    %v2951 = vsub.s32 %v2948, %v2950
    %v2952 = vrot.slane %v2930, %v2951
    %v2954 = vunpack.c.l.s4 1966171168
    %v2955 = vunpack.c.0.s8 %v2954
    %v2956 = vlaneseq
    %v2957 = vshrl.u32 %v2956, 7
    %v2958 = vsub.s32 %v2955, %v2957
    %v2959 = vrot.slane %v2931, %v2958
    %v2960 = vcombine.high %v2938, %v2938
    %v2961 = vcombine.high %v2945, %v2945
    %v2962 = vcombine.high %v2952, %v2952
    %v2963 = vcombine.high %v2959, %v2959
    %v2964 = vcombine.high %v2742, %v2742
    %v2966 = vunpack.c.l.s4 1966171168
    %v2967 = vunpack.c.0.s8 %v2966
    %v2968 = vlaneseq
    %v2969 = vshrl.u32 %v2968, 7
    %v2970 = vsub.s32 %v2967, %v2969
    %v2971 = vrot.slane %v2742, %v2970
    %v2973 = vunpack.c.l.s4 1966171168
    %v2974 = vunpack.c.0.s8 %v2973
    %v2975 = vlaneseq
    %v2976 = vshrl.u32 %v2975, 7
    %v2977 = vsub.s32 %v2974, %v2976
    %v2978 = vrot.slane %v2964, %v2977
    %v2979 = vcombine.high %v2971, %v2971
    %v2980 = vcombine.high %v2978, %v2978
    %v2982 = vunpack.c.l.s4 1966171168
    %v2983 = vunpack.c.0.s8 %v2982
    %v2984 = vlaneseq
    %v2985 = vshrl.u32 %v2984, 7
    %v2986 = vsub.s32 %v2983, %v2985
    %v2987 = vrot.slane %v2971, %v2986
    %v2989 = vunpack.c.l.s4 1966171168
    %v2990 = vunpack.c.0.s8 %v2989
    %v2991 = vlaneseq
    %v2992 = vshrl.u32 %v2991, 7
    %v2993 = vsub.s32 %v2990, %v2992
    %v2994 = vrot.slane %v2978, %v2993
    %v2996 = vunpack.c.l.s4 1966171168
    %v2997 = vunpack.c.0.s8 %v2996
    %v2998 = vlaneseq
    %v2999 = vshrl.u32 %v2998, 7
    %v3000 = vsub.s32 %v2997, %v2999
    %v3001 = vrot.slane %v2979, %v3000
    %v3003 = vunpack.c.l.s4 1966171168
    %v3004 = vunpack.c.0.s8 %v3003
    %v3005 = vlaneseq
    %v3006 = vshrl.u32 %v3005, 7
    %v3007 = vsub.s32 %v3004, %v3006
    %v3008 = vrot.slane %v2980, %v3007
    %v3009 = vcombine.high %v2987, %v2987
    %v3010 = vcombine.high %v2994, %v2994
    %v3011 = vcombine.high %v3001, %v3001
    %v3012 = vcombine.high %v3008, %v3008
    %v3013 = vcombine.high %v2747, %v2747
    %v3015 = vunpack.c.l.s4 1966171168
    %v3016 = vunpack.c.0.s8 %v3015
    %v3017 = vlaneseq
    %v3018 = vshrl.u32 %v3017, 7
    %v3019 = vsub.s32 %v3016, %v3018
    %v3020 = vrot.slane %v2747, %v3019
    %v3022 = vunpack.c.l.s4 1966171168
    %v3023 = vunpack.c.0.s8 %v3022
    %v3024 = vlaneseq
    %v3025 = vshrl.u32 %v3024, 7
    %v3026 = vsub.s32 %v3023, %v3025
    %v3027 = vrot.slane %v3013, %v3026
    %v3028 = vcombine.high %v3020, %v3020
    %v3029 = vcombine.high %v3027, %v3027
    %v3031 = vunpack.c.l.s4 1966171168
    %v3032 = vunpack.c.0.s8 %v3031
    %v3033 = vlaneseq
    %v3034 = vshrl.u32 %v3033, 7
    %v3035 = vsub.s32 %v3032, %v3034
    %v3036 = vrot.slane %v3020, %v3035
    %v3038 = vunpack.c.l.s4 1966171168
    %v3039 = vunpack.c.0.s8 %v3038
    %v3040 = vlaneseq
    %v3041 = vshrl.u32 %v3040, 7
    %v3042 = vsub.s32 %v3039, %v3041
    %v3043 = vrot.slane %v3027, %v3042
    %v3045 = vunpack.c.l.s4 1966171168
    %v3046 = vunpack.c.0.s8 %v3045
    %v3047 = vlaneseq
    %v3048 = vshrl.u32 %v3047, 7
    %v3049 = vsub.s32 %v3046, %v3048
    %v3050 = vrot.slane %v3028, %v3049
    %v3052 = vunpack.c.l.s4 1966171168
    %v3053 = vunpack.c.0.s8 %v3052
    %v3054 = vlaneseq
    %v3055 = vshrl.u32 %v3054, 7
    %v3056 = vsub.s32 %v3053, %v3055
    %v3057 = vrot.slane %v3029, %v3056
    %v3058 = vcombine.high %v3036, %v3036
    %v3059 = vcombine.high %v3043, %v3043
    %v3060 = vcombine.high %v3050, %v3050
    %v3061 = vcombine.high %v3057, %v3057
    %v3062 = vcombine.high %v2752, %v2752
    %v3064 = vunpack.c.l.s4 1966171168
    %v3065 = vunpack.c.0.s8 %v3064
    %v3066 = vlaneseq
    %v3067 = vshrl.u32 %v3066, 7
    %v3068 = vsub.s32 %v3065, %v3067
    %v3069 = vrot.slane %v2752, %v3068
    %v3071 = vunpack.c.l.s4 1966171168
    %v3072 = vunpack.c.0.s8 %v3071
    %v3073 = vlaneseq
    %v3074 = vshrl.u32 %v3073, 7
    %v3075 = vsub.s32 %v3072, %v3074
    %v3076 = vrot.slane %v3062, %v3075
    %v3077 = vcombine.high %v3069, %v3069
    %v3078 = vcombine.high %v3076, %v3076
    %v3080 = vunpack.c.l.s4 1966171168
    %v3081 = vunpack.c.0.s8 %v3080
    %v3082 = vlaneseq
    %v3083 = vshrl.u32 %v3082, 7
    %v3084 = vsub.s32 %v3081, %v3083
    %v3085 = vrot.slane %v3069, %v3084
    %v3087 = vunpack.c.l.s4 1966171168
    %v3088 = vunpack.c.0.s8 %v3087
    %v3089 = vlaneseq
    %v3090 = vshrl.u32 %v3089, 7
    %v3091 = vsub.s32 %v3088, %v3090
    %v3092 = vrot.slane %v3076, %v3091
    %v3094 = vunpack.c.l.s4 1966171168
    %v3095 = vunpack.c.0.s8 %v3094
    %v3096 = vlaneseq
    %v3097 = vshrl.u32 %v3096, 7
    %v3098 = vsub.s32 %v3095, %v3097
    %v3099 = vrot.slane %v3077, %v3098
    %v3101 = vunpack.c.l.s4 1966171168
    %v3102 = vunpack.c.0.s8 %v3101
    %v3103 = vlaneseq
    %v3104 = vshrl.u32 %v3103, 7
    %v3105 = vsub.s32 %v3102, %v3104
    %v3106 = vrot.slane %v3078, %v3105
    %v3107 = vcombine.high %v3085, %v3085
    %v3108 = vcombine.high %v3092, %v3092
    %v3109 = vcombine.high %v3099, %v3099
    %v3110 = vcombine.high %v3106, %v3106
    %v3111 = vcombine.high %v2757, %v2757
    %v3113 = vunpack.c.l.s4 1966171168
    %v3114 = vunpack.c.0.s8 %v3113
    %v3115 = vlaneseq
    %v3116 = vshrl.u32 %v3115, 7
    %v3117 = vsub.s32 %v3114, %v3116
    %v3118 = vrot.slane %v2757, %v3117
    %v3120 = vunpack.c.l.s4 1966171168
    %v3121 = vunpack.c.0.s8 %v3120
    %v3122 = vlaneseq
    %v3123 = vshrl.u32 %v3122, 7
    %v3124 = vsub.s32 %v3121, %v3123
    %v3125 = vrot.slane %v3111, %v3124
    %v3126 = vcombine.high %v3118, %v3118
    %v3127 = vcombine.high %v3125, %v3125
    %v3129 = vunpack.c.l.s4 1966171168
    %v3130 = vunpack.c.0.s8 %v3129
    %v3131 = vlaneseq
    %v3132 = vshrl.u32 %v3131, 7
    %v3133 = vsub.s32 %v3130, %v3132
    %v3134 = vrot.slane %v3118, %v3133
    %v3136 = vunpack.c.l.s4 1966171168
    %v3137 = vunpack.c.0.s8 %v3136
    %v3138 = vlaneseq
    %v3139 = vshrl.u32 %v3138, 7
    %v3140 = vsub.s32 %v3137, %v3139
    %v3141 = vrot.slane %v3125, %v3140
    %v3143 = vunpack.c.l.s4 1966171168
    %v3144 = vunpack.c.0.s8 %v3143
    %v3145 = vlaneseq
    %v3146 = vshrl.u32 %v3145, 7
    %v3147 = vsub.s32 %v3144, %v3146
    %v3148 = vrot.slane %v3126, %v3147
    %v3150 = vunpack.c.l.s4 1966171168
    %v3151 = vunpack.c.0.s8 %v3150
    %v3152 = vlaneseq
    %v3153 = vshrl.u32 %v3152, 7
    %v3154 = vsub.s32 %v3151, %v3153
    %v3155 = vrot.slane %v3127, %v3154
    %v3156 = vcombine.high %v3134, %v3134
    %v3157 = vcombine.high %v3141, %v3141
    %v3158 = vcombine.high %v3148, %v3148
    %v3159 = vcombine.high %v3155, %v3155
    %v3224 = vlaneseq
    %v3225 = vshrl.u32 %v3224, 7
    %v3226 = vsub.s32 0, %v3225
    %v3227 = vrot.slane %v2791, %v3226
    %v3228 = vlaneseq
    %v3229 = vshrl.u32 %v3228, 7
    %v3230 = vsub.s32 0, %v3229
    %v3231 = vrot.slane %v2805, %v3230
    %v3232 = vlaneseq
    %v3233 = vshrl.u32 %v3232, 7
    %v3234 = vsub.s32 0, %v3233
    %v3235 = vrot.slane %v2813, %v3234
    %v3236 = vlaneseq
    %v3237 = vshrl.u32 %v3236, 7
    %v3238 = vsub.s32 0, %v3237
    %v3239 = vrot.slane %v2815, %v3238
    %v3240 = vlaneseq
    %v3241 = vshrl.u32 %v3240, 7
    %v3242 = vsub.s32 0, %v3241
    %v3243 = vrot.slane %v2798, %v3242
    %v3244 = vlaneseq
    %v3245 = vshrl.u32 %v3244, 7
    %v3246 = vsub.s32 0, %v3245
    %v3247 = vrot.slane %v2812, %v3246
    %v3248 = vlaneseq
    %v3249 = vshrl.u32 %v3248, 7
    %v3250 = vsub.s32 0, %v3249
    %v3251 = vrot.slane %v2814, %v3250
    %v3252 = vlaneseq
    %v3253 = vshrl.u32 %v3252, 7
    %v3254 = vsub.s32 0, %v3253
    %v3255 = vrot.slane %v2816, %v3254
    %v3256 = vlaneseq
    %v3257 = vshrl.u32 %v3256, 7
    %v3258 = vsub.s32 0, %v3257
    %v3259 = vrot.slane %v2840, %v3258
    %v3260 = vlaneseq
    %v3261 = vshrl.u32 %v3260, 7
    %v3262 = vsub.s32 0, %v3261
    %v3263 = vrot.slane %v2854, %v3262
    %v3264 = vlaneseq
    %v3265 = vshrl.u32 %v3264, 7
    %v3266 = vsub.s32 0, %v3265
    %v3267 = vrot.slane %v2862, %v3266
    %v3268 = vlaneseq
    %v3269 = vshrl.u32 %v3268, 7
    %v3270 = vsub.s32 0, %v3269
    %v3271 = vrot.slane %v2864, %v3270
    %v3272 = vlaneseq
    %v3273 = vshrl.u32 %v3272, 7
    %v3274 = vsub.s32 0, %v3273
    %v3275 = vrot.slane %v2847, %v3274
    %v3276 = vlaneseq
    %v3277 = vshrl.u32 %v3276, 7
    %v3278 = vsub.s32 0, %v3277
    %v3279 = vrot.slane %v2861, %v3278
    %v3280 = vlaneseq
    %v3281 = vshrl.u32 %v3280, 7
    %v3282 = vsub.s32 0, %v3281
    %v3283 = vrot.slane %v2863, %v3282
    %v3284 = vlaneseq
    %v3285 = vshrl.u32 %v3284, 7
    %v3286 = vsub.s32 0, %v3285
    %v3287 = vrot.slane %v2865, %v3286
    %v3288 = vlaneseq
    %v3289 = vshrl.u32 %v3288, 7
    %v3290 = vsub.s32 0, %v3289
    %v3291 = vrot.slane %v2889, %v3290
    %v3292 = vlaneseq
    %v3293 = vshrl.u32 %v3292, 7
    %v3294 = vsub.s32 0, %v3293
    %v3295 = vrot.slane %v2903, %v3294
    %v3296 = vlaneseq
    %v3297 = vshrl.u32 %v3296, 7
    %v3298 = vsub.s32 0, %v3297
    %v3299 = vrot.slane %v2911, %v3298
    %v3300 = vlaneseq
    %v3301 = vshrl.u32 %v3300, 7
    %v3302 = vsub.s32 0, %v3301
    %v3303 = vrot.slane %v2913, %v3302
    %v3304 = vlaneseq
    %v3305 = vshrl.u32 %v3304, 7
    %v3306 = vsub.s32 0, %v3305
    %v3307 = vrot.slane %v2896, %v3306
    %v3308 = vlaneseq
    %v3309 = vshrl.u32 %v3308, 7
    %v3310 = vsub.s32 0, %v3309
    %v3311 = vrot.slane %v2910, %v3310
    %v3312 = vlaneseq
    %v3313 = vshrl.u32 %v3312, 7
    %v3314 = vsub.s32 0, %v3313
    %v3315 = vrot.slane %v2912, %v3314
    %v3316 = vlaneseq
    %v3317 = vshrl.u32 %v3316, 7
    %v3318 = vsub.s32 0, %v3317
    %v3319 = vrot.slane %v2914, %v3318
    %v3320 = vlaneseq
    %v3321 = vshrl.u32 %v3320, 7
    %v3322 = vsub.s32 0, %v3321
    %v3323 = vrot.slane %v2938, %v3322
    %v3324 = vlaneseq
    %v3325 = vshrl.u32 %v3324, 7
    %v3326 = vsub.s32 0, %v3325
    %v3327 = vrot.slane %v2952, %v3326
    %v3328 = vlaneseq
    %v3329 = vshrl.u32 %v3328, 7
    %v3330 = vsub.s32 0, %v3329
    %v3331 = vrot.slane %v2960, %v3330
    %v3332 = vlaneseq
    %v3333 = vshrl.u32 %v3332, 7
    %v3334 = vsub.s32 0, %v3333
    %v3335 = vrot.slane %v2962, %v3334
    %v3336 = vlaneseq
    %v3337 = vshrl.u32 %v3336, 7
    %v3338 = vsub.s32 0, %v3337
    %v3339 = vrot.slane %v2945, %v3338
    %v3340 = vlaneseq
    %v3341 = vshrl.u32 %v3340, 7
    %v3342 = vsub.s32 0, %v3341
    %v3343 = vrot.slane %v2959, %v3342
    %v3344 = vlaneseq
    %v3345 = vshrl.u32 %v3344, 7
    %v3346 = vsub.s32 0, %v3345
    %v3347 = vrot.slane %v2961, %v3346
    %v3348 = vlaneseq
    %v3349 = vshrl.u32 %v3348, 7
    %v3350 = vsub.s32 0, %v3349
    %v3351 = vrot.slane %v2963, %v3350
    %v3352 = vlaneseq
    %v3353 = vshrl.u32 %v3352, 7
    %v3354 = vsub.s32 0, %v3353
    %v3355 = vrot.slane %v2987, %v3354
    %v3356 = vlaneseq
    %v3357 = vshrl.u32 %v3356, 7
    %v3358 = vsub.s32 0, %v3357
    %v3359 = vrot.slane %v3001, %v3358
    %v3360 = vlaneseq
    %v3361 = vshrl.u32 %v3360, 7
    %v3362 = vsub.s32 0, %v3361
    %v3363 = vrot.slane %v3009, %v3362
    %v3364 = vlaneseq
    %v3365 = vshrl.u32 %v3364, 7
    %v3366 = vsub.s32 0, %v3365
    %v3367 = vrot.slane %v3011, %v3366
    %v3368 = vlaneseq
    %v3369 = vshrl.u32 %v3368, 7
    %v3370 = vsub.s32 0, %v3369
    %v3371 = vrot.slane %v2994, %v3370
    %v3372 = vlaneseq
    %v3373 = vshrl.u32 %v3372, 7
    %v3374 = vsub.s32 0, %v3373
    %v3375 = vrot.slane %v3008, %v3374
    %v3376 = vlaneseq
    %v3377 = vshrl.u32 %v3376, 7
    %v3378 = vsub.s32 0, %v3377
    %v3379 = vrot.slane %v3010, %v3378
    %v3380 = vlaneseq
    %v3381 = vshrl.u32 %v3380, 7
    %v3382 = vsub.s32 0, %v3381
    %v3383 = vrot.slane %v3012, %v3382
    %v3384 = vlaneseq
    %v3385 = vshrl.u32 %v3384, 7
    %v3386 = vsub.s32 0, %v3385
    %v3387 = vrot.slane %v3036, %v3386
    %v3388 = vlaneseq
    %v3389 = vshrl.u32 %v3388, 7
    %v3390 = vsub.s32 0, %v3389
    %v3391 = vrot.slane %v3050, %v3390
    %v3392 = vlaneseq
    %v3393 = vshrl.u32 %v3392, 7
    %v3394 = vsub.s32 0, %v3393
    %v3395 = vrot.slane %v3058, %v3394
    %v3396 = vlaneseq
    %v3397 = vshrl.u32 %v3396, 7
    %v3398 = vsub.s32 0, %v3397
    %v3399 = vrot.slane %v3060, %v3398
    %v3400 = vlaneseq
    %v3401 = vshrl.u32 %v3400, 7
    %v3402 = vsub.s32 0, %v3401
    %v3403 = vrot.slane %v3043, %v3402
    %v3404 = vlaneseq
    %v3405 = vshrl.u32 %v3404, 7
    %v3406 = vsub.s32 0, %v3405
    %v3407 = vrot.slane %v3057, %v3406
    %v3408 = vlaneseq
    %v3409 = vshrl.u32 %v3408, 7
    %v3410 = vsub.s32 0, %v3409
    %v3411 = vrot.slane %v3059, %v3410
    %v3412 = vlaneseq
    %v3413 = vshrl.u32 %v3412, 7
    %v3414 = vsub.s32 0, %v3413
    %v3415 = vrot.slane %v3061, %v3414
    %v3416 = vlaneseq
    %v3417 = vshrl.u32 %v3416, 7
    %v3418 = vsub.s32 0, %v3417
    %v3419 = vrot.slane %v3085, %v3418
    %v3420 = vlaneseq
    %v3421 = vshrl.u32 %v3420, 7
    %v3422 = vsub.s32 0, %v3421
    %v3423 = vrot.slane %v3099, %v3422
    %v3424 = vlaneseq
    %v3425 = vshrl.u32 %v3424, 7
    %v3426 = vsub.s32 0, %v3425
    %v3427 = vrot.slane %v3107, %v3426
    %v3428 = vlaneseq
    %v3429 = vshrl.u32 %v3428, 7
    %v3430 = vsub.s32 0, %v3429
    %v3431 = vrot.slane %v3109, %v3430
    %v3432 = vlaneseq
    %v3433 = vshrl.u32 %v3432, 7
    %v3434 = vsub.s32 0, %v3433
    %v3435 = vrot.slane %v3092, %v3434
    %v3436 = vlaneseq
    %v3437 = vshrl.u32 %v3436, 7
    %v3438 = vsub.s32 0, %v3437
    %v3439 = vrot.slane %v3106, %v3438
    %v3440 = vlaneseq
    %v3441 = vshrl.u32 %v3440, 7
    %v3442 = vsub.s32 0, %v3441
    %v3443 = vrot.slane %v3108, %v3442
    %v3444 = vlaneseq
    %v3445 = vshrl.u32 %v3444, 7
    %v3446 = vsub.s32 0, %v3445
    %v3447 = vrot.slane %v3110, %v3446
    %v3448 = vlaneseq
    %v3449 = vshrl.u32 %v3448, 7
    %v3450 = vsub.s32 0, %v3449
    %v3451 = vrot.slane %v3134, %v3450
    %v3452 = vlaneseq
    %v3453 = vshrl.u32 %v3452, 7
    %v3454 = vsub.s32 0, %v3453
    %v3455 = vrot.slane %v3148, %v3454
    %v3456 = vlaneseq
    %v3457 = vshrl.u32 %v3456, 7
    %v3458 = vsub.s32 0, %v3457
    %v3459 = vrot.slane %v3156, %v3458
    %v3460 = vlaneseq
    %v3461 = vshrl.u32 %v3460, 7
    %v3462 = vsub.s32 0, %v3461
    %v3463 = vrot.slane %v3158, %v3462
    %v3464 = vlaneseq
    %v3465 = vshrl.u32 %v3464, 7
    %v3466 = vsub.s32 0, %v3465
    %v3467 = vrot.slane %v3141, %v3466
    %v3468 = vlaneseq
    %v3469 = vshrl.u32 %v3468, 7
    %v3470 = vsub.s32 0, %v3469
    %v3471 = vrot.slane %v3155, %v3470
    %v3472 = vlaneseq
    %v3473 = vshrl.u32 %v3472, 7
    %v3474 = vsub.s32 0, %v3473
    %v3475 = vrot.slane %v3157, %v3474
    %v3476 = vlaneseq
    %v3477 = vshrl.u32 %v3476, 7
    %v3478 = vsub.s32 0, %v3477
    %v3479 = vrot.slane %v3159, %v3478
    %3480 = vrot.lane.b32.xlu0 %v3227, 120
    %v3481 = vpop.permute.xlu0 %3480
    %3482 = vrot.lane.b32.xlu0 %v3231, 120
    %v3483 = vpop.permute.xlu0 %3482
    %3484 = vrot.lane.b32.xlu0 %v3235, 120
    %v3485 = vpop.permute.xlu0 %3484
    %3486 = vrot.lane.b32.xlu0 %v3239, 120
    %v3487 = vpop.permute.xlu0 %3486
    %3488 = vrot.lane.b32.xlu0 %v3243, 120
    %v3489 = vpop.permute.xlu0 %3488
    %3490 = vrot.lane.b32.xlu0 %v3247, 120
    %v3491 = vpop.permute.xlu0 %3490
    %3492 = vrot.lane.b32.xlu0 %v3251, 120
    %v3493 = vpop.permute.xlu0 %3492
    %3494 = vrot.lane.b32.xlu0 %v3255, 120
    %v3495 = vpop.permute.xlu0 %3494
    %3496 = vrot.lane.b32.xlu0 %v3259, 120
    %v3497 = vpop.permute.xlu0 %3496
    %3498 = vrot.lane.b32.xlu0 %v3263, 120
    %v3499 = vpop.permute.xlu0 %3498
    %3500 = vrot.lane.b32.xlu0 %v3267, 120
    %v3501 = vpop.permute.xlu0 %3500
    %3502 = vrot.lane.b32.xlu0 %v3271, 120
    %v3503 = vpop.permute.xlu0 %3502
    %3504 = vrot.lane.b32.xlu0 %v3275, 120
    %v3505 = vpop.permute.xlu0 %3504
    %3506 = vrot.lane.b32.xlu0 %v3279, 120
    %v3507 = vpop.permute.xlu0 %3506
    %3508 = vrot.lane.b32.xlu0 %v3283, 120
    %v3509 = vpop.permute.xlu0 %3508
    %3510 = vrot.lane.b32.xlu0 %v3287, 120
    %v3511 = vpop.permute.xlu0 %3510
    %3512 = vrot.lane.b32.xlu0 %v3291, 120
    %v3513 = vpop.permute.xlu0 %3512
    %3514 = vrot.lane.b32.xlu0 %v3295, 120
    %v3515 = vpop.permute.xlu0 %3514
    %3516 = vrot.lane.b32.xlu0 %v3299, 120
    %v3517 = vpop.permute.xlu0 %3516
    %3518 = vrot.lane.b32.xlu0 %v3303, 120
    %v3519 = vpop.permute.xlu0 %3518
    %3520 = vrot.lane.b32.xlu0 %v3307, 120
    %v3521 = vpop.permute.xlu0 %3520
    %3522 = vrot.lane.b32.xlu0 %v3311, 120
    %v3523 = vpop.permute.xlu0 %3522
    %3524 = vrot.lane.b32.xlu0 %v3315, 120
    %v3525 = vpop.permute.xlu0 %3524
    %3526 = vrot.lane.b32.xlu0 %v3319, 120
    %v3527 = vpop.permute.xlu0 %3526
    %3528 = vrot.lane.b32.xlu0 %v3323, 120
    %v3529 = vpop.permute.xlu0 %3528
    %3530 = vrot.lane.b32.xlu0 %v3327, 120
    %v3531 = vpop.permute.xlu0 %3530
    %3532 = vrot.lane.b32.xlu0 %v3331, 120
    %v3533 = vpop.permute.xlu0 %3532
    %3534 = vrot.lane.b32.xlu0 %v3335, 120
    %v3535 = vpop.permute.xlu0 %3534
    %3536 = vrot.lane.b32.xlu0 %v3339, 120
    %v3537 = vpop.permute.xlu0 %3536
    %3538 = vrot.lane.b32.xlu0 %v3343, 120
    %v3539 = vpop.permute.xlu0 %3538
    %3540 = vrot.lane.b32.xlu0 %v3347, 120
    %v3541 = vpop.permute.xlu0 %3540
    %3542 = vrot.lane.b32.xlu0 %v3351, 120
    %v3543 = vpop.permute.xlu0 %3542
    %3544 = vrot.lane.b32.xlu0 %v3355, 120
    %v3545 = vpop.permute.xlu0 %3544
    %3546 = vrot.lane.b32.xlu0 %v3359, 120
    %v3547 = vpop.permute.xlu0 %3546
    %3548 = vrot.lane.b32.xlu0 %v3363, 120
    %v3549 = vpop.permute.xlu0 %3548
    %3550 = vrot.lane.b32.xlu0 %v3367, 120
    %v3551 = vpop.permute.xlu0 %3550
    %3552 = vrot.lane.b32.xlu0 %v3371, 120
    %v3553 = vpop.permute.xlu0 %3552
    %3554 = vrot.lane.b32.xlu0 %v3375, 120
    %v3555 = vpop.permute.xlu0 %3554
    %3556 = vrot.lane.b32.xlu0 %v3379, 120
    %v3557 = vpop.permute.xlu0 %3556
    %3558 = vrot.lane.b32.xlu0 %v3383, 120
    %v3559 = vpop.permute.xlu0 %3558
    %3560 = vrot.lane.b32.xlu0 %v3387, 120
    %v3561 = vpop.permute.xlu0 %3560
    %3562 = vrot.lane.b32.xlu0 %v3391, 120
    %v3563 = vpop.permute.xlu0 %3562
    %3564 = vrot.lane.b32.xlu0 %v3395, 120
    %v3565 = vpop.permute.xlu0 %3564
    %3566 = vrot.lane.b32.xlu0 %v3399, 120
    %v3567 = vpop.permute.xlu0 %3566
    %3568 = vrot.lane.b32.xlu0 %v3403, 120
    %v3569 = vpop.permute.xlu0 %3568
    %3570 = vrot.lane.b32.xlu0 %v3407, 120
    %v3571 = vpop.permute.xlu0 %3570
    %3572 = vrot.lane.b32.xlu0 %v3411, 120
    %v3573 = vpop.permute.xlu0 %3572
    %3574 = vrot.lane.b32.xlu0 %v3415, 120
    %v3575 = vpop.permute.xlu0 %3574
    %3576 = vrot.lane.b32.xlu0 %v3419, 120
    %v3577 = vpop.permute.xlu0 %3576
    %3578 = vrot.lane.b32.xlu0 %v3423, 120
    %v3579 = vpop.permute.xlu0 %3578
    %3580 = vrot.lane.b32.xlu0 %v3427, 120
    %v3581 = vpop.permute.xlu0 %3580
    %3582 = vrot.lane.b32.xlu0 %v3431, 120
    %v3583 = vpop.permute.xlu0 %3582
    %3584 = vrot.lane.b32.xlu0 %v3435, 120
    %v3585 = vpop.permute.xlu0 %3584
    %3586 = vrot.lane.b32.xlu0 %v3439, 120
    %v3587 = vpop.permute.xlu0 %3586
    %3588 = vrot.lane.b32.xlu0 %v3443, 120
    %v3589 = vpop.permute.xlu0 %3588
    %3590 = vrot.lane.b32.xlu0 %v3447, 120
    %v3591 = vpop.permute.xlu0 %3590
    %3592 = vrot.lane.b32.xlu0 %v3451, 120
    %v3593 = vpop.permute.xlu0 %3592
    %3594 = vrot.lane.b32.xlu0 %v3455, 120
    %v3595 = vpop.permute.xlu0 %3594
    %3596 = vrot.lane.b32.xlu0 %v3459, 120
    %v3597 = vpop.permute.xlu0 %3596
    %3598 = vrot.lane.b32.xlu0 %v3463, 120
    %v3599 = vpop.permute.xlu0 %3598
    %3600 = vrot.lane.b32.xlu0 %v3467, 120
    %v3601 = vpop.permute.xlu0 %3600
    %3602 = vrot.lane.b32.xlu0 %v3471, 120
    %v3603 = vpop.permute.xlu0 %3602
    %3604 = vrot.lane.b32.xlu0 %v3475, 120
    %v3605 = vpop.permute.xlu0 %3604
    %3606 = vrot.lane.b32.xlu0 %v3479, 120
    %v3607 = vpop.permute.xlu0 %3606
    %v3672 = vsel %vm120, %v2791, %v3481
    %v3673 = vsel %vm120, %v2805, %v3483
    %v3674 = vsel %vm120, %v2813, %v3485
    %v3675 = vsel %vm120, %v2815, %v3487
    %v3676 = vsel %vm120, %v2798, %v3489
    %v3677 = vsel %vm120, %v2812, %v3491
    %v3678 = vsel %vm120, %v2814, %v3493
    %v3679 = vsel %vm120, %v2816, %v3495
    %v3680 = vsel %vm120, %v2840, %v3497
    %v3681 = vsel %vm120, %v2854, %v3499
    %v3682 = vsel %vm120, %v2862, %v3501
    %v3683 = vsel %vm120, %v2864, %v3503
    %v3684 = vsel %vm120, %v2847, %v3505
    %v3685 = vsel %vm120, %v2861, %v3507
    %v3686 = vsel %vm120, %v2863, %v3509
    %v3687 = vsel %vm120, %v2865, %v3511
    %v3688 = vsel %vm120, %v2889, %v3513
    %v3689 = vsel %vm120, %v2903, %v3515
    %v3690 = vsel %vm120, %v2911, %v3517
    %v3691 = vsel %vm120, %v2913, %v3519
    %v3692 = vsel %vm120, %v2896, %v3521
    %v3693 = vsel %vm120, %v2910, %v3523
    %v3694 = vsel %vm120, %v2912, %v3525
    %v3695 = vsel %vm120, %v2914, %v3527
    %v3696 = vsel %vm120, %v2938, %v3529
    %v3697 = vsel %vm120, %v2952, %v3531
    %v3698 = vsel %vm120, %v2960, %v3533
    %v3699 = vsel %vm120, %v2962, %v3535
    %v3700 = vsel %vm120, %v2945, %v3537
    %v3701 = vsel %vm120, %v2959, %v3539
    %v3702 = vsel %vm120, %v2961, %v3541
    %v3703 = vsel %vm120, %v2963, %v3543
    %v3704 = vsel %vm120, %v2987, %v3545
    %v3705 = vsel %vm120, %v3001, %v3547
    %v3706 = vsel %vm120, %v3009, %v3549
    %v3707 = vsel %vm120, %v3011, %v3551
    %v3708 = vsel %vm120, %v2994, %v3553
    %v3709 = vsel %vm120, %v3008, %v3555
    %v3710 = vsel %vm120, %v3010, %v3557
    %v3711 = vsel %vm120, %v3012, %v3559
    %v3712 = vsel %vm120, %v3036, %v3561
    %v3713 = vsel %vm120, %v3050, %v3563
    %v3714 = vsel %vm120, %v3058, %v3565
    %v3715 = vsel %vm120, %v3060, %v3567
    %v3716 = vsel %vm120, %v3043, %v3569
    %v3717 = vsel %vm120, %v3057, %v3571
    %v3718 = vsel %vm120, %v3059, %v3573
    %v3719 = vsel %vm120, %v3061, %v3575
    %v3720 = vsel %vm120, %v3085, %v3577
    %v3721 = vsel %vm120, %v3099, %v3579
    %v3722 = vsel %vm120, %v3107, %v3581
    %v3723 = vsel %vm120, %v3109, %v3583
    %v3724 = vsel %vm120, %v3092, %v3585
    %v3725 = vsel %vm120, %v3106, %v3587
    %v3726 = vsel %vm120, %v3108, %v3589
    %v3727 = vsel %vm120, %v3110, %v3591
    %v3728 = vsel %vm120, %v3134, %v3593
    %v3729 = vsel %vm120, %v3148, %v3595
    %v3730 = vsel %vm120, %v3156, %v3597
    %v3731 = vsel %vm120, %v3158, %v3599
    %v3732 = vsel %vm120, %v3141, %v3601
    %v3733 = vsel %vm120, %v3155, %v3603
    %v3734 = vsel %vm120, %v3157, %v3605
    %v3735 = vsel %vm120, %v3159, %v3607
    %v3800 = vcombine.low %v3672, %v3673
    %v3801 = vcombine.low %v3674, %v3675
    %v3803 = vunpack.c.l.s4 1983009808
    %v3804 = vunpack.c.0.s8 %v3803
    %v3805 = vlaneseq
    %v3806 = vshrl.u32 %v3805, 7
    %v3807 = vsub.s32 %v3804, %v3806
    %v3808 = vrot.slane %v3800, %v3807
    %v3810 = vunpack.c.l.s4 1983009808
    %v3811 = vunpack.c.0.s8 %v3810
    %v3812 = vlaneseq
    %v3813 = vshrl.u32 %v3812, 7
    %v3814 = vsub.s32 %v3811, %v3813
    %v3815 = vrot.slane %v3801, %v3814
    %v3816 = vcombine.low %v3808, %v3815
    %v3817 = vcombine.low %v3676, %v3677
    %v3818 = vcombine.low %v3678, %v3679
    %v3820 = vunpack.c.l.s4 1983009808
    %v3821 = vunpack.c.0.s8 %v3820
    %v3822 = vlaneseq
    %v3823 = vshrl.u32 %v3822, 7
    %v3824 = vsub.s32 %v3821, %v3823
    %v3825 = vrot.slane %v3817, %v3824
    %v3827 = vunpack.c.l.s4 1983009808
    %v3828 = vunpack.c.0.s8 %v3827
    %v3829 = vlaneseq
    %v3830 = vshrl.u32 %v3829, 7
    %v3831 = vsub.s32 %v3828, %v3830
    %v3832 = vrot.slane %v3818, %v3831
    %v3833 = vcombine.low %v3825, %v3832
    %v3834 = vcombine.low %v3680, %v3681
    %v3835 = vcombine.low %v3682, %v3683
    %v3837 = vunpack.c.l.s4 1983009808
    %v3838 = vunpack.c.0.s8 %v3837
    %v3839 = vlaneseq
    %v3840 = vshrl.u32 %v3839, 7
    %v3841 = vsub.s32 %v3838, %v3840
    %v3842 = vrot.slane %v3834, %v3841
    %v3844 = vunpack.c.l.s4 1983009808
    %v3845 = vunpack.c.0.s8 %v3844
    %v3846 = vlaneseq
    %v3847 = vshrl.u32 %v3846, 7
    %v3848 = vsub.s32 %v3845, %v3847
    %v3849 = vrot.slane %v3835, %v3848
    %v3850 = vcombine.low %v3842, %v3849
    %v3851 = vcombine.low %v3684, %v3685
    %v3852 = vcombine.low %v3686, %v3687
    %v3854 = vunpack.c.l.s4 1983009808
    %v3855 = vunpack.c.0.s8 %v3854
    %v3856 = vlaneseq
    %v3857 = vshrl.u32 %v3856, 7
    %v3858 = vsub.s32 %v3855, %v3857
    %v3859 = vrot.slane %v3851, %v3858
    %v3861 = vunpack.c.l.s4 1983009808
    %v3862 = vunpack.c.0.s8 %v3861
    %v3863 = vlaneseq
    %v3864 = vshrl.u32 %v3863, 7
    %v3865 = vsub.s32 %v3862, %v3864
    %v3866 = vrot.slane %v3852, %v3865
    %v3867 = vcombine.low %v3859, %v3866
    %v3868 = vcombine.low %v3688, %v3689
    %v3869 = vcombine.low %v3690, %v3691
    %v3871 = vunpack.c.l.s4 1983009808
    %v3872 = vunpack.c.0.s8 %v3871
    %v3873 = vlaneseq
    %v3874 = vshrl.u32 %v3873, 7
    %v3875 = vsub.s32 %v3872, %v3874
    %v3876 = vrot.slane %v3868, %v3875
    %v3878 = vunpack.c.l.s4 1983009808
    %v3879 = vunpack.c.0.s8 %v3878
    %v3880 = vlaneseq
    %v3881 = vshrl.u32 %v3880, 7
    %v3882 = vsub.s32 %v3879, %v3881
    %v3883 = vrot.slane %v3869, %v3882
    %v3884 = vcombine.low %v3876, %v3883
    %v3885 = vcombine.low %v3692, %v3693
    %v3886 = vcombine.low %v3694, %v3695
    %v3888 = vunpack.c.l.s4 1983009808
    %v3889 = vunpack.c.0.s8 %v3888
    %v3890 = vlaneseq
    %v3891 = vshrl.u32 %v3890, 7
    %v3892 = vsub.s32 %v3889, %v3891
    %v3893 = vrot.slane %v3885, %v3892
    %v3895 = vunpack.c.l.s4 1983009808
    %v3896 = vunpack.c.0.s8 %v3895
    %v3897 = vlaneseq
    %v3898 = vshrl.u32 %v3897, 7
    %v3899 = vsub.s32 %v3896, %v3898
    %v3900 = vrot.slane %v3886, %v3899
    %v3901 = vcombine.low %v3893, %v3900
    %v3902 = vcombine.low %v3696, %v3697
    %v3903 = vcombine.low %v3698, %v3699
    %v3905 = vunpack.c.l.s4 1983009808
    %v3906 = vunpack.c.0.s8 %v3905
    %v3907 = vlaneseq
    %v3908 = vshrl.u32 %v3907, 7
    %v3909 = vsub.s32 %v3906, %v3908
    %v3910 = vrot.slane %v3902, %v3909
    %v3912 = vunpack.c.l.s4 1983009808
    %v3913 = vunpack.c.0.s8 %v3912
    %v3914 = vlaneseq
    %v3915 = vshrl.u32 %v3914, 7
    %v3916 = vsub.s32 %v3913, %v3915
    %v3917 = vrot.slane %v3903, %v3916
    %v3918 = vcombine.low %v3910, %v3917
    %v3919 = vcombine.low %v3700, %v3701
    %v3920 = vcombine.low %v3702, %v3703
    %v3922 = vunpack.c.l.s4 1983009808
    %v3923 = vunpack.c.0.s8 %v3922
    %v3924 = vlaneseq
    %v3925 = vshrl.u32 %v3924, 7
    %v3926 = vsub.s32 %v3923, %v3925
    %v3927 = vrot.slane %v3919, %v3926
    %v3929 = vunpack.c.l.s4 1983009808
    %v3930 = vunpack.c.0.s8 %v3929
    %v3931 = vlaneseq
    %v3932 = vshrl.u32 %v3931, 7
    %v3933 = vsub.s32 %v3930, %v3932
    %v3934 = vrot.slane %v3920, %v3933
    %v3935 = vcombine.low %v3927, %v3934
    %v3936 = vcombine.low %v3704, %v3705
    %v3937 = vcombine.low %v3706, %v3707
    %v3939 = vunpack.c.l.s4 1983009808
    %v3940 = vunpack.c.0.s8 %v3939
    %v3941 = vlaneseq
    %v3942 = vshrl.u32 %v3941, 7
    %v3943 = vsub.s32 %v3940, %v3942
    %v3944 = vrot.slane %v3936, %v3943
    %v3946 = vunpack.c.l.s4 1983009808
    %v3947 = vunpack.c.0.s8 %v3946
    %v3948 = vlaneseq
    %v3949 = vshrl.u32 %v3948, 7
    %v3950 = vsub.s32 %v3947, %v3949
    %v3951 = vrot.slane %v3937, %v3950
    %v3952 = vcombine.low %v3944, %v3951
    %v3953 = vcombine.low %v3708, %v3709
    %v3954 = vcombine.low %v3710, %v3711
    %v3956 = vunpack.c.l.s4 1983009808
    %v3957 = vunpack.c.0.s8 %v3956
    %v3958 = vlaneseq
    %v3959 = vshrl.u32 %v3958, 7
    %v3960 = vsub.s32 %v3957, %v3959
    %v3961 = vrot.slane %v3953, %v3960
    %v3963 = vunpack.c.l.s4 1983009808
    %v3964 = vunpack.c.0.s8 %v3963
    %v3965 = vlaneseq
    %v3966 = vshrl.u32 %v3965, 7
    %v3967 = vsub.s32 %v3964, %v3966
    %v3968 = vrot.slane %v3954, %v3967
    %v3969 = vcombine.low %v3961, %v3968
    %v3970 = vcombine.low %v3712, %v3713
    %v3971 = vcombine.low %v3714, %v3715
    %v3973 = vunpack.c.l.s4 1983009808
    %v3974 = vunpack.c.0.s8 %v3973
    %v3975 = vlaneseq
    %v3976 = vshrl.u32 %v3975, 7
    %v3977 = vsub.s32 %v3974, %v3976
    %v3978 = vrot.slane %v3970, %v3977
    %v3980 = vunpack.c.l.s4 1983009808
    %v3981 = vunpack.c.0.s8 %v3980
    %v3982 = vlaneseq
    %v3983 = vshrl.u32 %v3982, 7
    %v3984 = vsub.s32 %v3981, %v3983
    %v3985 = vrot.slane %v3971, %v3984
    %v3986 = vcombine.low %v3978, %v3985
    %v3987 = vcombine.low %v3716, %v3717
    %v3988 = vcombine.low %v3718, %v3719
    %v3990 = vunpack.c.l.s4 1983009808
    %v3991 = vunpack.c.0.s8 %v3990
    %v3992 = vlaneseq
    %v3993 = vshrl.u32 %v3992, 7
    %v3994 = vsub.s32 %v3991, %v3993
    %v3995 = vrot.slane %v3987, %v3994
    %v3997 = vunpack.c.l.s4 1983009808
    %v3998 = vunpack.c.0.s8 %v3997
    %v3999 = vlaneseq
    %v4000 = vshrl.u32 %v3999, 7
    %v4001 = vsub.s32 %v3998, %v4000
    %v4002 = vrot.slane %v3988, %v4001
    %v4003 = vcombine.low %v3995, %v4002
    %v4004 = vcombine.low %v3720, %v3721
    %v4005 = vcombine.low %v3722, %v3723
    %v4007 = vunpack.c.l.s4 1983009808
    %v4008 = vunpack.c.0.s8 %v4007
    %v4009 = vlaneseq
    %v4010 = vshrl.u32 %v4009, 7
    %v4011 = vsub.s32 %v4008, %v4010
    %v4012 = vrot.slane %v4004, %v4011
    %v4014 = vunpack.c.l.s4 1983009808
    %v4015 = vunpack.c.0.s8 %v4014
    %v4016 = vlaneseq
    %v4017 = vshrl.u32 %v4016, 7
    %v4018 = vsub.s32 %v4015, %v4017
    %v4019 = vrot.slane %v4005, %v4018
    %v4020 = vcombine.low %v4012, %v4019
    %v4021 = vcombine.low %v3724, %v3725
    %v4022 = vcombine.low %v3726, %v3727
    %v4024 = vunpack.c.l.s4 1983009808
    %v4025 = vunpack.c.0.s8 %v4024
    %v4026 = vlaneseq
    %v4027 = vshrl.u32 %v4026, 7
    %v4028 = vsub.s32 %v4025, %v4027
    %v4029 = vrot.slane %v4021, %v4028
    %v4031 = vunpack.c.l.s4 1983009808
    %v4032 = vunpack.c.0.s8 %v4031
    %v4033 = vlaneseq
    %v4034 = vshrl.u32 %v4033, 7
    %v4035 = vsub.s32 %v4032, %v4034
    %v4036 = vrot.slane %v4022, %v4035
    %v4037 = vcombine.low %v4029, %v4036
    %v4038 = vcombine.low %v3728, %v3729
    %v4039 = vcombine.low %v3730, %v3731
    %v4041 = vunpack.c.l.s4 1983009808
    %v4042 = vunpack.c.0.s8 %v4041
    %v4043 = vlaneseq
    %v4044 = vshrl.u32 %v4043, 7
    %v4045 = vsub.s32 %v4042, %v4044
    %v4046 = vrot.slane %v4038, %v4045
    %v4048 = vunpack.c.l.s4 1983009808
    %v4049 = vunpack.c.0.s8 %v4048
    %v4050 = vlaneseq
    %v4051 = vshrl.u32 %v4050, 7
    %v4052 = vsub.s32 %v4049, %v4051
    %v4053 = vrot.slane %v4039, %v4052
    %v4054 = vcombine.low %v4046, %v4053
    %v4055 = vcombine.low %v3732, %v3733
    %v4056 = vcombine.low %v3734, %v3735
    %v4058 = vunpack.c.l.s4 1983009808
    %v4059 = vunpack.c.0.s8 %v4058
    %v4060 = vlaneseq
    %v4061 = vshrl.u32 %v4060, 7
    %v4062 = vsub.s32 %v4059, %v4061
    %v4063 = vrot.slane %v4055, %v4062
    %v4065 = vunpack.c.l.s4 1983009808
    %v4066 = vunpack.c.0.s8 %v4065
    %v4067 = vlaneseq
    %v4068 = vshrl.u32 %v4067, 7
    %v4069 = vsub.s32 %v4066, %v4068
    %v4070 = vrot.slane %v4056, %v4069
    %v4071 = vcombine.low %v4063, %v4070
    %v4088 = vsel %vm1813, %v3816, 0.0
    %v4089 = vsel %vm1813, %v3833, 0.0
    %v4090 = vadd.f32 %v4088, %v4089
    %v4091 = vsel %vm1813, %v3850, 0.0
    %v4092 = vadd.f32 %v4090, %v4091
    %v4093 = vsel %vm1813, %v3867, 0.0
    %v4094 = vadd.f32 %v4092, %v4093
    %v4095 = vsel %vm1813, %v3884, 0.0
    %v4096 = vadd.f32 %v4094, %v4095
    %v4097 = vsel %vm1813, %v3901, 0.0
    %v4098 = vadd.f32 %v4096, %v4097
    %v4099 = vsel %vm1813, %v3918, 0.0
    %v4100 = vadd.f32 %v4098, %v4099
    %v4101 = vsel %vm1813, %v3935, 0.0
    %v4102 = vadd.f32 %v4100, %v4101
    %v4103 = vsel %vm1813, %v3952, 0.0
    %v4104 = vadd.f32 %v4102, %v4103
    %v4105 = vsel %vm1813, %v3969, 0.0
    %v4106 = vadd.f32 %v4104, %v4105
    %v4107 = vsel %vm1813, %v3986, 0.0
    %v4108 = vadd.f32 %v4106, %v4107
    %v4109 = vsel %vm1813, %v4003, 0.0
    %v4110 = vadd.f32 %v4108, %v4109
    %v4111 = vsel %vm1813, %v4020, 0.0
    %v4112 = vadd.f32 %v4110, %v4111
    %v4113 = vsel %vm1813, %v4037, 0.0
    %v4114 = vadd.f32 %v4112, %v4113
    %v4115 = vsel %vm1813, %v4054, 0.0
    %v4116 = vadd.f32 %v4114, %v4115
    %v4117 = vsel %vm1813, %v4071, 0.0
    %v4118 = vadd.f32 %v4116, %v4117
    %v4119 = vrot.slane %v4118, 4
    %v4120 = vadd.f32 %v4118, %v4119
    %v4121 = vrot.slane %v4120, 2
    %v4122 = vadd.f32 %v4120, %v4121
    %v4123 = vrot.slane %v4122, 1
    %v4124 = vadd.f32 %v4122, %v4123
    %v4125 = vrcp.pop 128.0
    %v4126 = vmul.f32 %v4124, %v4125
    %v4128 = vcombine.high %v4126, %v4126
    %v4130 = vunpack.c.l.s4 1983009808
    %v4131 = vunpack.c.0.s8 %v4130
    %v4132 = vlaneseq
    %v4133 = vshrl.u32 %v4132, 7
    %v4134 = vsub.s32 %v4131, %v4133
    %v4135 = vrot.slane %v4126, %v4134
    %v4137 = vunpack.c.l.s4 1983009808
    %v4138 = vunpack.c.0.s8 %v4137
    %v4139 = vlaneseq
    %v4140 = vshrl.u32 %v4139, 7
    %v4141 = vsub.s32 %v4138, %v4140
    %v4142 = vrot.slane %v4128, %v4141
    %v4143 = vcombine.high %v4135, %v4135
    %v4144 = vcombine.high %v4142, %v4142
    %v4149 = vsub.f32 %v3672, %v4135
    %v4150 = vsub.f32 %v3673, %v4143
    %v4151 = vsub.f32 %v3674, %v4142
    %v4152 = vsub.f32 %v3675, %v4144
    %v4153 = vsub.f32 %v3676, %v4135
    %v4154 = vsub.f32 %v3677, %v4143
    %v4155 = vsub.f32 %v3678, %v4142
    %v4156 = vsub.f32 %v3679, %v4144
    %v4157 = vsub.f32 %v3680, %v4135
    %v4158 = vsub.f32 %v3681, %v4143
    %v4159 = vsub.f32 %v3682, %v4142
    %v4160 = vsub.f32 %v3683, %v4144
    %v4161 = vsub.f32 %v3684, %v4135
    %v4162 = vsub.f32 %v3685, %v4143
    %v4163 = vsub.f32 %v3686, %v4142
    %v4164 = vsub.f32 %v3687, %v4144
    %v4165 = vsub.f32 %v3688, %v4135
    %v4166 = vsub.f32 %v3689, %v4143
    %v4167 = vsub.f32 %v3690, %v4142
    %v4168 = vsub.f32 %v3691, %v4144
    %v4169 = vsub.f32 %v3692, %v4135
    %v4170 = vsub.f32 %v3693, %v4143
    %v4171 = vsub.f32 %v3694, %v4142
    %v4172 = vsub.f32 %v3695, %v4144
    %v4173 = vsub.f32 %v3696, %v4135
    %v4174 = vsub.f32 %v3697, %v4143
    %v4175 = vsub.f32 %v3698, %v4142
    %v4176 = vsub.f32 %v3699, %v4144
    %v4177 = vsub.f32 %v3700, %v4135
    %v4178 = vsub.f32 %v3701, %v4143
    %v4179 = vsub.f32 %v3702, %v4142
    %v4180 = vsub.f32 %v3703, %v4144
    %v4181 = vsub.f32 %v3704, %v4135
    %v4182 = vsub.f32 %v3705, %v4143
    %v4183 = vsub.f32 %v3706, %v4142
    %v4184 = vsub.f32 %v3707, %v4144
    %v4185 = vsub.f32 %v3708, %v4135
    %v4186 = vsub.f32 %v3709, %v4143
    %v4187 = vsub.f32 %v3710, %v4142
    %v4188 = vsub.f32 %v3711, %v4144
    %v4189 = vsub.f32 %v3712, %v4135
    %v4190 = vsub.f32 %v3713, %v4143
    %v4191 = vsub.f32 %v3714, %v4142
    %v4192 = vsub.f32 %v3715, %v4144
    %v4193 = vsub.f32 %v3716, %v4135
    %v4194 = vsub.f32 %v3717, %v4143
    %v4195 = vsub.f32 %v3718, %v4142
    %v4196 = vsub.f32 %v3719, %v4144
    %v4197 = vsub.f32 %v3720, %v4135
    %v4198 = vsub.f32 %v3721, %v4143
    %v4199 = vsub.f32 %v3722, %v4142
    %v4200 = vsub.f32 %v3723, %v4144
    %v4201 = vsub.f32 %v3724, %v4135
    %v4202 = vsub.f32 %v3725, %v4143
    %v4203 = vsub.f32 %v3726, %v4142
    %v4204 = vsub.f32 %v3727, %v4144
    %v4205 = vsub.f32 %v3728, %v4135
    %v4206 = vsub.f32 %v3729, %v4143
    %v4207 = vsub.f32 %v3730, %v4142
    %v4208 = vsub.f32 %v3731, %v4144
    %v4209 = vsub.f32 %v3732, %v4135
    %v4210 = vsub.f32 %v3733, %v4143
    %v4211 = vsub.f32 %v3734, %v4142
    %v4212 = vsub.f32 %v3735, %v4144
    %v4213 = vmul.f32 %v4149, %v4149
    %v4214 = vmul.f32 %v4150, %v4150
    %v4215 = vmul.f32 %v4151, %v4151
    %v4216 = vmul.f32 %v4152, %v4152
    %v4217 = vmul.f32 %v4153, %v4153
    %v4218 = vmul.f32 %v4154, %v4154
    %v4219 = vmul.f32 %v4155, %v4155
    %v4220 = vmul.f32 %v4156, %v4156
    %v4221 = vmul.f32 %v4157, %v4157
    %v4222 = vmul.f32 %v4158, %v4158
    %v4223 = vmul.f32 %v4159, %v4159
    %v4224 = vmul.f32 %v4160, %v4160
    %v4225 = vmul.f32 %v4161, %v4161
    %v4226 = vmul.f32 %v4162, %v4162
    %v4227 = vmul.f32 %v4163, %v4163
    %v4228 = vmul.f32 %v4164, %v4164
    %v4229 = vmul.f32 %v4165, %v4165
    %v4230 = vmul.f32 %v4166, %v4166
    %v4231 = vmul.f32 %v4167, %v4167
    %v4232 = vmul.f32 %v4168, %v4168
    %v4233 = vmul.f32 %v4169, %v4169
    %v4234 = vmul.f32 %v4170, %v4170
    %v4235 = vmul.f32 %v4171, %v4171
    %v4236 = vmul.f32 %v4172, %v4172
    %v4237 = vmul.f32 %v4173, %v4173
    %v4238 = vmul.f32 %v4174, %v4174
    %v4239 = vmul.f32 %v4175, %v4175
    %v4240 = vmul.f32 %v4176, %v4176
    %v4241 = vmul.f32 %v4177, %v4177
    %v4242 = vmul.f32 %v4178, %v4178
    %v4243 = vmul.f32 %v4179, %v4179
    %v4244 = vmul.f32 %v4180, %v4180
    %v4245 = vmul.f32 %v4181, %v4181
    %v4246 = vmul.f32 %v4182, %v4182
    %v4247 = vmul.f32 %v4183, %v4183
    %v4248 = vmul.f32 %v4184, %v4184
    %v4249 = vmul.f32 %v4185, %v4185
    %v4250 = vmul.f32 %v4186, %v4186
    %v4251 = vmul.f32 %v4187, %v4187
    %v4252 = vmul.f32 %v4188, %v4188
    %v4253 = vmul.f32 %v4189, %v4189
    %v4254 = vmul.f32 %v4190, %v4190
    %v4255 = vmul.f32 %v4191, %v4191
    %v4256 = vmul.f32 %v4192, %v4192
    %v4257 = vmul.f32 %v4193, %v4193
    %v4258 = vmul.f32 %v4194, %v4194
    %v4259 = vmul.f32 %v4195, %v4195
    %v4260 = vmul.f32 %v4196, %v4196
    %v4261 = vmul.f32 %v4197, %v4197
    %v4262 = vmul.f32 %v4198, %v4198
    %v4263 = vmul.f32 %v4199, %v4199
    %v4264 = vmul.f32 %v4200, %v4200
    %v4265 = vmul.f32 %v4201, %v4201
    %v4266 = vmul.f32 %v4202, %v4202
    %v4267 = vmul.f32 %v4203, %v4203
    %v4268 = vmul.f32 %v4204, %v4204
    %v4269 = vmul.f32 %v4205, %v4205
    %v4270 = vmul.f32 %v4206, %v4206
    %v4271 = vmul.f32 %v4207, %v4207
    %v4272 = vmul.f32 %v4208, %v4208
    %v4273 = vmul.f32 %v4209, %v4209
    %v4274 = vmul.f32 %v4210, %v4210
    %v4275 = vmul.f32 %v4211, %v4211
    %v4276 = vmul.f32 %v4212, %v4212
    %v4341 = vcombine.low %v4213, %v4214
    %v4342 = vcombine.low %v4215, %v4216
    %v4344 = vunpack.c.l.s4 1983009808
    %v4345 = vunpack.c.0.s8 %v4344
    %v4346 = vlaneseq
    %v4347 = vshrl.u32 %v4346, 7
    %v4348 = vsub.s32 %v4345, %v4347
    %v4349 = vrot.slane %v4341, %v4348
    %v4351 = vunpack.c.l.s4 1983009808
    %v4352 = vunpack.c.0.s8 %v4351
    %v4353 = vlaneseq
    %v4354 = vshrl.u32 %v4353, 7
    %v4355 = vsub.s32 %v4352, %v4354
    %v4356 = vrot.slane %v4342, %v4355
    %v4357 = vcombine.low %v4349, %v4356
    %v4358 = vcombine.low %v4217, %v4218
    %v4359 = vcombine.low %v4219, %v4220
    %v4361 = vunpack.c.l.s4 1983009808
    %v4362 = vunpack.c.0.s8 %v4361
    %v4363 = vlaneseq
    %v4364 = vshrl.u32 %v4363, 7
    %v4365 = vsub.s32 %v4362, %v4364
    %v4366 = vrot.slane %v4358, %v4365
    %v4368 = vunpack.c.l.s4 1983009808
    %v4369 = vunpack.c.0.s8 %v4368
    %v4370 = vlaneseq
    %v4371 = vshrl.u32 %v4370, 7
    %v4372 = vsub.s32 %v4369, %v4371
    %v4373 = vrot.slane %v4359, %v4372
    %v4374 = vcombine.low %v4366, %v4373
    %v4375 = vcombine.low %v4221, %v4222
    %v4376 = vcombine.low %v4223, %v4224
    %v4378 = vunpack.c.l.s4 1983009808
    %v4379 = vunpack.c.0.s8 %v4378
    %v4380 = vlaneseq
    %v4381 = vshrl.u32 %v4380, 7
    %v4382 = vsub.s32 %v4379, %v4381
    %v4383 = vrot.slane %v4375, %v4382
    %v4385 = vunpack.c.l.s4 1983009808
    %v4386 = vunpack.c.0.s8 %v4385
    %v4387 = vlaneseq
    %v4388 = vshrl.u32 %v4387, 7
    %v4389 = vsub.s32 %v4386, %v4388
    %v4390 = vrot.slane %v4376, %v4389
    %v4391 = vcombine.low %v4383, %v4390
    %v4392 = vcombine.low %v4225, %v4226
    %v4393 = vcombine.low %v4227, %v4228
    %v4395 = vunpack.c.l.s4 1983009808
    %v4396 = vunpack.c.0.s8 %v4395
    %v4397 = vlaneseq
    %v4398 = vshrl.u32 %v4397, 7
    %v4399 = vsub.s32 %v4396, %v4398
    %v4400 = vrot.slane %v4392, %v4399
    %v4402 = vunpack.c.l.s4 1983009808
    %v4403 = vunpack.c.0.s8 %v4402
    %v4404 = vlaneseq
    %v4405 = vshrl.u32 %v4404, 7
    %v4406 = vsub.s32 %v4403, %v4405
    %v4407 = vrot.slane %v4393, %v4406
    %v4408 = vcombine.low %v4400, %v4407
    %v4409 = vcombine.low %v4229, %v4230
    %v4410 = vcombine.low %v4231, %v4232
    %v4412 = vunpack.c.l.s4 1983009808
    %v4413 = vunpack.c.0.s8 %v4412
    %v4414 = vlaneseq
    %v4415 = vshrl.u32 %v4414, 7
    %v4416 = vsub.s32 %v4413, %v4415
    %v4417 = vrot.slane %v4409, %v4416
    %v4419 = vunpack.c.l.s4 1983009808
    %v4420 = vunpack.c.0.s8 %v4419
    %v4421 = vlaneseq
    %v4422 = vshrl.u32 %v4421, 7
    %v4423 = vsub.s32 %v4420, %v4422
    %v4424 = vrot.slane %v4410, %v4423
    %v4425 = vcombine.low %v4417, %v4424
    %v4426 = vcombine.low %v4233, %v4234
    %v4427 = vcombine.low %v4235, %v4236
    %v4429 = vunpack.c.l.s4 1983009808
    %v4430 = vunpack.c.0.s8 %v4429
    %v4431 = vlaneseq
    %v4432 = vshrl.u32 %v4431, 7
    %v4433 = vsub.s32 %v4430, %v4432
    %v4434 = vrot.slane %v4426, %v4433
    %v4436 = vunpack.c.l.s4 1983009808
    %v4437 = vunpack.c.0.s8 %v4436
    %v4438 = vlaneseq
    %v4439 = vshrl.u32 %v4438, 7
    %v4440 = vsub.s32 %v4437, %v4439
    %v4441 = vrot.slane %v4427, %v4440
    %v4442 = vcombine.low %v4434, %v4441
    %v4443 = vcombine.low %v4237, %v4238
    %v4444 = vcombine.low %v4239, %v4240
    %v4446 = vunpack.c.l.s4 1983009808
    %v4447 = vunpack.c.0.s8 %v4446
    %v4448 = vlaneseq
    %v4449 = vshrl.u32 %v4448, 7
    %v4450 = vsub.s32 %v4447, %v4449
    %v4451 = vrot.slane %v4443, %v4450
    %v4453 = vunpack.c.l.s4 1983009808
    %v4454 = vunpack.c.0.s8 %v4453
    %v4455 = vlaneseq
    %v4456 = vshrl.u32 %v4455, 7
    %v4457 = vsub.s32 %v4454, %v4456
    %v4458 = vrot.slane %v4444, %v4457
    %v4459 = vcombine.low %v4451, %v4458
    %v4460 = vcombine.low %v4241, %v4242
    %v4461 = vcombine.low %v4243, %v4244
    %v4463 = vunpack.c.l.s4 1983009808
    %v4464 = vunpack.c.0.s8 %v4463
    %v4465 = vlaneseq
    %v4466 = vshrl.u32 %v4465, 7
    %v4467 = vsub.s32 %v4464, %v4466
    %v4468 = vrot.slane %v4460, %v4467
    %v4470 = vunpack.c.l.s4 1983009808
    %v4471 = vunpack.c.0.s8 %v4470
    %v4472 = vlaneseq
    %v4473 = vshrl.u32 %v4472, 7
    %v4474 = vsub.s32 %v4471, %v4473
    %v4475 = vrot.slane %v4461, %v4474
    %v4476 = vcombine.low %v4468, %v4475
    %v4477 = vcombine.low %v4245, %v4246
    %v4478 = vcombine.low %v4247, %v4248
    %v4480 = vunpack.c.l.s4 1983009808
    %v4481 = vunpack.c.0.s8 %v4480
    %v4482 = vlaneseq
    %v4483 = vshrl.u32 %v4482, 7
    %v4484 = vsub.s32 %v4481, %v4483
    %v4485 = vrot.slane %v4477, %v4484
    %v4487 = vunpack.c.l.s4 1983009808
    %v4488 = vunpack.c.0.s8 %v4487
    %v4489 = vlaneseq
    %v4490 = vshrl.u32 %v4489, 7
    %v4491 = vsub.s32 %v4488, %v4490
    %v4492 = vrot.slane %v4478, %v4491
    %v4493 = vcombine.low %v4485, %v4492
    %v4494 = vcombine.low %v4249, %v4250
    %v4495 = vcombine.low %v4251, %v4252
    %v4497 = vunpack.c.l.s4 1983009808
    %v4498 = vunpack.c.0.s8 %v4497
    %v4499 = vlaneseq
    %v4500 = vshrl.u32 %v4499, 7
    %v4501 = vsub.s32 %v4498, %v4500
    %v4502 = vrot.slane %v4494, %v4501
    %v4504 = vunpack.c.l.s4 1983009808
    %v4505 = vunpack.c.0.s8 %v4504
    %v4506 = vlaneseq
    %v4507 = vshrl.u32 %v4506, 7
    %v4508 = vsub.s32 %v4505, %v4507
    %v4509 = vrot.slane %v4495, %v4508
    %v4510 = vcombine.low %v4502, %v4509
    %v4511 = vcombine.low %v4253, %v4254
    %v4512 = vcombine.low %v4255, %v4256
    %v4514 = vunpack.c.l.s4 1983009808
    %v4515 = vunpack.c.0.s8 %v4514
    %v4516 = vlaneseq
    %v4517 = vshrl.u32 %v4516, 7
    %v4518 = vsub.s32 %v4515, %v4517
    %v4519 = vrot.slane %v4511, %v4518
    %v4521 = vunpack.c.l.s4 1983009808
    %v4522 = vunpack.c.0.s8 %v4521
    %v4523 = vlaneseq
    %v4524 = vshrl.u32 %v4523, 7
    %v4525 = vsub.s32 %v4522, %v4524
    %v4526 = vrot.slane %v4512, %v4525
    %v4527 = vcombine.low %v4519, %v4526
    %v4528 = vcombine.low %v4257, %v4258
    %v4529 = vcombine.low %v4259, %v4260
    %v4531 = vunpack.c.l.s4 1983009808
    %v4532 = vunpack.c.0.s8 %v4531
    %v4533 = vlaneseq
    %v4534 = vshrl.u32 %v4533, 7
    %v4535 = vsub.s32 %v4532, %v4534
    %v4536 = vrot.slane %v4528, %v4535
    %v4538 = vunpack.c.l.s4 1983009808
    %v4539 = vunpack.c.0.s8 %v4538
    %v4540 = vlaneseq
    %v4541 = vshrl.u32 %v4540, 7
    %v4542 = vsub.s32 %v4539, %v4541
    %v4543 = vrot.slane %v4529, %v4542
    %v4544 = vcombine.low %v4536, %v4543
    %v4545 = vcombine.low %v4261, %v4262
    %v4546 = vcombine.low %v4263, %v4264
    %v4548 = vunpack.c.l.s4 1983009808
    %v4549 = vunpack.c.0.s8 %v4548
    %v4550 = vlaneseq
    %v4551 = vshrl.u32 %v4550, 7
    %v4552 = vsub.s32 %v4549, %v4551
    %v4553 = vrot.slane %v4545, %v4552
    %v4555 = vunpack.c.l.s4 1983009808
    %v4556 = vunpack.c.0.s8 %v4555
    %v4557 = vlaneseq
    %v4558 = vshrl.u32 %v4557, 7
    %v4559 = vsub.s32 %v4556, %v4558
    %v4560 = vrot.slane %v4546, %v4559
    %v4561 = vcombine.low %v4553, %v4560
    %v4562 = vcombine.low %v4265, %v4266
    %v4563 = vcombine.low %v4267, %v4268
    %v4565 = vunpack.c.l.s4 1983009808
    %v4566 = vunpack.c.0.s8 %v4565
    %v4567 = vlaneseq
    %v4568 = vshrl.u32 %v4567, 7
    %v4569 = vsub.s32 %v4566, %v4568
    %v4570 = vrot.slane %v4562, %v4569
    %v4572 = vunpack.c.l.s4 1983009808
    %v4573 = vunpack.c.0.s8 %v4572
    %v4574 = vlaneseq
    %v4575 = vshrl.u32 %v4574, 7
    %v4576 = vsub.s32 %v4573, %v4575
    %v4577 = vrot.slane %v4563, %v4576
    %v4578 = vcombine.low %v4570, %v4577
    %v4579 = vcombine.low %v4269, %v4270
    %v4580 = vcombine.low %v4271, %v4272
    %v4582 = vunpack.c.l.s4 1983009808
    %v4583 = vunpack.c.0.s8 %v4582
    %v4584 = vlaneseq
    %v4585 = vshrl.u32 %v4584, 7
    %v4586 = vsub.s32 %v4583, %v4585
    %v4587 = vrot.slane %v4579, %v4586
    %v4589 = vunpack.c.l.s4 1983009808
    %v4590 = vunpack.c.0.s8 %v4589
    %v4591 = vlaneseq
    %v4592 = vshrl.u32 %v4591, 7
    %v4593 = vsub.s32 %v4590, %v4592
    %v4594 = vrot.slane %v4580, %v4593
    %v4595 = vcombine.low %v4587, %v4594
    %v4596 = vcombine.low %v4273, %v4274
    %v4597 = vcombine.low %v4275, %v4276
    %v4599 = vunpack.c.l.s4 1983009808
    %v4600 = vunpack.c.0.s8 %v4599
    %v4601 = vlaneseq
    %v4602 = vshrl.u32 %v4601, 7
    %v4603 = vsub.s32 %v4600, %v4602
    %v4604 = vrot.slane %v4596, %v4603
    %v4606 = vunpack.c.l.s4 1983009808
    %v4607 = vunpack.c.0.s8 %v4606
    %v4608 = vlaneseq
    %v4609 = vshrl.u32 %v4608, 7
    %v4610 = vsub.s32 %v4607, %v4609
    %v4611 = vrot.slane %v4597, %v4610
    %v4612 = vcombine.low %v4604, %v4611
    %v4629 = vsel %vm1813, %v4357, 0.0
    %v4630 = vsel %vm1813, %v4374, 0.0
    %v4631 = vadd.f32 %v4629, %v4630
    %v4632 = vsel %vm1813, %v4391, 0.0
    %v4633 = vadd.f32 %v4631, %v4632
    %v4634 = vsel %vm1813, %v4408, 0.0
    %v4635 = vadd.f32 %v4633, %v4634
    %v4636 = vsel %vm1813, %v4425, 0.0
    %v4637 = vadd.f32 %v4635, %v4636
    %v4638 = vsel %vm1813, %v4442, 0.0
    %v4639 = vadd.f32 %v4637, %v4638
    %v4640 = vsel %vm1813, %v4459, 0.0
    %v4641 = vadd.f32 %v4639, %v4640
    %v4642 = vsel %vm1813, %v4476, 0.0
    %v4643 = vadd.f32 %v4641, %v4642
    %v4644 = vsel %vm1813, %v4493, 0.0
    %v4645 = vadd.f32 %v4643, %v4644
    %v4646 = vsel %vm1813, %v4510, 0.0
    %v4647 = vadd.f32 %v4645, %v4646
    %v4648 = vsel %vm1813, %v4527, 0.0
    %v4649 = vadd.f32 %v4647, %v4648
    %v4650 = vsel %vm1813, %v4544, 0.0
    %v4651 = vadd.f32 %v4649, %v4650
    %v4652 = vsel %vm1813, %v4561, 0.0
    %v4653 = vadd.f32 %v4651, %v4652
    %v4654 = vsel %vm1813, %v4578, 0.0
    %v4655 = vadd.f32 %v4653, %v4654
    %v4656 = vsel %vm1813, %v4595, 0.0
    %v4657 = vadd.f32 %v4655, %v4656
    %v4658 = vsel %vm1813, %v4612, 0.0
    %v4659 = vadd.f32 %v4657, %v4658
    %v4660 = vrot.slane %v4659, 4
    %v4661 = vadd.f32 %v4659, %v4660
    %v4662 = vrot.slane %v4661, 2
    %v4663 = vadd.f32 %v4661, %v4662
    %v4664 = vrot.slane %v4663, 1
    %v4665 = vadd.f32 %v4663, %v4664
    %v4666 = vmul.f32 %v4665, %v4125
    %v4667 = vadd.f32 %v4666, 1e-05
    %v4668 = vrsqrt.pop %v4667
    %v4670 = vcombine.high %v4668, %v4668
    %v4672 = vunpack.c.l.s4 1983009808
    %v4673 = vunpack.c.0.s8 %v4672
    %v4674 = vlaneseq
    %v4675 = vshrl.u32 %v4674, 7
    %v4676 = vsub.s32 %v4673, %v4675
    %v4677 = vrot.slane %v4668, %v4676
    %v4679 = vunpack.c.l.s4 1983009808
    %v4680 = vunpack.c.0.s8 %v4679
    %v4681 = vlaneseq
    %v4682 = vshrl.u32 %v4681, 7
    %v4683 = vsub.s32 %v4680, %v4682
    %v4684 = vrot.slane %v4670, %v4683
    %v4685 = vcombine.high %v4677, %v4677
    %v4686 = vcombine.high %v4684, %v4684
    %v4691 = vmul.f32 %v4149, %v4677
    %v4692 = vmul.f32 %v4150, %v4685
    %v4693 = vmul.f32 %v4151, %v4684
    %v4694 = vmul.f32 %v4152, %v4686
    %v4695 = vmul.f32 %v4153, %v4677
    %v4696 = vmul.f32 %v4154, %v4685
    %v4697 = vmul.f32 %v4155, %v4684
    %v4698 = vmul.f32 %v4156, %v4686
    %v4699 = vmul.f32 %v4157, %v4677
    %v4700 = vmul.f32 %v4158, %v4685
    %v4701 = vmul.f32 %v4159, %v4684
    %v4702 = vmul.f32 %v4160, %v4686
    %v4703 = vmul.f32 %v4161, %v4677
    %v4704 = vmul.f32 %v4162, %v4685
    %v4705 = vmul.f32 %v4163, %v4684
    %v4706 = vmul.f32 %v4164, %v4686
    %v4707 = vmul.f32 %v4165, %v4677
    %v4708 = vmul.f32 %v4166, %v4685
    %v4709 = vmul.f32 %v4167, %v4684
    %v4710 = vmul.f32 %v4168, %v4686
    %v4711 = vmul.f32 %v4169, %v4677
    %v4712 = vmul.f32 %v4170, %v4685
    %v4713 = vmul.f32 %v4171, %v4684
    %v4714 = vmul.f32 %v4172, %v4686
    %v4715 = vmul.f32 %v4173, %v4677
    %v4716 = vmul.f32 %v4174, %v4685
    %v4717 = vmul.f32 %v4175, %v4684
    %v4718 = vmul.f32 %v4176, %v4686
    %v4719 = vmul.f32 %v4177, %v4677
    %v4720 = vmul.f32 %v4178, %v4685
    %v4721 = vmul.f32 %v4179, %v4684
    %v4722 = vmul.f32 %v4180, %v4686
    %v4723 = vmul.f32 %v4181, %v4677
    %v4724 = vmul.f32 %v4182, %v4685
    %v4725 = vmul.f32 %v4183, %v4684
    %v4726 = vmul.f32 %v4184, %v4686
    %v4727 = vmul.f32 %v4185, %v4677
    %v4728 = vmul.f32 %v4186, %v4685
    %v4729 = vmul.f32 %v4187, %v4684
    %v4730 = vmul.f32 %v4188, %v4686
    %v4731 = vmul.f32 %v4189, %v4677
    %v4732 = vmul.f32 %v4190, %v4685
    %v4733 = vmul.f32 %v4191, %v4684
    %v4734 = vmul.f32 %v4192, %v4686
    %v4735 = vmul.f32 %v4193, %v4677
    %v4736 = vmul.f32 %v4194, %v4685
    %v4737 = vmul.f32 %v4195, %v4684
    %v4738 = vmul.f32 %v4196, %v4686
    %v4739 = vmul.f32 %v4197, %v4677
    %v4740 = vmul.f32 %v4198, %v4685
    %v4741 = vmul.f32 %v4199, %v4684
    %v4742 = vmul.f32 %v4200, %v4686
    %v4743 = vmul.f32 %v4201, %v4677
    %v4744 = vmul.f32 %v4202, %v4685
    %v4745 = vmul.f32 %v4203, %v4684
    %v4746 = vmul.f32 %v4204, %v4686
    %v4747 = vmul.f32 %v4205, %v4677
    %v4748 = vmul.f32 %v4206, %v4685
    %v4749 = vmul.f32 %v4207, %v4684
    %v4750 = vmul.f32 %v4208, %v4686
    %v4751 = vmul.f32 %v4209, %v4677
    %v4752 = vmul.f32 %v4210, %v4685
    %v4753 = vmul.f32 %v4211, %v4684
    %v4754 = vmul.f32 %v4212, %v4686
    %v4756 = vlaneseq
    %v4757 = vshrl.u32 %v4756, 7
    %v4758 = vsub.s32 0, %v4757
    %v4759 = vrot.slane %v2328, %v4758
    %v4760 = vcombine.high %v4759, %v4759
    %v4762 = vunpack.c.l.s4 1983009808
    %v4763 = vunpack.c.0.s8 %v4762
    %v4764 = vlaneseq
    %v4765 = vshrl.u32 %v4764, 7
    %v4766 = vsub.s32 %v4763, %v4765
    %v4767 = vrot.slane %v4759, %v4766
    %v4769 = vunpack.c.l.s4 1983009808
    %v4770 = vunpack.c.0.s8 %v4769
    %v4771 = vlaneseq
    %v4772 = vshrl.u32 %v4771, 7
    %v4773 = vsub.s32 %v4770, %v4772
    %v4774 = vrot.slane %v4760, %v4773
    %v4775 = vcombine.high %v4767, %v4767
    %v4776 = vcombine.high %v4774, %v4774
    %v4781 = vmul.f32 %v4691, %v4767
    %v4782 = vmul.f32 %v4692, %v4775
    %v4783 = vmul.f32 %v4693, %v4774
    %v4784 = vmul.f32 %v4694, %v4776
    %v4785 = vmul.f32 %v4695, %v4767
    %v4786 = vmul.f32 %v4696, %v4775
    %v4787 = vmul.f32 %v4697, %v4774
    %v4788 = vmul.f32 %v4698, %v4776
    %v4789 = vmul.f32 %v4699, %v4767
    %v4790 = vmul.f32 %v4700, %v4775
    %v4791 = vmul.f32 %v4701, %v4774
    %v4792 = vmul.f32 %v4702, %v4776
    %v4793 = vmul.f32 %v4703, %v4767
    %v4794 = vmul.f32 %v4704, %v4775
    %v4795 = vmul.f32 %v4705, %v4774
    %v4796 = vmul.f32 %v4706, %v4776
    %v4797 = vmul.f32 %v4707, %v4767
    %v4798 = vmul.f32 %v4708, %v4775
    %v4799 = vmul.f32 %v4709, %v4774
    %v4800 = vmul.f32 %v4710, %v4776
    %v4801 = vmul.f32 %v4711, %v4767
    %v4802 = vmul.f32 %v4712, %v4775
    %v4803 = vmul.f32 %v4713, %v4774
    %v4804 = vmul.f32 %v4714, %v4776
    %v4805 = vmul.f32 %v4715, %v4767
    %v4806 = vmul.f32 %v4716, %v4775
    %v4807 = vmul.f32 %v4717, %v4774
    %v4808 = vmul.f32 %v4718, %v4776
    %v4809 = vmul.f32 %v4719, %v4767
    %v4810 = vmul.f32 %v4720, %v4775
    %v4811 = vmul.f32 %v4721, %v4774
    %v4812 = vmul.f32 %v4722, %v4776
    %v4813 = vmul.f32 %v4723, %v4767
    %v4814 = vmul.f32 %v4724, %v4775
    %v4815 = vmul.f32 %v4725, %v4774
    %v4816 = vmul.f32 %v4726, %v4776
    %v4817 = vmul.f32 %v4727, %v4767
    %v4818 = vmul.f32 %v4728, %v4775
    %v4819 = vmul.f32 %v4729, %v4774
    %v4820 = vmul.f32 %v4730, %v4776
    %v4821 = vmul.f32 %v4731, %v4767
    %v4822 = vmul.f32 %v4732, %v4775
    %v4823 = vmul.f32 %v4733, %v4774
    %v4824 = vmul.f32 %v4734, %v4776
    %v4825 = vmul.f32 %v4735, %v4767
    %v4826 = vmul.f32 %v4736, %v4775
    %v4827 = vmul.f32 %v4737, %v4774
    %v4828 = vmul.f32 %v4738, %v4776
    %v4829 = vmul.f32 %v4739, %v4767
    %v4830 = vmul.f32 %v4740, %v4775
    %v4831 = vmul.f32 %v4741, %v4774
    %v4832 = vmul.f32 %v4742, %v4776
    %v4833 = vmul.f32 %v4743, %v4767
    %v4834 = vmul.f32 %v4744, %v4775
    %v4835 = vmul.f32 %v4745, %v4774
    %v4836 = vmul.f32 %v4746, %v4776
    %v4837 = vmul.f32 %v4747, %v4767
    %v4838 = vmul.f32 %v4748, %v4775
    %v4839 = vmul.f32 %v4749, %v4774
    %v4840 = vmul.f32 %v4750, %v4776
    %v4841 = vmul.f32 %v4751, %v4767
    %v4842 = vmul.f32 %v4752, %v4775
    %v4843 = vmul.f32 %v4753, %v4774
    %v4844 = vmul.f32 %v4754, %v4776
    %v4846 = vlaneseq
    %v4847 = vshrl.u32 %v4846, 7
    %v4848 = vsub.s32 0, %v4847
    %v4849 = vrot.slane %v2329, %v4848
    %v4850 = vcombine.high %v4849, %v4849
    %v4852 = vunpack.c.l.s4 1983009808
    %v4853 = vunpack.c.0.s8 %v4852
    %v4854 = vlaneseq
    %v4855 = vshrl.u32 %v4854, 7
    %v4856 = vsub.s32 %v4853, %v4855
    %v4857 = vrot.slane %v4849, %v4856
    %v4859 = vunpack.c.l.s4 1983009808
    %v4860 = vunpack.c.0.s8 %v4859
    %v4861 = vlaneseq
    %v4862 = vshrl.u32 %v4861, 7
    %v4863 = vsub.s32 %v4860, %v4862
    %v4864 = vrot.slane %v4850, %v4863
    %v4865 = vcombine.high %v4857, %v4857
    %v4866 = vcombine.high %v4864, %v4864
    %v4871 = vadd.f32 %v4781, %v4857
    %v4872 = vadd.f32 %v4782, %v4865
    %v4873 = vadd.f32 %v4783, %v4864
    %v4874 = vadd.f32 %v4784, %v4866
    %v4875 = vadd.f32 %v4785, %v4857
    %v4876 = vadd.f32 %v4786, %v4865
    %v4877 = vadd.f32 %v4787, %v4864
    %v4878 = vadd.f32 %v4788, %v4866
    %v4879 = vadd.f32 %v4789, %v4857
    %v4880 = vadd.f32 %v4790, %v4865
    %v4881 = vadd.f32 %v4791, %v4864
    %v4882 = vadd.f32 %v4792, %v4866
    %v4883 = vadd.f32 %v4793, %v4857
    %v4884 = vadd.f32 %v4794, %v4865
    %v4885 = vadd.f32 %v4795, %v4864
    %v4886 = vadd.f32 %v4796, %v4866
    %v4887 = vadd.f32 %v4797, %v4857
    %v4888 = vadd.f32 %v4798, %v4865
    %v4889 = vadd.f32 %v4799, %v4864
    %v4890 = vadd.f32 %v4800, %v4866
    %v4891 = vadd.f32 %v4801, %v4857
    %v4892 = vadd.f32 %v4802, %v4865
    %v4893 = vadd.f32 %v4803, %v4864
    %v4894 = vadd.f32 %v4804, %v4866
    %v4895 = vadd.f32 %v4805, %v4857
    %v4896 = vadd.f32 %v4806, %v4865
    %v4897 = vadd.f32 %v4807, %v4864
    %v4898 = vadd.f32 %v4808, %v4866
    %v4899 = vadd.f32 %v4809, %v4857
    %v4900 = vadd.f32 %v4810, %v4865
    %v4901 = vadd.f32 %v4811, %v4864
    %v4902 = vadd.f32 %v4812, %v4866
    %v4903 = vadd.f32 %v4813, %v4857
    %v4904 = vadd.f32 %v4814, %v4865
    %v4905 = vadd.f32 %v4815, %v4864
    %v4906 = vadd.f32 %v4816, %v4866
    %v4907 = vadd.f32 %v4817, %v4857
    %v4908 = vadd.f32 %v4818, %v4865
    %v4909 = vadd.f32 %v4819, %v4864
    %v4910 = vadd.f32 %v4820, %v4866
    %v4911 = vadd.f32 %v4821, %v4857
    %v4912 = vadd.f32 %v4822, %v4865
    %v4913 = vadd.f32 %v4823, %v4864
    %v4914 = vadd.f32 %v4824, %v4866
    %v4915 = vadd.f32 %v4825, %v4857
    %v4916 = vadd.f32 %v4826, %v4865
    %v4917 = vadd.f32 %v4827, %v4864
    %v4918 = vadd.f32 %v4828, %v4866
    %v4919 = vadd.f32 %v4829, %v4857
    %v4920 = vadd.f32 %v4830, %v4865
    %v4921 = vadd.f32 %v4831, %v4864
    %v4922 = vadd.f32 %v4832, %v4866
    %v4923 = vadd.f32 %v4833, %v4857
    %v4924 = vadd.f32 %v4834, %v4865
    %v4925 = vadd.f32 %v4835, %v4864
    %v4926 = vadd.f32 %v4836, %v4866
    %v4927 = vadd.f32 %v4837, %v4857
    %v4928 = vadd.f32 %v4838, %v4865
    %v4929 = vadd.f32 %v4839, %v4864
    %v4930 = vadd.f32 %v4840, %v4866
    %v4931 = vadd.f32 %v4841, %v4857
    %v4932 = vadd.f32 %v4842, %v4865
    %v4933 = vadd.f32 %v4843, %v4864
    %v4934 = vadd.f32 %v4844, %v4866
    %v4935 = vmax.f32 %v4871, 0.0
    %v4936 = vmax.f32 %v4872, 0.0
    %v4937 = vmax.f32 %v4873, 0.0
    %v4938 = vmax.f32 %v4874, 0.0
    %v4939 = vmax.f32 %v4875, 0.0
    %v4940 = vmax.f32 %v4876, 0.0
    %v4941 = vmax.f32 %v4877, 0.0
    %v4942 = vmax.f32 %v4878, 0.0
    %v4943 = vmax.f32 %v4879, 0.0
    %v4944 = vmax.f32 %v4880, 0.0
    %v4945 = vmax.f32 %v4881, 0.0
    %v4946 = vmax.f32 %v4882, 0.0
    %v4947 = vmax.f32 %v4883, 0.0
    %v4948 = vmax.f32 %v4884, 0.0
    %v4949 = vmax.f32 %v4885, 0.0
    %v4950 = vmax.f32 %v4886, 0.0
    %v4951 = vmax.f32 %v4887, 0.0
    %v4952 = vmax.f32 %v4888, 0.0
    %v4953 = vmax.f32 %v4889, 0.0
    %v4954 = vmax.f32 %v4890, 0.0
    %v4955 = vmax.f32 %v4891, 0.0
    %v4956 = vmax.f32 %v4892, 0.0
    %v4957 = vmax.f32 %v4893, 0.0
    %v4958 = vmax.f32 %v4894, 0.0
    %v4959 = vmax.f32 %v4895, 0.0
    %v4960 = vmax.f32 %v4896, 0.0
    %v4961 = vmax.f32 %v4897, 0.0
    %v4962 = vmax.f32 %v4898, 0.0
    %v4963 = vmax.f32 %v4899, 0.0
    %v4964 = vmax.f32 %v4900, 0.0
    %v4965 = vmax.f32 %v4901, 0.0
    %v4966 = vmax.f32 %v4902, 0.0
    %v4967 = vmax.f32 %v4903, 0.0
    %v4968 = vmax.f32 %v4904, 0.0
    %v4969 = vmax.f32 %v4905, 0.0
    %v4970 = vmax.f32 %v4906, 0.0
    %v4971 = vmax.f32 %v4907, 0.0
    %v4972 = vmax.f32 %v4908, 0.0
    %v4973 = vmax.f32 %v4909, 0.0
    %v4974 = vmax.f32 %v4910, 0.0
    %v4975 = vmax.f32 %v4911, 0.0
    %v4976 = vmax.f32 %v4912, 0.0
    %v4977 = vmax.f32 %v4913, 0.0
    %v4978 = vmax.f32 %v4914, 0.0
    %v4979 = vmax.f32 %v4915, 0.0
    %v4980 = vmax.f32 %v4916, 0.0
    %v4981 = vmax.f32 %v4917, 0.0
    %v4982 = vmax.f32 %v4918, 0.0
    %v4983 = vmax.f32 %v4919, 0.0
    %v4984 = vmax.f32 %v4920, 0.0
    %v4985 = vmax.f32 %v4921, 0.0
    %v4986 = vmax.f32 %v4922, 0.0
    %v4987 = vmax.f32 %v4923, 0.0
    %v4988 = vmax.f32 %v4924, 0.0
    %v4989 = vmax.f32 %v4925, 0.0
    %v4990 = vmax.f32 %v4926, 0.0
    %v4991 = vmax.f32 %v4927, 0.0
    %v4992 = vmax.f32 %v4928, 0.0
    %v4993 = vmax.f32 %v4929, 0.0
    %v4994 = vmax.f32 %v4930, 0.0
    %v4995 = vmax.f32 %v4931, 0.0
    %v4996 = vmax.f32 %v4932, 0.0
    %v4997 = vmax.f32 %v4933, 0.0
    %v4998 = vmax.f32 %v4934, 0.0
    %v5063 = vcombine.low %v4935, %v4936
    %v5064 = vcombine.low %v4937, %v4938
    %v5066 = vunpack.c.l.s4 1983009808
    %v5067 = vunpack.c.0.s8 %v5066
    %v5068 = vlaneseq
    %v5069 = vshrl.u32 %v5068, 7
    %v5070 = vsub.s32 %v5067, %v5069
    %v5071 = vrot.slane %v5063, %v5070
    %v5073 = vunpack.c.l.s4 1983009808
    %v5074 = vunpack.c.0.s8 %v5073
    %v5075 = vlaneseq
    %v5076 = vshrl.u32 %v5075, 7
    %v5077 = vsub.s32 %v5074, %v5076
    %v5078 = vrot.slane %v5064, %v5077
    %v5079 = vcombine.low %v5071, %v5078
    %v5080 = vcombine.low %v4939, %v4940
    %v5081 = vcombine.low %v4941, %v4942
    %v5083 = vunpack.c.l.s4 1983009808
    %v5084 = vunpack.c.0.s8 %v5083
    %v5085 = vlaneseq
    %v5086 = vshrl.u32 %v5085, 7
    %v5087 = vsub.s32 %v5084, %v5086
    %v5088 = vrot.slane %v5080, %v5087
    %v5090 = vunpack.c.l.s4 1983009808
    %v5091 = vunpack.c.0.s8 %v5090
    %v5092 = vlaneseq
    %v5093 = vshrl.u32 %v5092, 7
    %v5094 = vsub.s32 %v5091, %v5093
    %v5095 = vrot.slane %v5081, %v5094
    %v5096 = vcombine.low %v5088, %v5095
    %v5097 = vcombine.low %v4943, %v4944
    %v5098 = vcombine.low %v4945, %v4946
    %v5100 = vunpack.c.l.s4 1983009808
    %v5101 = vunpack.c.0.s8 %v5100
    %v5102 = vlaneseq
    %v5103 = vshrl.u32 %v5102, 7
    %v5104 = vsub.s32 %v5101, %v5103
    %v5105 = vrot.slane %v5097, %v5104
    %v5107 = vunpack.c.l.s4 1983009808
    %v5108 = vunpack.c.0.s8 %v5107
    %v5109 = vlaneseq
    %v5110 = vshrl.u32 %v5109, 7
    %v5111 = vsub.s32 %v5108, %v5110
    %v5112 = vrot.slane %v5098, %v5111
    %v5113 = vcombine.low %v5105, %v5112
    %v5114 = vcombine.low %v4947, %v4948
    %v5115 = vcombine.low %v4949, %v4950
    %v5117 = vunpack.c.l.s4 1983009808
    %v5118 = vunpack.c.0.s8 %v5117
    %v5119 = vlaneseq
    %v5120 = vshrl.u32 %v5119, 7
    %v5121 = vsub.s32 %v5118, %v5120
    %v5122 = vrot.slane %v5114, %v5121
    %v5124 = vunpack.c.l.s4 1983009808
    %v5125 = vunpack.c.0.s8 %v5124
    %v5126 = vlaneseq
    %v5127 = vshrl.u32 %v5126, 7
    %v5128 = vsub.s32 %v5125, %v5127
    %v5129 = vrot.slane %v5115, %v5128
    %v5130 = vcombine.low %v5122, %v5129
    %v5131 = vcombine.low %v4951, %v4952
    %v5132 = vcombine.low %v4953, %v4954
    %v5134 = vunpack.c.l.s4 1983009808
    %v5135 = vunpack.c.0.s8 %v5134
    %v5136 = vlaneseq
    %v5137 = vshrl.u32 %v5136, 7
    %v5138 = vsub.s32 %v5135, %v5137
    %v5139 = vrot.slane %v5131, %v5138
    %v5141 = vunpack.c.l.s4 1983009808
    %v5142 = vunpack.c.0.s8 %v5141
    %v5143 = vlaneseq
    %v5144 = vshrl.u32 %v5143, 7
    %v5145 = vsub.s32 %v5142, %v5144
    %v5146 = vrot.slane %v5132, %v5145
    %v5147 = vcombine.low %v5139, %v5146
    %v5148 = vcombine.low %v4955, %v4956
    %v5149 = vcombine.low %v4957, %v4958
    %v5151 = vunpack.c.l.s4 1983009808
    %v5152 = vunpack.c.0.s8 %v5151
    %v5153 = vlaneseq
    %v5154 = vshrl.u32 %v5153, 7
    %v5155 = vsub.s32 %v5152, %v5154
    %v5156 = vrot.slane %v5148, %v5155
    %v5158 = vunpack.c.l.s4 1983009808
    %v5159 = vunpack.c.0.s8 %v5158
    %v5160 = vlaneseq
    %v5161 = vshrl.u32 %v5160, 7
    %v5162 = vsub.s32 %v5159, %v5161
    %v5163 = vrot.slane %v5149, %v5162
    %v5164 = vcombine.low %v5156, %v5163
    %v5165 = vcombine.low %v4959, %v4960
    %v5166 = vcombine.low %v4961, %v4962
    %v5168 = vunpack.c.l.s4 1983009808
    %v5169 = vunpack.c.0.s8 %v5168
    %v5170 = vlaneseq
    %v5171 = vshrl.u32 %v5170, 7
    %v5172 = vsub.s32 %v5169, %v5171
    %v5173 = vrot.slane %v5165, %v5172
    %v5175 = vunpack.c.l.s4 1983009808
    %v5176 = vunpack.c.0.s8 %v5175
    %v5177 = vlaneseq
    %v5178 = vshrl.u32 %v5177, 7
    %v5179 = vsub.s32 %v5176, %v5178
    %v5180 = vrot.slane %v5166, %v5179
    %v5181 = vcombine.low %v5173, %v5180
    %v5182 = vcombine.low %v4963, %v4964
    %v5183 = vcombine.low %v4965, %v4966
    %v5185 = vunpack.c.l.s4 1983009808
    %v5186 = vunpack.c.0.s8 %v5185
    %v5187 = vlaneseq
    %v5188 = vshrl.u32 %v5187, 7
    %v5189 = vsub.s32 %v5186, %v5188
    %v5190 = vrot.slane %v5182, %v5189
    %v5192 = vunpack.c.l.s4 1983009808
    %v5193 = vunpack.c.0.s8 %v5192
    %v5194 = vlaneseq
    %v5195 = vshrl.u32 %v5194, 7
    %v5196 = vsub.s32 %v5193, %v5195
    %v5197 = vrot.slane %v5183, %v5196
    %v5198 = vcombine.low %v5190, %v5197
    %v5199 = vcombine.low %v4967, %v4968
    %v5200 = vcombine.low %v4969, %v4970
    %v5202 = vunpack.c.l.s4 1983009808
    %v5203 = vunpack.c.0.s8 %v5202
    %v5204 = vlaneseq
    %v5205 = vshrl.u32 %v5204, 7
    %v5206 = vsub.s32 %v5203, %v5205
    %v5207 = vrot.slane %v5199, %v5206
    %v5209 = vunpack.c.l.s4 1983009808
    %v5210 = vunpack.c.0.s8 %v5209
    %v5211 = vlaneseq
    %v5212 = vshrl.u32 %v5211, 7
    %v5213 = vsub.s32 %v5210, %v5212
    %v5214 = vrot.slane %v5200, %v5213
    %v5215 = vcombine.low %v5207, %v5214
    %v5216 = vcombine.low %v4971, %v4972
    %v5217 = vcombine.low %v4973, %v4974
    %v5219 = vunpack.c.l.s4 1983009808
    %v5220 = vunpack.c.0.s8 %v5219
    %v5221 = vlaneseq
    %v5222 = vshrl.u32 %v5221, 7
    %v5223 = vsub.s32 %v5220, %v5222
    %v5224 = vrot.slane %v5216, %v5223
    %v5226 = vunpack.c.l.s4 1983009808
    %v5227 = vunpack.c.0.s8 %v5226
    %v5228 = vlaneseq
    %v5229 = vshrl.u32 %v5228, 7
    %v5230 = vsub.s32 %v5227, %v5229
    %v5231 = vrot.slane %v5217, %v5230
    %v5232 = vcombine.low %v5224, %v5231
    %v5233 = vcombine.low %v4975, %v4976
    %v5234 = vcombine.low %v4977, %v4978
    %v5236 = vunpack.c.l.s4 1983009808
    %v5237 = vunpack.c.0.s8 %v5236
    %v5238 = vlaneseq
    %v5239 = vshrl.u32 %v5238, 7
    %v5240 = vsub.s32 %v5237, %v5239
    %v5241 = vrot.slane %v5233, %v5240
    %v5243 = vunpack.c.l.s4 1983009808
    %v5244 = vunpack.c.0.s8 %v5243
    %v5245 = vlaneseq
    %v5246 = vshrl.u32 %v5245, 7
    %v5247 = vsub.s32 %v5244, %v5246
    %v5248 = vrot.slane %v5234, %v5247
    %v5249 = vcombine.low %v5241, %v5248
    %v5250 = vcombine.low %v4979, %v4980
    %v5251 = vcombine.low %v4981, %v4982
    %v5253 = vunpack.c.l.s4 1983009808
    %v5254 = vunpack.c.0.s8 %v5253
    %v5255 = vlaneseq
    %v5256 = vshrl.u32 %v5255, 7
    %v5257 = vsub.s32 %v5254, %v5256
    %v5258 = vrot.slane %v5250, %v5257
    %v5260 = vunpack.c.l.s4 1983009808
    %v5261 = vunpack.c.0.s8 %v5260
    %v5262 = vlaneseq
    %v5263 = vshrl.u32 %v5262, 7
    %v5264 = vsub.s32 %v5261, %v5263
    %v5265 = vrot.slane %v5251, %v5264
    %v5266 = vcombine.low %v5258, %v5265
    %v5267 = vcombine.low %v4983, %v4984
    %v5268 = vcombine.low %v4985, %v4986
    %v5270 = vunpack.c.l.s4 1983009808
    %v5271 = vunpack.c.0.s8 %v5270
    %v5272 = vlaneseq
    %v5273 = vshrl.u32 %v5272, 7
    %v5274 = vsub.s32 %v5271, %v5273
    %v5275 = vrot.slane %v5267, %v5274
    %v5277 = vunpack.c.l.s4 1983009808
    %v5278 = vunpack.c.0.s8 %v5277
    %v5279 = vlaneseq
    %v5280 = vshrl.u32 %v5279, 7
    %v5281 = vsub.s32 %v5278, %v5280
    %v5282 = vrot.slane %v5268, %v5281
    %v5283 = vcombine.low %v5275, %v5282
    %v5284 = vcombine.low %v4987, %v4988
    %v5285 = vcombine.low %v4989, %v4990
    %v5287 = vunpack.c.l.s4 1983009808
    %v5288 = vunpack.c.0.s8 %v5287
    %v5289 = vlaneseq
    %v5290 = vshrl.u32 %v5289, 7
    %v5291 = vsub.s32 %v5288, %v5290
    %v5292 = vrot.slane %v5284, %v5291
    %v5294 = vunpack.c.l.s4 1983009808
    %v5295 = vunpack.c.0.s8 %v5294
    %v5296 = vlaneseq
    %v5297 = vshrl.u32 %v5296, 7
    %v5298 = vsub.s32 %v5295, %v5297
    %v5299 = vrot.slane %v5285, %v5298
    %v5300 = vcombine.low %v5292, %v5299
    %v5301 = vcombine.low %v4991, %v4992
    %v5302 = vcombine.low %v4993, %v4994
    %v5304 = vunpack.c.l.s4 1983009808
    %v5305 = vunpack.c.0.s8 %v5304
    %v5306 = vlaneseq
    %v5307 = vshrl.u32 %v5306, 7
    %v5308 = vsub.s32 %v5305, %v5307
    %v5309 = vrot.slane %v5301, %v5308
    %v5311 = vunpack.c.l.s4 1983009808
    %v5312 = vunpack.c.0.s8 %v5311
    %v5313 = vlaneseq
    %v5314 = vshrl.u32 %v5313, 7
    %v5315 = vsub.s32 %v5312, %v5314
    %v5316 = vrot.slane %v5302, %v5315
    %v5317 = vcombine.low %v5309, %v5316
    %v5318 = vcombine.low %v4995, %v4996
    %v5319 = vcombine.low %v4997, %v4998
    %v5321 = vunpack.c.l.s4 1983009808
    %v5322 = vunpack.c.0.s8 %v5321
    %v5323 = vlaneseq
    %v5324 = vshrl.u32 %v5323, 7
    %v5325 = vsub.s32 %v5322, %v5324
    %v5326 = vrot.slane %v5318, %v5325
    %v5328 = vunpack.c.l.s4 1983009808
    %v5329 = vunpack.c.0.s8 %v5328
    %v5330 = vlaneseq
    %v5331 = vshrl.u32 %v5330, 7
    %v5332 = vsub.s32 %v5329, %v5331
    %v5333 = vrot.slane %v5319, %v5332
    %v5334 = vcombine.low %v5326, %v5333
    %v5335 = vrot.slane %v5079, 7
    %v5336 = vrot.slane %v5096, 7
    %v5337 = vsel %vm120, %v5335, %v5336
    %v5338 = vrot.slane %v5113, 7
    %v5339 = vsel %vm120, %v5336, %v5338
    %v5340 = vrot.slane %v5130, 7
    %v5341 = vsel %vm120, %v5338, %v5340
    %v5342 = vrot.slane %v5147, 7
    %v5343 = vsel %vm120, %v5340, %v5342
    %v5344 = vrot.slane %v5164, 7
    %v5345 = vsel %vm120, %v5342, %v5344
    %v5346 = vrot.slane %v5181, 7
    %v5347 = vsel %vm120, %v5344, %v5346
    %v5348 = vrot.slane %v5198, 7
    %v5349 = vsel %vm120, %v5346, %v5348
    %v5350 = vrot.slane %v5215, 7
    %v5351 = vrot.slane %v5232, 7
    %v5352 = vsel %vm120, %v5350, %v5351
    %v5353 = vrot.slane %v5249, 7
    %v5354 = vsel %vm120, %v5351, %v5353
    %v5355 = vrot.slane %v5266, 7
    %v5356 = vsel %vm120, %v5353, %v5355
    %v5357 = vrot.slane %v5283, 7
    %v5358 = vsel %vm120, %v5355, %v5357
    %v5359 = vrot.slane %v5300, 7
    %v5360 = vsel %vm120, %v5357, %v5359
    %v5361 = vrot.slane %v5317, 7
    %v5362 = vsel %vm120, %v5359, %v5361
    %v5363 = vrot.slane %v5334, 7
    %v5364 = vsel %vm120, %v5361, %v5363
    %v5383 = vsel %vm120, 0.0, %v5335
    %v5384 = vsel %vm120, 0.0, %v5350
    %v5385 = vsel %vm120, %v5348, 0.0
    %v5386 = vsel %vm120, %v5363, 0.0
    %v5391 = vrot.slane %v5383, 1
    %v5392 = vrot.slane %v5337, 1
    %v5393 = vsel %vm129, %v5391, %v5392
    %v5394 = vrot.slane %v5339, 1
    %v5395 = vsel %vm129, %v5392, %v5394
    %v5396 = vrot.slane %v5341, 1
    %v5397 = vsel %vm129, %v5394, %v5396
    %v5398 = vrot.slane %v5343, 1
    %v5399 = vsel %vm129, %v5396, %v5398
    %v5400 = vrot.slane %v5345, 1
    %v5401 = vsel %vm129, %v5398, %v5400
    %v5402 = vrot.slane %v5347, 1
    %v5403 = vsel %vm129, %v5400, %v5402
    %v5404 = vrot.slane %v5349, 1
    %v5405 = vsel %vm129, %v5402, %v5404
    %v5406 = vrot.slane %v5385, 1
    %v5407 = vsel %vm129, %v5404, %v5406
    %v5408 = vrot.slane %v5384, 1
    %v5409 = vrot.slane %v5352, 1
    %v5410 = vsel %vm129, %v5408, %v5409
    %v5411 = vrot.slane %v5354, 1
    %v5412 = vsel %vm129, %v5409, %v5411
    %v5413 = vrot.slane %v5356, 1
    %v5414 = vsel %vm129, %v5411, %v5413
    %v5415 = vrot.slane %v5358, 1
    %v5416 = vsel %vm129, %v5413, %v5415
    %v5417 = vrot.slane %v5360, 1
    %v5418 = vsel %vm129, %v5415, %v5417
    %v5419 = vrot.slane %v5362, 1
    %v5420 = vsel %vm129, %v5417, %v5419
    %v5421 = vrot.slane %v5364, 1
    %v5422 = vsel %vm129, %v5419, %v5421
    %v5423 = vrot.slane %v5386, 1
    %v5424 = vsel %vm129, %v5421, %v5423
    %5425 = vrot.lane.b32.xlu0 %v5393, 8
    %v5426 = vpop.permute.xlu0 %5425
    %5427 = vrot.lane.b32.xlu0 %v5395, 8
    %v5428 = vpop.permute.xlu0 %5427
    %5429 = vrot.lane.b32.xlu0 %v5397, 8
    %v5430 = vpop.permute.xlu0 %5429
    %5431 = vrot.lane.b32.xlu0 %v5399, 8
    %v5432 = vpop.permute.xlu0 %5431
    %5433 = vrot.lane.b32.xlu0 %v5401, 8
    %v5434 = vpop.permute.xlu0 %5433
    %5435 = vrot.lane.b32.xlu0 %v5403, 8
    %v5436 = vpop.permute.xlu0 %5435
    %5437 = vrot.lane.b32.xlu0 %v5405, 8
    %v5438 = vpop.permute.xlu0 %5437
    %5439 = vrot.lane.b32.xlu0 %v5407, 8
    %v5440 = vpop.permute.xlu0 %5439
    %5441 = vrot.lane.b32.xlu0 %v5410, 8
    %v5442 = vpop.permute.xlu0 %5441
    %5443 = vrot.lane.b32.xlu0 %v5412, 8
    %v5444 = vpop.permute.xlu0 %5443
    %5445 = vrot.lane.b32.xlu0 %v5414, 8
    %v5446 = vpop.permute.xlu0 %5445
    %5447 = vrot.lane.b32.xlu0 %v5416, 8
    %v5448 = vpop.permute.xlu0 %5447
    %5449 = vrot.lane.b32.xlu0 %v5418, 8
    %v5450 = vpop.permute.xlu0 %5449
    %5451 = vrot.lane.b32.xlu0 %v5420, 8
    %v5452 = vpop.permute.xlu0 %5451
    %5453 = vrot.lane.b32.xlu0 %v5422, 8
    %v5454 = vpop.permute.xlu0 %5453
    %5455 = vrot.lane.b32.xlu0 %v5424, 8
    %v5456 = vpop.permute.xlu0 %5455
    %v5473 = vrot.slane %v5383, 2
    %v5474 = vrot.slane %v5337, 2
    %v5475 = vsel %vm142, %v5473, %v5474
    %v5476 = vrot.slane %v5339, 2
    %v5477 = vsel %vm142, %v5474, %v5476
    %v5478 = vrot.slane %v5341, 2
    %v5479 = vsel %vm142, %v5476, %v5478
    %v5480 = vrot.slane %v5343, 2
    %v5481 = vsel %vm142, %v5478, %v5480
    %v5482 = vrot.slane %v5345, 2
    %v5483 = vsel %vm142, %v5480, %v5482
    %v5484 = vrot.slane %v5347, 2
    %v5485 = vsel %vm142, %v5482, %v5484
    %v5486 = vrot.slane %v5349, 2
    %v5487 = vsel %vm142, %v5484, %v5486
    %v5488 = vrot.slane %v5385, 2
    %v5489 = vsel %vm142, %v5486, %v5488
    %v5490 = vrot.slane %v5384, 2
    %v5491 = vrot.slane %v5352, 2
    %v5492 = vsel %vm142, %v5490, %v5491
    %v5493 = vrot.slane %v5354, 2
    %v5494 = vsel %vm142, %v5491, %v5493
    %v5495 = vrot.slane %v5356, 2
    %v5496 = vsel %vm142, %v5493, %v5495
    %v5497 = vrot.slane %v5358, 2
    %v5498 = vsel %vm142, %v5495, %v5497
    %v5499 = vrot.slane %v5360, 2
    %v5500 = vsel %vm142, %v5497, %v5499
    %v5501 = vrot.slane %v5362, 2
    %v5502 = vsel %vm142, %v5499, %v5501
    %v5503 = vrot.slane %v5364, 2
    %v5504 = vsel %vm142, %v5501, %v5503
    %v5505 = vrot.slane %v5386, 2
    %v5506 = vsel %vm142, %v5503, %v5505
    %5507 = vrot.lane.b32.xlu0 %v5475, 16
    %v5508 = vpop.permute.xlu0 %5507
    %5509 = vrot.lane.b32.xlu0 %v5477, 16
    %v5510 = vpop.permute.xlu0 %5509
    %5511 = vrot.lane.b32.xlu0 %v5479, 16
    %v5512 = vpop.permute.xlu0 %5511
    %5513 = vrot.lane.b32.xlu0 %v5481, 16
    %v5514 = vpop.permute.xlu0 %5513
    %5515 = vrot.lane.b32.xlu0 %v5483, 16
    %v5516 = vpop.permute.xlu0 %5515
    %5517 = vrot.lane.b32.xlu0 %v5485, 16
    %v5518 = vpop.permute.xlu0 %5517
    %5519 = vrot.lane.b32.xlu0 %v5487, 16
    %v5520 = vpop.permute.xlu0 %5519
    %5521 = vrot.lane.b32.xlu0 %v5489, 16
    %v5522 = vpop.permute.xlu0 %5521
    %5523 = vrot.lane.b32.xlu0 %v5492, 16
    %v5524 = vpop.permute.xlu0 %5523
    %5525 = vrot.lane.b32.xlu0 %v5494, 16
    %v5526 = vpop.permute.xlu0 %5525
    %5527 = vrot.lane.b32.xlu0 %v5496, 16
    %v5528 = vpop.permute.xlu0 %5527
    %5529 = vrot.lane.b32.xlu0 %v5498, 16
    %v5530 = vpop.permute.xlu0 %5529
    %5531 = vrot.lane.b32.xlu0 %v5500, 16
    %v5532 = vpop.permute.xlu0 %5531
    %5533 = vrot.lane.b32.xlu0 %v5502, 16
    %v5534 = vpop.permute.xlu0 %5533
    %5535 = vrot.lane.b32.xlu0 %v5504, 16
    %v5536 = vpop.permute.xlu0 %5535
    %5537 = vrot.lane.b32.xlu0 %v5506, 16
    %v5538 = vpop.permute.xlu0 %5537
    %v5555 = vsel %vm1813, %v5383, %v5426
    %v5556 = vsel %vm1813, %v5337, %v5428
    %v5557 = vsel %vm1813, %v5339, %v5430
    %v5558 = vsel %vm1813, %v5341, %v5432
    %v5559 = vsel %vm1813, %v5343, %v5434
    %v5560 = vsel %vm1813, %v5345, %v5436
    %v5561 = vsel %vm1813, %v5347, %v5438
    %v5562 = vsel %vm1813, %v5349, %v5440
    %v5563 = vsel %vm1813, %v5384, %v5442
    %v5564 = vsel %vm1813, %v5352, %v5444
    %v5565 = vsel %vm1813, %v5354, %v5446
    %v5566 = vsel %vm1813, %v5356, %v5448
    %v5567 = vsel %vm1813, %v5358, %v5450
    %v5568 = vsel %vm1813, %v5360, %v5452
    %v5569 = vsel %vm1813, %v5362, %v5454
    %v5570 = vsel %vm1813, %v5364, %v5456
    %v5571 = vsel %vm575, %v5555, %v5508
    %v5572 = vsel %vm575, %v5556, %v5510
    %v5573 = vsel %vm575, %v5557, %v5512
    %v5574 = vsel %vm575, %v5558, %v5514
    %v5575 = vsel %vm575, %v5559, %v5516
    %v5576 = vsel %vm575, %v5560, %v5518
    %v5577 = vsel %vm575, %v5561, %v5520
    %v5578 = vsel %vm575, %v5562, %v5522
    %v5579 = vsel %vm575, %v5563, %v5524
    %v5580 = vsel %vm575, %v5564, %v5526
    %v5581 = vsel %vm575, %v5565, %v5528
    %v5582 = vsel %vm575, %v5566, %v5530
    %v5583 = vsel %vm575, %v5567, %v5532
    %v5584 = vsel %vm575, %v5568, %v5534
    %v5585 = vsel %vm575, %v5569, %v5536
    %v5586 = vsel %vm575, %v5570, %v5538
    %v5587 = vld [vmem:[%s10] sm:$0x1]
    %v5589 = vlaneseq
    %v5590 = vshrl.u32 %v5589, 7
    %v5591 = vsub.s32 0, %v5590
    %v5592 = vrot.slane %v5587, %v5591
    %v5594 = vmul.f32 %v5571, %v5592
    %v5595 = vmul.f32 %v5572, %v5592
    %v5596 = vmul.f32 %v5573, %v5592
    %v5597 = vmul.f32 %v5574, %v5592
    %v5598 = vmul.f32 %v5575, %v5592
    %v5599 = vmul.f32 %v5576, %v5592
    %v5600 = vmul.f32 %v5577, %v5592
    %v5601 = vmul.f32 %v5578, %v5592
    %v5602 = vmul.f32 %v5579, %v5592
    %v5603 = vmul.f32 %v5580, %v5592
    %v5604 = vmul.f32 %v5581, %v5592
    %v5605 = vmul.f32 %v5582, %v5592
    %v5606 = vmul.f32 %v5583, %v5592
    %v5607 = vmul.f32 %v5584, %v5592
    %v5608 = vmul.f32 %v5585, %v5592
    %v5609 = vmul.f32 %v5586, %v5592
    %v5610 = vsel %vm2630, %v5594, 0.0
    %5611 = vadd.xlane.f32.xlu0 %v5610
    %v5612 = vpop.xlane.xlu0 %5611
    %v5613 = vsel %vm2630, %v5595, 0.0
    %5614 = vadd.xlane.f32.xlu0 %v5613
    %v5615 = vpop.xlane.xlu0 %5614
    %v5616 = vsel %vm2630, %v5596, 0.0
    %5617 = vadd.xlane.f32.xlu0 %v5616
    %v5618 = vpop.xlane.xlu0 %5617
    %v5619 = vsel %vm2630, %v5597, 0.0
    %5620 = vadd.xlane.f32.xlu0 %v5619
    %v5621 = vpop.xlane.xlu0 %5620
    %v5622 = vsel %vm2630, %v5598, 0.0
    %5623 = vadd.xlane.f32.xlu0 %v5622
    %v5624 = vpop.xlane.xlu0 %5623
    %v5625 = vsel %vm2630, %v5599, 0.0
    %5626 = vadd.xlane.f32.xlu0 %v5625
    %v5627 = vpop.xlane.xlu0 %5626
    %v5628 = vsel %vm2630, %v5600, 0.0
    %5629 = vadd.xlane.f32.xlu0 %v5628
    %v5630 = vpop.xlane.xlu0 %5629
    %v5631 = vsel %vm2630, %v5601, 0.0
    %5632 = vadd.xlane.f32.xlu0 %v5631
    %v5633 = vpop.xlane.xlu0 %5632
    %v5634 = vsel %vm2630, %v5602, 0.0
    %5635 = vadd.xlane.f32.xlu0 %v5634
    %v5636 = vpop.xlane.xlu0 %5635
    %v5637 = vsel %vm2630, %v5603, 0.0
    %5638 = vadd.xlane.f32.xlu0 %v5637
    %v5639 = vpop.xlane.xlu0 %5638
    %v5640 = vsel %vm2630, %v5604, 0.0
    %5641 = vadd.xlane.f32.xlu0 %v5640
    %v5642 = vpop.xlane.xlu0 %5641
    %v5643 = vsel %vm2630, %v5605, 0.0
    %5644 = vadd.xlane.f32.xlu0 %v5643
    %v5645 = vpop.xlane.xlu0 %5644
    %v5646 = vsel %vm2630, %v5606, 0.0
    %5647 = vadd.xlane.f32.xlu0 %v5646
    %v5648 = vpop.xlane.xlu0 %5647
    %v5649 = vsel %vm2630, %v5607, 0.0
    %5650 = vadd.xlane.f32.xlu0 %v5649
    %v5651 = vpop.xlane.xlu0 %5650
    %v5652 = vsel %vm2630, %v5608, 0.0
    %5653 = vadd.xlane.f32.xlu0 %v5652
    %v5654 = vpop.xlane.xlu0 %5653
    %v5655 = vsel %vm2630, %v5609, 0.0
    %5656 = vadd.xlane.f32.xlu0 %v5655
    %v5657 = vpop.xlane.xlu0 %5656
    %s5658 = sld [smem:[#allocation2]]
    %v5659 = vstv %s5658
    %v5660 = vadd.f32 %v5612, %v5659
    %v5661 = vadd.f32 %v5615, %v5659
    %v5662 = vadd.f32 %v5618, %v5659
    %v5663 = vadd.f32 %v5621, %v5659
    %v5664 = vadd.f32 %v5624, %v5659
    %v5665 = vadd.f32 %v5627, %v5659
    %v5666 = vadd.f32 %v5630, %v5659
    %v5667 = vadd.f32 %v5633, %v5659
    %v5668 = vadd.f32 %v5636, %v5659
    %v5669 = vadd.f32 %v5639, %v5659
    %v5670 = vadd.f32 %v5642, %v5659
    %v5671 = vadd.f32 %v5645, %v5659
    %v5672 = vadd.f32 %v5648, %v5659
    %v5673 = vadd.f32 %v5651, %v5659
    %v5674 = vadd.f32 %v5654, %v5659
    %v5675 = vadd.f32 %v5657, %v5659
    %v5692 = vlaneseq
    %v5693 = vand.u32 %v5692, 127
    %v5694 = vlaneseq
    %v5695 = vshrl.u32 %v5694, 7
    %v5696 = vsub.s32 %v5693, %v5695
    %v5697 = vrot.slane %v5660, %v5696
    %v5698 = vadd.s32 %v5693, 4294967288
    %v5699 = vlaneseq
    %v5700 = vshrl.u32 %v5699, 7
    %v5701 = vsub.s32 %v5698, %v5700
    %v5702 = vrot.slane %v5661, %v5701
    %vm5703 = vcmask 130112
    %v5704 = vsel %vm5703, %v5702, %v5697
    %v5705 = vadd.s32 %v5693, 4294967280
    %v5706 = vlaneseq
    %v5707 = vshrl.u32 %v5706, 7
    %v5708 = vsub.s32 %v5705, %v5707
    %v5709 = vrot.slane %v5662, %v5708
    %vm5710 = vcmask 195712
    %v5711 = vsel %vm5710, %v5709, %v5704
    %v5712 = vadd.s32 %v5693, 4294967272
    %v5713 = vlaneseq
    %v5714 = vshrl.u32 %v5713, 7
    %v5715 = vsub.s32 %v5712, %v5714
    %v5716 = vrot.slane %v5663, %v5715
    %vm5717 = vcmask 261312
    %v5718 = vsel %vm5717, %v5716, %v5711
    %v5719 = vadd.s32 %v5693, 4294967264
    %v5720 = vlaneseq
    %v5721 = vshrl.u32 %v5720, 7
    %v5722 = vsub.s32 %v5719, %v5721
    %v5723 = vrot.slane %v5664, %v5722
    %vm5724 = vcmask 326912
    %v5725 = vsel %vm5724, %v5723, %v5718
    %v5726 = vadd.s32 %v5693, 4294967256
    %v5727 = vlaneseq
    %v5728 = vshrl.u32 %v5727, 7
    %v5729 = vsub.s32 %v5726, %v5728
    %v5730 = vrot.slane %v5665, %v5729
    %vm5731 = vcmask 392512
    %v5732 = vsel %vm5731, %v5730, %v5725
    %v5733 = vadd.s32 %v5693, 4294967248
    %v5734 = vlaneseq
    %v5735 = vshrl.u32 %v5734, 7
    %v5736 = vsub.s32 %v5733, %v5735
    %v5737 = vrot.slane %v5666, %v5736
    %vm5738 = vcmask 458112
    %v5739 = vsel %vm5738, %v5737, %v5732
    %v5740 = vadd.s32 %v5693, 4294967240
    %v5741 = vlaneseq
    %v5742 = vshrl.u32 %v5741, 7
    %v5743 = vsub.s32 %v5740, %v5742
    %v5744 = vrot.slane %v5667, %v5743
    %vm5745 = vcmask 523712
    %v5746 = vsel %vm5745, %v5744, %v5739
    %v5747 = vlaneseq
    %v5748 = vshrl.u32 %v5747, 7
    %v5749 = vsub.s32 %v5693, %v5748
    %v5750 = vrot.slane %v5668, %v5749
    %v5751 = vlaneseq
    %v5752 = vshrl.u32 %v5751, 7
    %v5753 = vsub.s32 %v5698, %v5752
    %v5754 = vrot.slane %v5669, %v5753
    %v5755 = vsel %vm5703, %v5754, %v5750
    %v5756 = vlaneseq
    %v5757 = vshrl.u32 %v5756, 7
    %v5758 = vsub.s32 %v5705, %v5757
    %v5759 = vrot.slane %v5670, %v5758
    %v5760 = vsel %vm5710, %v5759, %v5755
    %v5761 = vlaneseq
    %v5762 = vshrl.u32 %v5761, 7
    %v5763 = vsub.s32 %v5712, %v5762
    %v5764 = vrot.slane %v5671, %v5763
    %v5765 = vsel %vm5717, %v5764, %v5760
    %v5766 = vlaneseq
    %v5767 = vshrl.u32 %v5766, 7
    %v5768 = vsub.s32 %v5719, %v5767
    %v5769 = vrot.slane %v5672, %v5768
    %v5770 = vsel %vm5724, %v5769, %v5765
    %v5771 = vlaneseq
    %v5772 = vshrl.u32 %v5771, 7
    %v5773 = vsub.s32 %v5726, %v5772
    %v5774 = vrot.slane %v5673, %v5773
    %v5775 = vsel %vm5731, %v5774, %v5770
    %v5776 = vlaneseq
    %v5777 = vshrl.u32 %v5776, 7
    %v5778 = vsub.s32 %v5733, %v5777
    %v5779 = vrot.slane %v5674, %v5778
    %v5780 = vsel %vm5738, %v5779, %v5775
    %v5781 = vlaneseq
    %v5782 = vshrl.u32 %v5781, 7
    %v5783 = vsub.s32 %v5740, %v5782
    %v5784 = vrot.slane %v5675, %v5783
    %v5785 = vsel %vm5745, %v5784, %v5780
    %vm5786 = vcmask 1041409
    %v5787 = vsel %vm5786, %v5785, %v5746
    %vm5789 = vcmask 517120
    %5790 = vst.msk [vmem:[#allocation11] sm:$0x3] %vm5789, %v5787
    // Predicated region
    $region66: #{cnn_decoder_forward.1} parent=1 // pred_check
      _
    $region67: #{cnn_decoder_forward.1} parent=1 // pred_check_branch
      %5792 = sbr.rel (0) target = $region69
    $region68: #{cnn_decoder_forward.1} parent=1 // pred_region
      %s5794 = ssub.s32 32, 32
      %5795 = vsyncadd [#allocation5], %s5794
      %s5797 = sshll.u32 [#allocation11], 4
      %s5798 = int_to_ptr.vmem [resolvable:$true] %s5797
      %5800 = dma.vmem_to_hbm [thread:$0]  %s5798, 32, %s12, [#allocation5]
    $region69: #{cnn_decoder_forward.1} parent=1 // pred_fallthru
      _
    // Predicated region
    $region70: #{cnn_decoder_forward.1} parent=1 // pred_check
      _
    $region71: #{cnn_decoder_forward.1} parent=1 // pred_check_branch
      %5802 = sbr.rel (0) target = $region73
    $region72: #{cnn_decoder_forward.1} parent=1 // pred_region
      %5803 = dma.done [#allocation5], 32
    $region73: #{cnn_decoder_forward.1} parent=1 // pred_fallthru
      _
    %5804 = vsyncpa [#allocation4], 1
    %5805 = vsyncpa [#allocation7], 1
    %5806 = vsyncpa [#allocation10], 1
    %5807 = vsyncpa [#allocation5], 1

</llo_original>
